<compile_context>
chip_gen: v7x
topology: tpu7x:2x2x1
jax: 0.10.0
libtpu: 0.0.40
codegen_flags: <defaults>
</compile_context>

<pallas_src>
import numpy as np

import jax
import jax.numpy as jnp
from jax.experimental import pallas as pl
from jax.experimental.pallas import tpu as pltpu


# ----------------------------------------------------------------------------
# The fused kernel (one grid step == one batch tile of Bt images).
# Activation layout convention: (spatial_row, Bt, lanes).
# ----------------------------------------------------------------------------
def _lenet_kernel(x_ref, k1_ref, b1_ref, k2_ref, b2_ref,
                  w1p_ref, b1p_ref, w2p_ref, b2p_ref, w3p_ref, b3p_ref,
                  o_ref):
    f32 = jnp.float32
    x = x_ref[...]                                    # (28, Bt, 28)
    bt = x.shape[1]

    # ---- conv1 (1->6, 5x5): 5 banded matmuls with M = 24*Bt.
    # Even output columns in lanes [0,72), odd output columns in [128,200).
    acc1 = jnp.dot(x[0:24].reshape(24 * bt, 28), k1_ref[0],
                   preferred_element_type=f32)
    for kh in range(1, 5):
        lhs = x[kh:kh + 24].reshape(24 * bt, 28)      # leading-dim slice+merge
        acc1 = acc1 + jnp.dot(lhs, k1_ref[kh], preferred_element_type=f32)
    # Fused 2x2 max-pool: column half via the vreg-aligned lane halves,
    # row half via the leading (row) axis.  ReLU commutes with max.
    col1 = jnp.maximum(jnp.maximum(acc1[:, 0:72], acc1[:, 128:200])
                       + b1_ref[...], 0.0)            # (24*Bt, 72)
    c1 = col1.reshape(12, 2, bt, 72)
    p1 = jnp.maximum(c1[:, 0], c1[:, 1])              # (12, Bt, 72)

    # ---- conv2 (6->16, 5x5): same scheme, M = 8*Bt.
    acc2 = jnp.dot(p1[0:8].reshape(8 * bt, 72), k2_ref[0],
                   preferred_element_type=f32)
    for kh in range(1, 5):
        lhs = p1[kh:kh + 8].reshape(8 * bt, 72)
        acc2 = acc2 + jnp.dot(lhs, k2_ref[kh], preferred_element_type=f32)
    col2 = jnp.maximum(jnp.maximum(acc2[:, 0:64], acc2[:, 128:192])
                       + b2_ref[...], 0.0)            # (8*Bt, 64)
    c2 = col2.reshape(4, 2, bt, 64)
    p2 = jnp.maximum(c2[:, 0], c2[:, 1])              # (4, Bt, 64)

    # ---- Flatten + fc1: pool2 row index folded into 4 matmuls (Bt,64)@(64,128)
    # with weights re-ordered host-side to the (co2*4 + px2) lane layout.
    h1 = b1p_ref[...]                                 # (1, 128), broadcasts
    for q in range(4):
        h1 = h1 + jnp.dot(p2[q], w1p_ref[q], preferred_element_type=f32)
    h1 = jnp.maximum(h1, 0.0)                         # (Bt, 128)
    h2 = jnp.maximum(
        jnp.dot(h1, w2p_ref[...], preferred_element_type=f32) + b2p_ref[...],
        0.0)                                          # (Bt, 128)
    logits = (jnp.dot(h2, w3p_ref[...], preferred_element_type=f32)
              + b3p_ref[...])                         # (Bt, 128); lanes 10.. = 0
    o_ref[...] = logits.astype(o_ref.dtype)           # lane-dense store


# ----------------------------------------------------------------------------
# Forward wrapper: one fused pallas_call over a batch-tile-parallel grid.
# ----------------------------------------------------------------------------
def lenet_forward(x, kp, block_b=128):
    B = x.shape[0]
    x3 = x.reshape(B, 28, 28).astype(jnp.float32)     # drop channel=1

    # Batch tile: multiple of 8 sublanes, at most block_b; pad batch to fit.
    bt = block_b if B >= block_b else ((B + 7) // 8) * 8
    bp = ((B + bt - 1) // bt) * bt
    if bp != B:
        x3 = jnp.pad(x3, ((0, bp - B), (0, 0), (0, 0)))
    xt = jnp.transpose(x3, (1, 0, 2))                 # (28, Bp, 28): row-major

    def rep(arr):                                     # weight: constant blocks
        nd = arr.ndim
        return pl.BlockSpec(arr.shape, lambda i, _nd=nd: (0,) * _nd)

    out = pl.pallas_call(
        _lenet_kernel,
        out_shape=jax.ShapeDtypeStruct((bp, 128), jnp.float32),
        grid=(bp // bt,),
        in_specs=[
            pl.BlockSpec((28, bt, 28), lambda i: (0, i, 0)),
            rep(kp["k1"]), rep(kp["b1r"]),
            rep(kp["k2"]), rep(kp["b2r"]),
            rep(kp["w1p"]), rep(kp["b1p"]),
            rep(kp["w2p"]), rep(kp["b2p"]),
            rep(kp["w3p"]), rep(kp["b3p"]),
        ],
        out_specs=pl.BlockSpec((bt, 128), lambda i: (i, 0)),
        compiler_params=pltpu.CompilerParams(
            # On v7x, use pltpu.CORE_PARALLEL here to split the batch axis
            # across both TensorCores.
            dimension_semantics=("parallel",),
            vmem_limit_bytes=32 * 1024 * 1024),
    )(xt, kp["k1"], kp["b1r"], kp["k2"], kp["b2r"],
      kp["w1p"], kp["b1p"], kp["w2p"], kp["b2p"], kp["w3p"], kp["b3p"])
    return out[:B, :10]                               # drop batch pad + lane pad


# ----------------------------------------------------------------------------
# One-time host-side parameter preparation: banded conv weights (im2col folded
# into the weights), even/odd column split concatenated into vreg-aligned
# 128-lane blocks, fc re-ordering / transposition and 128-lane padding.
# ----------------------------------------------------------------------------
def prepare_params(params):
    w1 = np.asarray(params["conv1_w"], np.float32)    # (6, 1, 5, 5)
    b1 = np.asarray(params["conv1_b"], np.float32)
    w2 = np.asarray(params["conv2_w"], np.float32)    # (16, 6, 5, 5)
    b2 = np.asarray(params["conv2_b"], np.float32)
    f1w = np.asarray(params["fc1_w"], np.float32)     # (120, 256)
    f1b = np.asarray(params["fc1_b"], np.float32)
    f2w = np.asarray(params["fc2_w"], np.float32)     # (84, 120)
    f2b = np.asarray(params["fc2_b"], np.float32)
    f3w = np.asarray(params["fc3_w"], np.float32)     # (10, 84)
    f3b = np.asarray(params["fc3_b"], np.float32)

    # conv1: output lane = co*12 + px (pooled col); even cols in lanes [0,128),
    # odd cols in lanes [128,256) so the in-kernel lane split is vreg-aligned.
    k1 = np.zeros((5, 28, 256), np.float32)
    for co in range(6):
        for kh in range(5):
            for kw in range(5):
                for px in range(12):
                    k1[kh, 2 * px + kw, co * 12 + px] = w1[co, 0, kh, kw]
                    k1[kh, 2 * px + 1 + kw, 128 + co * 12 + px] = w1[co, 0, kh, kw]
    b1r = np.repeat(b1, 12)[None, :].astype(np.float32)        # (1, 72)

    # conv2: input lane = ci*12 + x, output lane = co2*4 + px2 (+128 for odd).
    k2 = np.zeros((5, 72, 256), np.float32)
    for co in range(16):
        for ci in range(6):
            for kh in range(5):
                for kw in range(5):
                    for px in range(4):
                        k2[kh, ci * 12 + 2 * px + kw, co * 4 + px] = w2[co, ci, kh, kw]
                        k2[kh, ci * 12 + 2 * px + 1 + kw, 128 + co * 4 + px] = w2[co, ci, kh, kw]
    b2r = np.repeat(b2, 4)[None, :].astype(np.float32)         # (1, 64)

    # fc1: PyTorch flatten index co2*16 + py2*4 + px2 -> one matrix per pooled
    # row py2 with input lane co2*4 + px2; outputs padded 120 -> 128.
    w1p = np.zeros((4, 64, 128), np.float32)
    for py in range(4):
        for co in range(16):
            for px in range(4):
                w1p[py, co * 4 + px, :120] = f1w[:, co * 16 + py * 4 + px]
    b1p = np.zeros((1, 128), np.float32)
    b1p[0, :120] = f1b

    w2p = np.zeros((128, 128), np.float32)
    w2p[:120, :84] = f2w.T
    b2p = np.zeros((1, 128), np.float32)
    b2p[0, :84] = f2b

    # fc3 padded to a lane-dense (128,128)/(1,128): kernel writes (Bt,128),
    # the wrapper slices [:, :10].
    w3p = np.zeros((128, 128), np.float32)
    w3p[:84, :10] = f3w.T
    b3p = np.zeros((1, 128), np.float32)
    b3p[0, :10] = f3b

    prepared = dict(k1=k1, b1r=b1r, k2=k2, b2r=b2r,
                    w1p=w1p, b1p=b1p, w2p=w2p, b2p=b2p, w3p=w3p, b3p=b3p)
    return {k: jnp.asarray(v) for k, v in prepared.items()}


# ----------------------------------------------------------------------------
# PyTorch-layout parameters + pure-JAX reference (correctness check).
# ----------------------------------------------------------------------------
def init_params(key):
    ks = jax.random.split(key, 10)
    s = 0.1
    return {
        "conv1_w": s * jax.random.normal(ks[0], (6, 1, 5, 5), jnp.float32),
        "conv1_b": s * jax.random.normal(ks[1], (6,), jnp.float32),
        "conv2_w": s * jax.random.normal(ks[2], (16, 6, 5, 5), jnp.float32),
        "conv2_b": s * jax.random.normal(ks[3], (16,), jnp.float32),
        "fc1_w": s * jax.random.normal(ks[4], (120, 16 * 4 * 4), jnp.float32),
        "fc1_b": s * jax.random.normal(ks[5], (120,), jnp.float32),
        "fc2_w": s * jax.random.normal(ks[6], (84, 120), jnp.float32),
        "fc2_b": s * jax.random.normal(ks[7], (84,), jnp.float32),
        "fc3_w": s * jax.random.normal(ks[8], (10, 84), jnp.float32),
        "fc3_b": s * jax.random.normal(ks[9], (10,), jnp.float32),
    }


def reference_forward(x, params):
    dn = ("NCHW", "OIHW", "NCHW")
    y = jax.lax.conv_general_dilated(x, params["conv1_w"], (1, 1), "VALID",
                                     dimension_numbers=dn)
    y = jnp.maximum(y + params["conv1_b"][None, :, None, None], 0.0)
    y = jax.lax.reduce_window(y, -jnp.inf, jax.lax.max,
                              (1, 1, 2, 2), (1, 1, 2, 2), "VALID")
    y = jax.lax.conv_general_dilated(y, params["conv2_w"], (1, 1), "VALID",
                                     dimension_numbers=dn)
    y = jnp.maximum(y + params["conv2_b"][None, :, None, None], 0.0)
    y = jax.lax.reduce_window(y, -jnp.inf, jax.lax.max,
                              (1, 1, 2, 2), (1, 1, 2, 2), "VALID")
    y = y.reshape(y.shape[0], -1)
    y = jnp.maximum(y @ params["fc1_w"].T + params["fc1_b"], 0.0)
    y = jnp.maximum(y @ params["fc2_w"].T + params["fc2_b"], 0.0)
    return y @ params["fc3_w"].T + params["fc3_b"]


if __name__ == "__main__":
    key = jax.random.PRNGKey(0)
    k_x, k_p = jax.random.split(key)
    # Flatten->Linear(16*4*4, 120) implies 1x28x28 inputs (MNIST-like).
    x = jax.random.normal(k_x, (2, 1, 28, 28), jnp.float32)
    params = init_params(k_p)
    kparams = prepare_params(params)   # one-time, outside the jitted forward

    fwd = jax.jit(lenet_forward)
    logits = fwd(x, kparams)
    jax.block_until_ready(logits)
    assert logits.shape == (2, 10) and logits.dtype == jnp.float32

    ref = reference_forward(x, params)
    np.testing.assert_allclose(np.asarray(logits), np.asarray(ref),
                               rtol=2e-2, atol=2e-2)
    print("KERNEL_OK")
</pallas_src>

<mosaic_0001>
module attributes {stable_mosaic.version = 11 : i64} {
  func.func @_lenet_kernel(%arg0: i32, %arg1: memref<28x8x28xf32, #tpu.memory_space<vmem>>, %arg2: memref<5x28x256xf32, #tpu.memory_space<vmem>>, %arg3: memref<1x72xf32, #tpu.memory_space<vmem>>, %arg4: memref<5x72x256xf32, #tpu.memory_space<vmem>>, %arg5: memref<1x64xf32, #tpu.memory_space<vmem>>, %arg6: memref<4x64x128xf32, #tpu.memory_space<vmem>>, %arg7: memref<1x128xf32, #tpu.memory_space<vmem>>, %arg8: memref<128x128xf32, #tpu.memory_space<vmem>>, %arg9: memref<1x128xf32, #tpu.memory_space<vmem>>, %arg10: memref<128x128xf32, #tpu.memory_space<vmem>>, %arg11: memref<1x128xf32, #tpu.memory_space<vmem>>, %arg12: memref<8x128xf32, #tpu.memory_space<vmem>>) attributes {dimension_semantics = [#tpu.dimension_semantics<parallel>], iteration_bounds = array<i64: 1>, scalar_prefetch = 0 : i64, scratch_operands = 0 : i64, tpu.core_type = #tpu.core_type<tc>, window_params = [{transform_indices = @transform_0, window_bounds = array<i64: 28, 8, 28>}, {pipeline_mode = #tpu.pipeline_mode<synchronous>, transform_indices = @transform_1, window_bounds = array<i64: 5, 28, 256>}, {pipeline_mode = #tpu.pipeline_mode<synchronous>, transform_indices = @transform_2, window_bounds = array<i64: 1, 72>}, {pipeline_mode = #tpu.pipeline_mode<synchronous>, transform_indices = @transform_3, window_bounds = array<i64: 5, 72, 256>}, {pipeline_mode = #tpu.pipeline_mode<synchronous>, transform_indices = @transform_4, window_bounds = array<i64: 1, 64>}, {pipeline_mode = #tpu.pipeline_mode<synchronous>, transform_indices = @transform_5, window_bounds = array<i64: 4, 64, 128>}, {pipeline_mode = #tpu.pipeline_mode<synchronous>, transform_indices = @transform_6, window_bounds = array<i64: 1, 128>}, {pipeline_mode = #tpu.pipeline_mode<synchronous>, transform_indices = @transform_7, window_bounds = array<i64: 128, 128>}, {pipeline_mode = #tpu.pipeline_mode<synchronous>, transform_indices = @transform_8, window_bounds = array<i64: 1, 128>}, {pipeline_mode = #tpu.pipeline_mode<synchronous>, transform_indices = @transform_9, window_bounds = array<i64: 128, 128>}, {pipeline_mode = #tpu.pipeline_mode<synchronous>, transform_indices = @transform_10, window_bounds = array<i64: 1, 128>}, {transform_indices = @transform_11, window_bounds = array<i64: 8, 128>}]} {
    %c0 = arith.constant 0 : index
    %c0_0 = arith.constant 0 : index
    %c0_1 = arith.constant 0 : index
    %0 = vector.load %arg1[%c0, %c0_0, %c0_1] : memref<28x8x28xf32, #tpu.memory_space<vmem>>, vector<28x8x28xf32>
    %1 = vector.extract_strided_slice %0 {offsets = [0, 0, 0], sizes = [24, 8, 28], strides = [1, 1, 1]} : vector<28x8x28xf32> to vector<24x8x28xf32>
    %2 = vector.shape_cast %1 : vector<24x8x28xf32> to vector<192x28xf32>
    %c0_2 = arith.constant 0 : index
    %c0_3 = arith.constant 0 : index
    %c0_4 = arith.constant 0 : index
    %3 = vector.load %arg2[%c0_2, %c0_3, %c0_4] : memref<5x28x256xf32, #tpu.memory_space<vmem>>, vector<1x28x256xf32>
    %4 = vector.shape_cast %3 : vector<1x28x256xf32> to vector<28x256xf32>
    %cst = arith.constant dense<0.000000e+00> : vector<192x256xf32>
    %5 = tpu.matmul %2, %4, %cst {dimension_numbers = #tpu.dot_dimension_numbers<[1], [0], [0], [1], [0, 0, 1, 1], [], []>} : vector<192x28xf32>, vector<28x256xf32>, vector<192x256xf32> -> vector<192x256xf32>
    %6 = vector.extract_strided_slice %0 {offsets = [1, 0, 0], sizes = [24, 8, 28], strides = [1, 1, 1]} : vector<28x8x28xf32> to vector<24x8x28xf32>
    %7 = vector.shape_cast %6 : vector<24x8x28xf32> to vector<192x28xf32>
    %c1 = arith.constant 1 : index
    %c0_5 = arith.constant 0 : index
    %c0_6 = arith.constant 0 : index
    %8 = vector.load %arg2[%c1, %c0_5, %c0_6] : memref<5x28x256xf32, #tpu.memory_space<vmem>>, vector<1x28x256xf32>
    %9 = vector.shape_cast %8 : vector<1x28x256xf32> to vector<28x256xf32>
    %cst_7 = arith.constant dense<0.000000e+00> : vector<192x256xf32>
    %10 = tpu.matmul %7, %9, %cst_7 {dimension_numbers = #tpu.dot_dimension_numbers<[1], [0], [0], [1], [0, 0, 1, 1], [], []>} : vector<192x28xf32>, vector<28x256xf32>, vector<192x256xf32> -> vector<192x256xf32>
    %11 = arith.addf %5, %10 : vector<192x256xf32>
    %12 = vector.extract_strided_slice %0 {offsets = [2, 0, 0], sizes = [24, 8, 28], strides = [1, 1, 1]} : vector<28x8x28xf32> to vector<24x8x28xf32>
    %13 = vector.shape_cast %12 : vector<24x8x28xf32> to vector<192x28xf32>
    %c2 = arith.constant 2 : index
    %c0_8 = arith.constant 0 : index
    %c0_9 = arith.constant 0 : index
    %14 = vector.load %arg2[%c2, %c0_8, %c0_9] : memref<5x28x256xf32, #tpu.memory_space<vmem>>, vector<1x28x256xf32>
    %15 = vector.shape_cast %14 : vector<1x28x256xf32> to vector<28x256xf32>
    %cst_10 = arith.constant dense<0.000000e+00> : vector<192x256xf32>
    %16 = tpu.matmul %13, %15, %cst_10 {dimension_numbers = #tpu.dot_dimension_numbers<[1], [0], [0], [1], [0, 0, 1, 1], [], []>} : vector<192x28xf32>, vector<28x256xf32>, vector<192x256xf32> -> vector<192x256xf32>
    %17 = arith.addf %11, %16 : vector<192x256xf32>
    %18 = vector.extract_strided_slice %0 {offsets = [3, 0, 0], sizes = [24, 8, 28], strides = [1, 1, 1]} : vector<28x8x28xf32> to vector<24x8x28xf32>
    %19 = vector.shape_cast %18 : vector<24x8x28xf32> to vector<192x28xf32>
    %c3 = arith.constant 3 : index
    %c0_11 = arith.constant 0 : index
    %c0_12 = arith.constant 0 : index
    %20 = vector.load %arg2[%c3, %c0_11, %c0_12] : memref<5x28x256xf32, #tpu.memory_space<vmem>>, vector<1x28x256xf32>
    %21 = vector.shape_cast %20 : vector<1x28x256xf32> to vector<28x256xf32>
    %cst_13 = arith.constant dense<0.000000e+00> : vector<192x256xf32>
    %22 = tpu.matmul %19, %21, %cst_13 {dimension_numbers = #tpu.dot_dimension_numbers<[1], [0], [0], [1], [0, 0, 1, 1], [], []>} : vector<192x28xf32>, vector<28x256xf32>, vector<192x256xf32> -> vector<192x256xf32>
    %23 = arith.addf %17, %22 : vector<192x256xf32>
    %24 = vector.extract_strided_slice %0 {offsets = [4, 0, 0], sizes = [24, 8, 28], strides = [1, 1, 1]} : vector<28x8x28xf32> to vector<24x8x28xf32>
    %25 = vector.shape_cast %24 : vector<24x8x28xf32> to vector<192x28xf32>
    %c4 = arith.constant 4 : index
    %c0_14 = arith.constant 0 : index
    %c0_15 = arith.constant 0 : index
    %26 = vector.load %arg2[%c4, %c0_14, %c0_15] : memref<5x28x256xf32, #tpu.memory_space<vmem>>, vector<1x28x256xf32>
    %27 = vector.shape_cast %26 : vector<1x28x256xf32> to vector<28x256xf32>
    %cst_16 = arith.constant dense<0.000000e+00> : vector<192x256xf32>
    %28 = tpu.matmul %25, %27, %cst_16 {dimension_numbers = #tpu.dot_dimension_numbers<[1], [0], [0], [1], [0, 0, 1, 1], [], []>} : vector<192x28xf32>, vector<28x256xf32>, vector<192x256xf32> -> vector<192x256xf32>
    %29 = arith.addf %23, %28 : vector<192x256xf32>
    %30 = vector.extract_strided_slice %29 {offsets = [0, 0], sizes = [192, 72], strides = [1, 1]} : vector<192x256xf32> to vector<192x72xf32>
    %31 = vector.extract_strided_slice %29 {offsets = [0, 128], sizes = [192, 72], strides = [1, 1]} : vector<192x256xf32> to vector<192x72xf32>
    %32 = arith.maximumf %30, %31 : vector<192x72xf32>
    %c0_17 = arith.constant 0 : index
    %c0_18 = arith.constant 0 : index
    %33 = vector.load %arg3[%c0_17, %c0_18] : memref<1x72xf32, #tpu.memory_space<vmem>>, vector<1x72xf32>
    %34 = vector.broadcast %33 : vector<1x72xf32> to vector<192x72xf32>
    %35 = arith.addf %32, %34 : vector<192x72xf32>
    %cst_19 = arith.constant 0.000000e+00 : f32
    %36 = vector.broadcast %cst_19 : f32 to vector<192x72xf32>
    %37 = arith.maximumf %35, %36 : vector<192x72xf32>
    %38 = vector.shape_cast %37 : vector<192x72xf32> to vector<12x2x8x72xf32>
    %39 = vector.extract_strided_slice %38 {offsets = [0, 0, 0, 0], sizes = [12, 1, 8, 72], strides = [1, 1, 1, 1]} : vector<12x2x8x72xf32> to vector<12x1x8x72xf32>
    %40 = vector.shape_cast %39 : vector<12x1x8x72xf32> to vector<12x8x72xf32>
    %41 = vector.extract_strided_slice %38 {offsets = [0, 1, 0, 0], sizes = [12, 1, 8, 72], strides = [1, 1, 1, 1]} : vector<12x2x8x72xf32> to vector<12x1x8x72xf32>
    %42 = vector.shape_cast %41 : vector<12x1x8x72xf32> to vector<12x8x72xf32>
    %43 = arith.maximumf %40, %42 : vector<12x8x72xf32>
    %44 = vector.extract_strided_slice %43 {offsets = [0, 0, 0], sizes = [8, 8, 72], strides = [1, 1, 1]} : vector<12x8x72xf32> to vector<8x8x72xf32>
    %45 = vector.shape_cast %44 : vector<8x8x72xf32> to vector<64x72xf32>
    %c0_20 = arith.constant 0 : index
    %c0_21 = arith.constant 0 : index
    %c0_22 = arith.constant 0 : index
    %46 = vector.load %arg4[%c0_20, %c0_21, %c0_22] : memref<5x72x256xf32, #tpu.memory_space<vmem>>, vector<1x72x256xf32>
    %47 = vector.shape_cast %46 : vector<1x72x256xf32> to vector<72x256xf32>
    %cst_23 = arith.constant dense<0.000000e+00> : vector<64x256xf32>
    %48 = tpu.matmul %45, %47, %cst_23 {dimension_numbers = #tpu.dot_dimension_numbers<[1], [0], [0], [1], [0, 0, 1, 1], [], []>} : vector<64x72xf32>, vector<72x256xf32>, vector<64x256xf32> -> vector<64x256xf32>
    %49 = vector.extract_strided_slice %43 {offsets = [1, 0, 0], sizes = [8, 8, 72], strides = [1, 1, 1]} : vector<12x8x72xf32> to vector<8x8x72xf32>
    %50 = vector.shape_cast %49 : vector<8x8x72xf32> to vector<64x72xf32>
    %c1_24 = arith.constant 1 : index
    %c0_25 = arith.constant 0 : index
    %c0_26 = arith.constant 0 : index
    %51 = vector.load %arg4[%c1_24, %c0_25, %c0_26] : memref<5x72x256xf32, #tpu.memory_space<vmem>>, vector<1x72x256xf32>
    %52 = vector.shape_cast %51 : vector<1x72x256xf32> to vector<72x256xf32>
    %cst_27 = arith.constant dense<0.000000e+00> : vector<64x256xf32>
    %53 = tpu.matmul %50, %52, %cst_27 {dimension_numbers = #tpu.dot_dimension_numbers<[1], [0], [0], [1], [0, 0, 1, 1], [], []>} : vector<64x72xf32>, vector<72x256xf32>, vector<64x256xf32> -> vector<64x256xf32>
    %54 = arith.addf %48, %53 : vector<64x256xf32>
    %55 = vector.extract_strided_slice %43 {offsets = [2, 0, 0], sizes = [8, 8, 72], strides = [1, 1, 1]} : vector<12x8x72xf32> to vector<8x8x72xf32>
    %56 = vector.shape_cast %55 : vector<8x8x72xf32> to vector<64x72xf32>
    %c2_28 = arith.constant 2 : index
    %c0_29 = arith.constant 0 : index
    %c0_30 = arith.constant 0 : index
    %57 = vector.load %arg4[%c2_28, %c0_29, %c0_30] : memref<5x72x256xf32, #tpu.memory_space<vmem>>, vector<1x72x256xf32>
    %58 = vector.shape_cast %57 : vector<1x72x256xf32> to vector<72x256xf32>
    %cst_31 = arith.constant dense<0.000000e+00> : vector<64x256xf32>
    %59 = tpu.matmul %56, %58, %cst_31 {dimension_numbers = #tpu.dot_dimension_numbers<[1], [0], [0], [1], [0, 0, 1, 1], [], []>} : vector<64x72xf32>, vector<72x256xf32>, vector<64x256xf32> -> vector<64x256xf32>
    %60 = arith.addf %54, %59 : vector<64x256xf32>
    %61 = vector.extract_strided_slice %43 {offsets = [3, 0, 0], sizes = [8, 8, 72], strides = [1, 1, 1]} : vector<12x8x72xf32> to vector<8x8x72xf32>
    %62 = vector.shape_cast %61 : vector<8x8x72xf32> to vector<64x72xf32>
    %c3_32 = arith.constant 3 : index
    %c0_33 = arith.constant 0 : index
    %c0_34 = arith.constant 0 : index
    %63 = vector.load %arg4[%c3_32, %c0_33, %c0_34] : memref<5x72x256xf32, #tpu.memory_space<vmem>>, vector<1x72x256xf32>
    %64 = vector.shape_cast %63 : vector<1x72x256xf32> to vector<72x256xf32>
    %cst_35 = arith.constant dense<0.000000e+00> : vector<64x256xf32>
    %65 = tpu.matmul %62, %64, %cst_35 {dimension_numbers = #tpu.dot_dimension_numbers<[1], [0], [0], [1], [0, 0, 1, 1], [], []>} : vector<64x72xf32>, vector<72x256xf32>, vector<64x256xf32> -> vector<64x256xf32>
    %66 = arith.addf %60, %65 : vector<64x256xf32>
    %67 = vector.extract_strided_slice %43 {offsets = [4, 0, 0], sizes = [8, 8, 72], strides = [1, 1, 1]} : vector<12x8x72xf32> to vector<8x8x72xf32>
    %68 = vector.shape_cast %67 : vector<8x8x72xf32> to vector<64x72xf32>
    %c4_36 = arith.constant 4 : index
    %c0_37 = arith.constant 0 : index
    %c0_38 = arith.constant 0 : index
    %69 = vector.load %arg4[%c4_36, %c0_37, %c0_38] : memref<5x72x256xf32, #tpu.memory_space<vmem>>, vector<1x72x256xf32>
    %70 = vector.shape_cast %69 : vector<1x72x256xf32> to vector<72x256xf32>
    %cst_39 = arith.constant dense<0.000000e+00> : vector<64x256xf32>
    %71 = tpu.matmul %68, %70, %cst_39 {dimension_numbers = #tpu.dot_dimension_numbers<[1], [0], [0], [1], [0, 0, 1, 1], [], []>} : vector<64x72xf32>, vector<72x256xf32>, vector<64x256xf32> -> vector<64x256xf32>
    %72 = arith.addf %66, %71 : vector<64x256xf32>
    %73 = vector.extract_strided_slice %72 {offsets = [0, 0], sizes = [64, 64], strides = [1, 1]} : vector<64x256xf32> to vector<64x64xf32>
    %74 = vector.extract_strided_slice %72 {offsets = [0, 128], sizes = [64, 64], strides = [1, 1]} : vector<64x256xf32> to vector<64x64xf32>
    %75 = arith.maximumf %73, %74 : vector<64x64xf32>
    %c0_40 = arith.constant 0 : index
    %c0_41 = arith.constant 0 : index
    %76 = vector.load %arg5[%c0_40, %c0_41] : memref<1x64xf32, #tpu.memory_space<vmem>>, vector<1x64xf32>
    %77 = vector.broadcast %76 : vector<1x64xf32> to vector<64x64xf32>
    %78 = arith.addf %75, %77 : vector<64x64xf32>
    %cst_42 = arith.constant 0.000000e+00 : f32
    %79 = vector.broadcast %cst_42 : f32 to vector<64x64xf32>
    %80 = arith.maximumf %78, %79 : vector<64x64xf32>
    %81 = vector.shape_cast %80 : vector<64x64xf32> to vector<4x2x8x64xf32>
    %82 = vector.extract_strided_slice %81 {offsets = [0, 0, 0, 0], sizes = [4, 1, 8, 64], strides = [1, 1, 1, 1]} : vector<4x2x8x64xf32> to vector<4x1x8x64xf32>
    %83 = vector.shape_cast %82 : vector<4x1x8x64xf32> to vector<4x8x64xf32>
    %84 = vector.extract_strided_slice %81 {offsets = [0, 1, 0, 0], sizes = [4, 1, 8, 64], strides = [1, 1, 1, 1]} : vector<4x2x8x64xf32> to vector<4x1x8x64xf32>
    %85 = vector.shape_cast %84 : vector<4x1x8x64xf32> to vector<4x8x64xf32>
    %86 = arith.maximumf %83, %85 : vector<4x8x64xf32>
    %c0_43 = arith.constant 0 : index
    %c0_44 = arith.constant 0 : index
    %87 = vector.load %arg7[%c0_43, %c0_44] : memref<1x128xf32, #tpu.memory_space<vmem>>, vector<1x128xf32>
    %88 = vector.extract_strided_slice %86 {offsets = [0, 0, 0], sizes = [1, 8, 64], strides = [1, 1, 1]} : vector<4x8x64xf32> to vector<1x8x64xf32>
    %89 = vector.shape_cast %88 : vector<1x8x64xf32> to vector<8x64xf32>
    %c0_45 = arith.constant 0 : index
    %c0_46 = arith.constant 0 : index
    %c0_47 = arith.constant 0 : index
    %90 = vector.load %arg6[%c0_45, %c0_46, %c0_47] : memref<4x64x128xf32, #tpu.memory_space<vmem>>, vector<1x64x128xf32>
    %91 = vector.shape_cast %90 : vector<1x64x128xf32> to vector<64x128xf32>
    %cst_48 = arith.constant dense<0.000000e+00> : vector<8x128xf32>
    %92 = tpu.matmul %89, %91, %cst_48 {dimension_numbers = #tpu.dot_dimension_numbers<[1], [0], [0], [1], [0, 0, 1, 1], [], []>} : vector<8x64xf32>, vector<64x128xf32>, vector<8x128xf32> -> vector<8x128xf32>
    %93 = vector.broadcast %87 : vector<1x128xf32> to vector<8x128xf32>
    %94 = arith.addf %93, %92 : vector<8x128xf32>
    %95 = vector.extract_strided_slice %86 {offsets = [1, 0, 0], sizes = [1, 8, 64], strides = [1, 1, 1]} : vector<4x8x64xf32> to vector<1x8x64xf32>
    %96 = vector.shape_cast %95 : vector<1x8x64xf32> to vector<8x64xf32>
    %c1_49 = arith.constant 1 : index
    %c0_50 = arith.constant 0 : index
    %c0_51 = arith.constant 0 : index
    %97 = vector.load %arg6[%c1_49, %c0_50, %c0_51] : memref<4x64x128xf32, #tpu.memory_space<vmem>>, vector<1x64x128xf32>
    %98 = vector.shape_cast %97 : vector<1x64x128xf32> to vector<64x128xf32>
    %cst_52 = arith.constant dense<0.000000e+00> : vector<8x128xf32>
    %99 = tpu.matmul %96, %98, %cst_52 {dimension_numbers = #tpu.dot_dimension_numbers<[1], [0], [0], [1], [0, 0, 1, 1], [], []>} : vector<8x64xf32>, vector<64x128xf32>, vector<8x128xf32> -> vector<8x128xf32>
    %100 = arith.addf %94, %99 : vector<8x128xf32>
    %101 = vector.extract_strided_slice %86 {offsets = [2, 0, 0], sizes = [1, 8, 64], strides = [1, 1, 1]} : vector<4x8x64xf32> to vector<1x8x64xf32>
    %102 = vector.shape_cast %101 : vector<1x8x64xf32> to vector<8x64xf32>
    %c2_53 = arith.constant 2 : index
    %c0_54 = arith.constant 0 : index
    %c0_55 = arith.constant 0 : index
    %103 = vector.load %arg6[%c2_53, %c0_54, %c0_55] : memref<4x64x128xf32, #tpu.memory_space<vmem>>, vector<1x64x128xf32>
    %104 = vector.shape_cast %103 : vector<1x64x128xf32> to vector<64x128xf32>
    %cst_56 = arith.constant dense<0.000000e+00> : vector<8x128xf32>
    %105 = tpu.matmul %102, %104, %cst_56 {dimension_numbers = #tpu.dot_dimension_numbers<[1], [0], [0], [1], [0, 0, 1, 1], [], []>} : vector<8x64xf32>, vector<64x128xf32>, vector<8x128xf32> -> vector<8x128xf32>
    %106 = arith.addf %100, %105 : vector<8x128xf32>
    %107 = vector.extract_strided_slice %86 {offsets = [3, 0, 0], sizes = [1, 8, 64], strides = [1, 1, 1]} : vector<4x8x64xf32> to vector<1x8x64xf32>
    %108 = vector.shape_cast %107 : vector<1x8x64xf32> to vector<8x64xf32>
    %c3_57 = arith.constant 3 : index
    %c0_58 = arith.constant 0 : index
    %c0_59 = arith.constant 0 : index
    %109 = vector.load %arg6[%c3_57, %c0_58, %c0_59] : memref<4x64x128xf32, #tpu.memory_space<vmem>>, vector<1x64x128xf32>
    %110 = vector.shape_cast %109 : vector<1x64x128xf32> to vector<64x128xf32>
    %cst_60 = arith.constant dense<0.000000e+00> : vector<8x128xf32>
    %111 = tpu.matmul %108, %110, %cst_60 {dimension_numbers = #tpu.dot_dimension_numbers<[1], [0], [0], [1], [0, 0, 1, 1], [], []>} : vector<8x64xf32>, vector<64x128xf32>, vector<8x128xf32> -> vector<8x128xf32>
    %112 = arith.addf %106, %111 : vector<8x128xf32>
    %cst_61 = arith.constant 0.000000e+00 : f32
    %113 = vector.broadcast %cst_61 : f32 to vector<8x128xf32>
    %114 = arith.maximumf %112, %113 : vector<8x128xf32>
    %c0_62 = arith.constant 0 : index
    %c0_63 = arith.constant 0 : index
    %115 = vector.load %arg8[%c0_62, %c0_63] : memref<128x128xf32, #tpu.memory_space<vmem>>, vector<128x128xf32>
    %cst_64 = arith.constant dense<0.000000e+00> : vector<8x128xf32>
    %116 = tpu.matmul %114, %115, %cst_64 {dimension_numbers = #tpu.dot_dimension_numbers<[1], [0], [0], [1], [0, 0, 1, 1], [], []>} : vector<8x128xf32>, vector<128x128xf32>, vector<8x128xf32> -> vector<8x128xf32>
    %c0_65 = arith.constant 0 : index
    %c0_66 = arith.constant 0 : index
    %117 = vector.load %arg9[%c0_65, %c0_66] : memref<1x128xf32, #tpu.memory_space<vmem>>, vector<1x128xf32>
    %118 = vector.broadcast %117 : vector<1x128xf32> to vector<8x128xf32>
    %119 = arith.addf %116, %118 : vector<8x128xf32>
    %cst_67 = arith.constant 0.000000e+00 : f32
    %120 = vector.broadcast %cst_67 : f32 to vector<8x128xf32>
    %121 = arith.maximumf %119, %120 : vector<8x128xf32>
    %c0_68 = arith.constant 0 : index
    %c0_69 = arith.constant 0 : index
    %122 = vector.load %arg10[%c0_68, %c0_69] : memref<128x128xf32, #tpu.memory_space<vmem>>, vector<128x128xf32>
    %cst_70 = arith.constant dense<0.000000e+00> : vector<8x128xf32>
    %123 = tpu.matmul %121, %122, %cst_70 {dimension_numbers = #tpu.dot_dimension_numbers<[1], [0], [0], [1], [0, 0, 1, 1], [], []>} : vector<8x128xf32>, vector<128x128xf32>, vector<8x128xf32> -> vector<8x128xf32>
    %c0_71 = arith.constant 0 : index
    %c0_72 = arith.constant 0 : index
    %124 = vector.load %arg11[%c0_71, %c0_72] : memref<1x128xf32, #tpu.memory_space<vmem>>, vector<1x128xf32>
    %125 = vector.broadcast %124 : vector<1x128xf32> to vector<8x128xf32>
    %126 = arith.addf %123, %125 : vector<8x128xf32>
    %c0_73 = arith.constant 0 : index
    %c0_74 = arith.constant 0 : index
    %127 = vector.load %arg12[%c0_73, %c0_74] : memref<8x128xf32, #tpu.memory_space<vmem>>, vector<8x128xf32>
    tpu.vector_store %arg12[%c0_73, %c0_74], %126 {strides = array<i32>} : memref<8x128xf32, #tpu.memory_space<vmem>>, vector<8x128xf32>,
    return
  }
  func.func @transform_0(%arg0: i32) -> (i32, i32, i32) {
    %c0_i32 = arith.constant 0 : i32
    %c0_i32_0 = arith.constant 0 : i32
    %c0_i32_1 = arith.constant 0 : i32
    return %c0_i32, %arg0, %c0_i32_0 : i32, i32, i32
  }
  func.func @transform_1(%arg0: i32) -> (i32, i32, i32) {
    %c0_i32 = arith.constant 0 : i32
    %c0_i32_0 = arith.constant 0 : i32
    %c0_i32_1 = arith.constant 0 : i32
    %c0_i32_2 = arith.constant 0 : i32
    return %c0_i32, %c0_i32_0, %c0_i32_1 : i32, i32, i32
  }
  func.func @transform_2(%arg0: i32) -> (i32, i32) {
    %c0_i32 = arith.constant 0 : i32
    %c0_i32_0 = arith.constant 0 : i32
    %c0_i32_1 = arith.constant 0 : i32
    return %c0_i32, %c0_i32_0 : i32, i32
  }
  func.func @transform_3(%arg0: i32) -> (i32, i32, i32) {
    %c0_i32 = arith.constant 0 : i32
    %c0_i32_0 = arith.constant 0 : i32
    %c0_i32_1 = arith.constant 0 : i32
    %c0_i32_2 = arith.constant 0 : i32
    return %c0_i32, %c0_i32_0, %c0_i32_1 : i32, i32, i32
  }
  func.func @transform_4(%arg0: i32) -> (i32, i32) {
    %c0_i32 = arith.constant 0 : i32
    %c0_i32_0 = arith.constant 0 : i32
    %c0_i32_1 = arith.constant 0 : i32
    return %c0_i32, %c0_i32_0 : i32, i32
  }
  func.func @transform_5(%arg0: i32) -> (i32, i32, i32) {
    %c0_i32 = arith.constant 0 : i32
    %c0_i32_0 = arith.constant 0 : i32
    %c0_i32_1 = arith.constant 0 : i32
    %c0_i32_2 = arith.constant 0 : i32
    return %c0_i32, %c0_i32_0, %c0_i32_1 : i32, i32, i32
  }
  func.func @transform_6(%arg0: i32) -> (i32, i32) {
    %c0_i32 = arith.constant 0 : i32
    %c0_i32_0 = arith.constant 0 : i32
    %c0_i32_1 = arith.constant 0 : i32
    return %c0_i32, %c0_i32_0 : i32, i32
  }
  func.func @transform_7(%arg0: i32) -> (i32, i32) {
    %c0_i32 = arith.constant 0 : i32
    %c0_i32_0 = arith.constant 0 : i32
    %c0_i32_1 = arith.constant 0 : i32
    return %c0_i32, %c0_i32_0 : i32, i32
  }
  func.func @transform_8(%arg0: i32) -> (i32, i32) {
    %c0_i32 = arith.constant 0 : i32
    %c0_i32_0 = arith.constant 0 : i32
    %c0_i32_1 = arith.constant 0 : i32
    return %c0_i32, %c0_i32_0 : i32, i32
  }
  func.func @transform_9(%arg0: i32) -> (i32, i32) {
    %c0_i32 = arith.constant 0 : i32
    %c0_i32_0 = arith.constant 0 : i32
    %c0_i32_1 = arith.constant 0 : i32
    return %c0_i32, %c0_i32_0 : i32, i32
  }
  func.func @transform_10(%arg0: i32) -> (i32, i32) {
    %c0_i32 = arith.constant 0 : i32
    %c0_i32_0 = arith.constant 0 : i32
    %c0_i32_1 = arith.constant 0 : i32
    return %c0_i32, %c0_i32_0 : i32, i32
  }
  func.func @transform_11(%arg0: i32) -> (i32, i32) {
    %c0_i32 = arith.constant 0 : i32
    %c0_i32_0 = arith.constant 0 : i32
    return %arg0, %c0_i32 : i32, i32
  }
}

</mosaic_0001>

<llo_original>
// kernel: lenet_forward.1
$region0: #{lenet_forward.1}
  #allocation0 [shape = 'u32[]', space=smem, size = 0x4, offset = 0x4, fixed_abs, tag = 'smem constant byte address 0x4 - core index']
  #allocation1 [shape = 'u32[144,128]{1,0:T(1,128)}', space=vmem, size = 0x12000, scoped, tag = 'internal scratch']
  %s0 = inlined_call_operand.vmem [shape: f32[28,8,28], index: 0, kind: input, shape index: {}]
  %s1 = inlined_call_operand.vmem [shape: f32[5,28,256], index: 1, kind: input, shape index: {}]
  %s2 = inlined_call_operand.vmem [shape: f32[1,72], index: 2, kind: input, shape index: {}]
  %s3 = inlined_call_operand.hbm [shape: f32[5,72,256], index: 3, kind: input, shape index: {}]
  %s4 = inlined_call_operand.vmem [shape: f32[1,64], index: 4, kind: input, shape index: {}]
  %s5 = inlined_call_operand.hbm [shape: f32[4,64,128], index: 5, kind: input, shape index: {}]
  %s6 = inlined_call_operand.vmem [shape: f32[1,128], index: 6, kind: input, shape index: {}]
  %s7 = inlined_call_operand.hbm [shape: f32[128,128], index: 7, kind: input, shape index: {}]
  %s8 = inlined_call_operand.vmem [shape: f32[1,128], index: 8, kind: input, shape index: {}]
  %s9 = inlined_call_operand.hbm [shape: f32[128,128], index: 9, kind: input, shape index: {}]
  %s10 = inlined_call_operand.vmem [shape: f32[1,128], index: 10, kind: input, shape index: {}]
  %s11 = inlined_call_operand.vmem [shape: f32[8,128], index: 11, kind: output, shape index: {}]
  %s12 = sld [smem:[#allocation0]]
  $region70: #{lenet_forward.1} parent=0
    _
  %s14 = ssub.s32 1, %s12
  %s15 = scalar_select 0, %s14, %s12
  $region1: #{lenet_forward.1} parent=0
    #allocation2 [shape = 'u8[368640]{0}', space=vmem, size = 0x5a000, scoped, tag = 'input window, operand 3, single buffered']
    #allocation3 [shape = 's32[1]{0}', space=sflag, size = 0x4, scoped, tag = 'scoped memory for lenet_forward.1']
    #allocation4 [shape = 'u8[131072]{0}', space=vmem, size = 0x20000, scoped, tag = 'input window, operand 5, single buffered']
    #allocation5 [shape = 's32[1]{0}', space=sflag, size = 0x4, scoped, tag = 'scoped memory for lenet_forward.1']
    #allocation6 [shape = 'u8[65536]{0}', space=vmem, size = 0x10000, scoped, tag = 'input window, operand 7, single buffered']
    #allocation7 [shape = 'u8[65536]{0}', space=vmem, size = 0x10000, scoped, tag = 'input window, operand 9, single buffered']
    #allocation8 [shape = 's32[1]{0}', space=sflag, size = 0x4, scoped, tag = 'scoped memory for lenet_forward.1']
    %16 = vsyncpa [#allocation3], 0
    %17 = vsyncpa [#allocation5], 0
    %18 = vsyncpa [#allocation8], 0
    // Predicated region
    $region2: #{lenet_forward.1} parent=1 // pred_check
      _
    $region3: #{lenet_forward.1} parent=1 // pred_check_branch
      %20 = sbr.rel (0) target = $region5
    $region4: #{lenet_forward.1} parent=1 // pred_region
      _
    $region5: #{lenet_forward.1} parent=1 // pred_fallthru
      _
    // Predicated region
    $region6: #{lenet_forward.1} parent=1 // pred_check
      _
    $region7: #{lenet_forward.1} parent=1 // pred_check_branch
      %22 = sbr.rel (0) target = $region9
    $region8: #{lenet_forward.1} parent=1 // pred_region
      _
    $region9: #{lenet_forward.1} parent=1 // pred_fallthru
      _
    // Predicated region
    $region10: #{lenet_forward.1} parent=1 // pred_check
      _
    $region11: #{lenet_forward.1} parent=1 // pred_check_branch
      %24 = sbr.rel (0) target = $region13
    $region12: #{lenet_forward.1} parent=1 // pred_region
      _
    $region13: #{lenet_forward.1} parent=1 // pred_fallthru
      _
    // Predicated region
    $region14: #{lenet_forward.1} parent=1 // pred_check
      _
    $region15: #{lenet_forward.1} parent=1 // pred_check_branch
      %26 = sbr.rel (0) target = $region17
    $region16: #{lenet_forward.1} parent=1 // pred_region
      %s28 = ssub.s32 11520, 11520
      %29 = vsyncadd [#allocation3], %s28
      %s30 = sshll.u32 [#allocation2], 4
      %s31 = int_to_ptr.vmem [resolvable:$true] %s30
      %36 = dma.hbm_to_vmem [thread:$0]  %s3, 11520, %s31, [#allocation3], 256, 256, 16
    $region17: #{lenet_forward.1} parent=1 // pred_fallthru
      _
    // Predicated region
    $region18: #{lenet_forward.1} parent=1 // pred_check
      _
    $region19: #{lenet_forward.1} parent=1 // pred_check_branch
      %38 = sbr.rel (0) target = $region21
    $region20: #{lenet_forward.1} parent=1 // pred_region
      _
    $region21: #{lenet_forward.1} parent=1 // pred_fallthru
      _
    // Predicated region
    $region22: #{lenet_forward.1} parent=1 // pred_check
      _
    $region23: #{lenet_forward.1} parent=1 // pred_check_branch
      %40 = sbr.rel (0) target = $region25
    $region24: #{lenet_forward.1} parent=1 // pred_region
      %s42 = ssub.s32 4096, 4096
      %43 = vsyncadd [#allocation5], %s42
      %s44 = sshll.u32 [#allocation4], 4
      %s45 = int_to_ptr.vmem [resolvable:$true] %s44
      %50 = dma.hbm_to_vmem [thread:$0]  %s5, 4096, %s45, [#allocation5], 128, 128, 8
    $region25: #{lenet_forward.1} parent=1 // pred_fallthru
      _
    // Predicated region
    $region26: #{lenet_forward.1} parent=1 // pred_check
      _
    $region27: #{lenet_forward.1} parent=1 // pred_check_branch
      %52 = sbr.rel (0) target = $region29
    $region28: #{lenet_forward.1} parent=1 // pred_region
      _
    $region29: #{lenet_forward.1} parent=1 // pred_fallthru
      _
    // Predicated region
    $region30: #{lenet_forward.1} parent=1 // pred_check
      _
    $region31: #{lenet_forward.1} parent=1 // pred_check_branch
      %54 = sbr.rel (0) target = $region33
    $region32: #{lenet_forward.1} parent=1 // pred_region
      %s56 = ssub.s32 2048, 2048
      %57 = vsyncadd [#allocation5], %s56
      %s58 = sshll.u32 [#allocation6], 4
      %s59 = int_to_ptr.vmem [resolvable:$true] %s58
      %64 = dma.hbm_to_vmem [thread:$0]  %s7, 2048, %s59, [#allocation5], 128, 128, 8
    $region33: #{lenet_forward.1} parent=1 // pred_fallthru
      _
    // Predicated region
    $region34: #{lenet_forward.1} parent=1 // pred_check
      _
    $region35: #{lenet_forward.1} parent=1 // pred_check_branch
      %66 = sbr.rel (0) target = $region37
    $region36: #{lenet_forward.1} parent=1 // pred_region
      _
    $region37: #{lenet_forward.1} parent=1 // pred_fallthru
      _
    // Predicated region
    $region38: #{lenet_forward.1} parent=1 // pred_check
      _
    $region39: #{lenet_forward.1} parent=1 // pred_check_branch
      %68 = sbr.rel (0) target = $region41
    $region40: #{lenet_forward.1} parent=1 // pred_region
      %s70 = ssub.s32 2048, 2048
      %71 = vsyncadd [#allocation8], %s70
      %s72 = sshll.u32 [#allocation7], 4
      %s73 = int_to_ptr.vmem [resolvable:$true] %s72
      %78 = dma.hbm_to_vmem [thread:$0]  %s9, 2048, %s73, [#allocation8], 128, 128, 8
    $region41: #{lenet_forward.1} parent=1 // pred_fallthru
      _
    // Predicated region
    $region42: #{lenet_forward.1} parent=1 // pred_check
      _
    $region43: #{lenet_forward.1} parent=1 // pred_check_branch
      %80 = sbr.rel (0) target = $region45
    $region44: #{lenet_forward.1} parent=1 // pred_region
      _
    $region45: #{lenet_forward.1} parent=1 // pred_fallthru
      _
    // Predicated region
    $region46: #{lenet_forward.1} parent=1 // pred_check
      _
    $region47: #{lenet_forward.1} parent=1 // pred_check_branch
      %82 = sbr.rel (0) target = $region49
    $region48: #{lenet_forward.1} parent=1 // pred_region
      %83 = dma.done [#allocation3], 11520
    $region49: #{lenet_forward.1} parent=1 // pred_fallthru
      _
    // Predicated region
    $region50: #{lenet_forward.1} parent=1 // pred_check
      _
    $region51: #{lenet_forward.1} parent=1 // pred_check_branch
      %85 = sbr.rel (0) target = $region53
    $region52: #{lenet_forward.1} parent=1 // pred_region
      %86 = dma.done [#allocation5], 4096
    $region53: #{lenet_forward.1} parent=1 // pred_fallthru
      _
    // Predicated region
    $region54: #{lenet_forward.1} parent=1 // pred_check
      _
    $region55: #{lenet_forward.1} parent=1 // pred_check_branch
      %88 = sbr.rel (0) target = $region57
    $region56: #{lenet_forward.1} parent=1 // pred_region
      %89 = dma.done [#allocation5], 2048
    $region57: #{lenet_forward.1} parent=1 // pred_fallthru
      _
    // Predicated region
    $region58: #{lenet_forward.1} parent=1 // pred_check
      _
    $region59: #{lenet_forward.1} parent=1 // pred_check_branch
      %91 = sbr.rel (0) target = $region61
    $region60: #{lenet_forward.1} parent=1 // pred_region
      %92 = dma.done [#allocation8], 2048
    $region61: #{lenet_forward.1} parent=1 // pred_fallthru
      _
    %v93 = vld [vmem:[%s0] sm:$0xff]
    %v94 = vld [vmem:[%s0 + $0x8] sm:$0xff]
    %v95 = vld [vmem:[%s0 + $0x10] sm:$0xff]
    %v96 = vld [vmem:[%s0 + $0x18] sm:$0xff]
    %v97 = vld [vmem:[%s0 + $0x20] sm:$0xff]
    %v98 = vld [vmem:[%s0 + $0x28] sm:$0xff]
    %v99 = vld [vmem:[%s0 + $0x30] sm:$0xff]
    %v100 = vld [vmem:[%s0 + $0x38] sm:$0xff]
    %v101 = vld [vmem:[%s0 + $0x40] sm:$0xff]
    %v102 = vld [vmem:[%s0 + $0x48] sm:$0xff]
    %v103 = vld [vmem:[%s0 + $0x50] sm:$0xff]
    %v104 = vld [vmem:[%s0 + $0x58] sm:$0xff]
    %v105 = vld [vmem:[%s0 + $0x60] sm:$0xff]
    %v106 = vld [vmem:[%s0 + $0x68] sm:$0xff]
    %v107 = vld [vmem:[%s0 + $0x70] sm:$0xff]
    %v108 = vld [vmem:[%s0 + $0x78] sm:$0xff]
    %v109 = vld [vmem:[%s0 + $0x80] sm:$0xff]
    %v110 = vld [vmem:[%s0 + $0x88] sm:$0xff]
    %v111 = vld [vmem:[%s0 + $0x90] sm:$0xff]
    %v112 = vld [vmem:[%s0 + $0x98] sm:$0xff]
    %v113 = vld [vmem:[%s0 + $0xa0] sm:$0xff]
    %v114 = vld [vmem:[%s0 + $0xa8] sm:$0xff]
    %v115 = vld [vmem:[%s0 + $0xb0] sm:$0xff]
    %v116 = vld [vmem:[%s0 + $0xb8] sm:$0xff]
    %v117 = vld [vmem:[%s0 + $0xc0] sm:$0xff]
    %v118 = vld [vmem:[%s0 + $0xc8] sm:$0xff]
    %v119 = vld [vmem:[%s0 + $0xd0] sm:$0xff]
    %v120 = vld [vmem:[%s0 + $0xd8] sm:$0xff]
    %v121 = vld [vmem:[%s1] sm:$0xff]
    %v122 = vld [vmem:[%s1 + $0x8] sm:$0xff]
    %v123 = vld [vmem:[%s1 + $0x10] sm:$0xff]
    %v124 = vld [vmem:[%s1 + $0x18] sm:$0xff]
    %v125 = vld [vmem:[%s1 + $0x20] sm:$0xff]
    %v126 = vld [vmem:[%s1 + $0x28] sm:$0xff]
    %v127 = vld [vmem:[%s1 + $0x30] sm:$0xf]
    %v128 = vld [vmem:[%s1 + $0x38] sm:$0xf]
    %s129 = scalar_lea.vmem %s1, 64
    %v130 = vld [vmem:[%s129] sm:$0xff]
    %v131 = vld [vmem:[%s129 + $0x8] sm:$0xff]
    %v132 = vld [vmem:[%s129 + $0x10] sm:$0xff]
    %v133 = vld [vmem:[%s129 + $0x18] sm:$0xff]
    %v134 = vld [vmem:[%s129 + $0x20] sm:$0xff]
    %v135 = vld [vmem:[%s129 + $0x28] sm:$0xff]
    %v136 = vld [vmem:[%s129 + $0x30] sm:$0xf]
    %v137 = vld [vmem:[%s129 + $0x38] sm:$0xf]
    %vm138 = vcmask 228352
    %v140 = vsel %vm138, %v94, 0
    %v143 = vsel %vm138, %v95, 0
    %v146 = vsel %vm138, %v96, 0
    %v149 = vsel %vm138, %v97, 0
    %v152 = vsel %vm138, %v98, 0
    %v155 = vsel %vm138, %v99, 0
    %v158 = vsel %vm138, %v100, 0
    %v161 = vsel %vm138, %v101, 0
    %v164 = vsel %vm138, %v102, 0
    %v167 = vsel %vm138, %v103, 0
    %v170 = vsel %vm138, %v104, 0
    %v173 = vsel %vm138, %v105, 0
    %v176 = vsel %vm138, %v106, 0
    %v179 = vsel %vm138, %v107, 0
    %v182 = vsel %vm138, %v108, 0
    %v185 = vsel %vm138, %v109, 0
    %v188 = vsel %vm138, %v110, 0
    %v191 = vsel %vm138, %v111, 0
    %v194 = vsel %vm138, %v112, 0
    %v197 = vsel %vm138, %v113, 0
    %v200 = vsel %vm138, %v114, 0
    %v203 = vsel %vm138, %v115, 0
    %v206 = vsel %vm138, %v116, 0
    %v209 = vsel %vm138, %v117, 0
    %vm211 = vcmask 1043456
    %v213 = vsel %vm211, %v136, 0
    %v216 = vsel %vm211, %v137, 0
    %218 = vmatprep.subr.mxu0 %v131
    %219 = vmatpush1.msra.mxu0 %v130
    %220 = vmatprep.subr.mxu0 %v133
    %221 = vmatpush1.msra.mxu0 %v132
    %222 = vmatprep.subr.mxu0 %v135
    %223 = vmatpush1.msra.mxu0 %v134
    %224 = vmatprep.subr.mxu0 %v216
    %225 = vmatpush1.msra.mxu0 %v213
    %226 = vmatprep.subr.mxu0 0.0
    %227 = vmatpush1.msra.mxu0 0.0
    %228 = vmatprep.subr.mxu0 0.0
    %229 = vmatpush1.msra.mxu0 0.0
    %230 = vmatprep.subr.mxu0 0.0
    %231 = vmatpush1.msra.mxu0 0.0
    %232 = vmatprep.subr.mxu0 0.0
    %233 = vmatpush1.msra.mxu0 0.0
    %234 = vmatprep.subr.mxu0 0.0
    %235 = vmatpush1.msra.mxu0 0.0
    %236 = vmatprep.subr.mxu0 0.0
    %237 = vmatpush1.msra.mxu0 0.0
    %238 = vmatprep.subr.mxu0 0.0
    %239 = vmatpush1.msra.mxu0 0.0
    %240 = vmatprep.subr.mxu0 0.0
    %241 = vmatpush1.msra.mxu0 0.0
    %242 = vmatprep.subr.mxu0 0.0
    %243 = vmatpush1.msra.mxu0 0.0
    %244 = vmatprep.subr.mxu0 0.0
    %245 = vmatpush1.msra.mxu0 0.0
    %246 = vmatprep.subr.mxu0 0.0
    %247 = vmatpush1.msra.mxu0 0.0
    %248 = vmatprep.subr.mxu0 0.0
    %249 = vmatpush1.msra.mxu0 0.0
    %250 = vmatprep.subr.mxu0 0.0
    %251 = vmatpush1.msra.mxu0 0.0
    %252 = vmatprep.subr.mxu0 0.0
    %253 = vmatpush1.msra.mxu0 0.0
    %254 = vmatprep.subr.mxu0 0.0
    %255 = vmatpush1.msra.mxu0 0.0
    %256 = vmatprep.subr.mxu0 0.0
    %257 = vmatpush1.msra.mxu0 0.0
    %258 = vmatprep.subr.mxu0 0.0
    %259 = vmatpush1.msra.mxu0 0.0
    %260 = vmatprep.subr.mxu0 0.0
    %261 = vmatpush1.msra.mxu0 0.0
    %262 = vmatprep.subr.mxu0 0.0
    %263 = vmatpush1.msra.mxu0 0.0
    %264 = vmatprep.subr.mxu0 0.0
    %265 = vmatpush1.msra.mxu0 0.0
    %266 = vmatprep.subr.mxu0 0.0
    %267 = vmatpush1.msra.mxu0 0.0
    %268 = vmatprep.subr.mxu0 0.0
    %269 = vmatpush1.msra.mxu0 0.0
    %270 = vmatprep.subr.mxu0 0.0
    %271 = vmatpush1.msra.mxu0 0.0
    %272 = vmatprep.subr.mxu0 0.0
    %273 = vmatpush1.msra.mxu0 0.0
    %274 = vmatprep.subr.mxu0 0.0
    %275 = vmatpush1.msra.mxu0 0.0
    %276 = vmatprep.subr.mxu0 0.0
    %277 = vmatpush1.msra.mxu0 0.0
    %278 = vmatprep.subr.mxu0 0.0
    %279 = vmatpush1.msra.mxu0 0.0
    %280 = vmatprep.subr.mxu0 0.0
    %281 = vmatpush1.msra.mxu0 0.0
    %282 = vmatprep.mubr.f32.mxu0 0.0
    %283 = vmatmul.mubr.f32.gmra.mrb[0].mxu0 %v140
    %v284 = vpop.f32.mrb[0].mxu0
    %v285 = vadd.f32 0.0, %v284
    %v286 = vpop.f32.mrb[0].mxu0
    %v287 = vadd.f32 0.0, %v286
    %288 = vmatprep.mubr.f32.mxu0 0.0
    %289 = vmatmul.mubr.f32.gmra.mrb[0].mxu0 %v143
    %v290 = vpop.f32.mrb[0].mxu0
    %v291 = vadd.f32 0.0, %v290
    %v292 = vpop.f32.mrb[0].mxu0
    %v293 = vadd.f32 0.0, %v292
    %294 = vmatprep.mubr.f32.mxu0 0.0
    %295 = vmatmul.mubr.f32.gmra.mrb[0].mxu0 %v146
    %v296 = vpop.f32.mrb[0].mxu0
    %v297 = vadd.f32 0.0, %v296
    %v298 = vpop.f32.mrb[0].mxu0
    %v299 = vadd.f32 0.0, %v298
    %300 = vmatprep.mubr.f32.mxu0 0.0
    %301 = vmatmul.mubr.f32.gmra.mrb[0].mxu0 %v149
    %v302 = vpop.f32.mrb[0].mxu0
    %v303 = vadd.f32 0.0, %v302
    %v304 = vpop.f32.mrb[0].mxu0
    %v305 = vadd.f32 0.0, %v304
    %306 = vmatprep.mubr.f32.mxu0 0.0
    %307 = vmatmul.mubr.f32.gmra.mrb[0].mxu0 %v152
    %v308 = vpop.f32.mrb[0].mxu0
    %v309 = vadd.f32 0.0, %v308
    %v310 = vpop.f32.mrb[0].mxu0
    %v311 = vadd.f32 0.0, %v310
    %312 = vmatprep.mubr.f32.mxu0 0.0
    %313 = vmatmul.mubr.f32.gmra.mrb[0].mxu0 %v155
    %v314 = vpop.f32.mrb[0].mxu0
    %v315 = vadd.f32 0.0, %v314
    %v316 = vpop.f32.mrb[0].mxu0
    %v317 = vadd.f32 0.0, %v316
    %318 = vmatprep.mubr.f32.mxu0 0.0
    %319 = vmatmul.mubr.f32.gmra.mrb[0].mxu0 %v158
    %v320 = vpop.f32.mrb[0].mxu0
    %v321 = vadd.f32 0.0, %v320
    %v322 = vpop.f32.mrb[0].mxu0
    %v323 = vadd.f32 0.0, %v322
    %324 = vmatprep.mubr.f32.mxu0 0.0
    %325 = vmatmul.mubr.f32.gmra.mrb[0].mxu0 %v161
    %v326 = vpop.f32.mrb[0].mxu0
    %v327 = vadd.f32 0.0, %v326
    %v328 = vpop.f32.mrb[0].mxu0
    %v329 = vadd.f32 0.0, %v328
    %330 = vmatprep.mubr.f32.mxu0 0.0
    %331 = vmatmul.mubr.f32.gmra.mrb[0].mxu0 %v164
    %v332 = vpop.f32.mrb[0].mxu0
    %v333 = vadd.f32 0.0, %v332
    %v334 = vpop.f32.mrb[0].mxu0
    %v335 = vadd.f32 0.0, %v334
    %336 = vmatprep.mubr.f32.mxu0 0.0
    %337 = vmatmul.mubr.f32.gmra.mrb[0].mxu0 %v167
    %v338 = vpop.f32.mrb[0].mxu0
    %v339 = vadd.f32 0.0, %v338
    %v340 = vpop.f32.mrb[0].mxu0
    %v341 = vadd.f32 0.0, %v340
    %342 = vmatprep.mubr.f32.mxu0 0.0
    %343 = vmatmul.mubr.f32.gmra.mrb[0].mxu0 %v170
    %v344 = vpop.f32.mrb[0].mxu0
    %v345 = vadd.f32 0.0, %v344
    %v346 = vpop.f32.mrb[0].mxu0
    %v347 = vadd.f32 0.0, %v346
    %348 = vmatprep.mubr.f32.mxu0 0.0
    %349 = vmatmul.mubr.f32.gmra.mrb[0].mxu0 %v173
    %v350 = vpop.f32.mrb[0].mxu0
    %v351 = vadd.f32 0.0, %v350
    %v352 = vpop.f32.mrb[0].mxu0
    %v353 = vadd.f32 0.0, %v352
    %354 = vmatprep.mubr.f32.mxu0 0.0
    %355 = vmatmul.mubr.f32.gmra.mrb[0].mxu0 %v176
    %v356 = vpop.f32.mrb[0].mxu0
    %v357 = vadd.f32 0.0, %v356
    %v358 = vpop.f32.mrb[0].mxu0
    %v359 = vadd.f32 0.0, %v358
    %360 = vmatprep.mubr.f32.mxu0 0.0
    %361 = vmatmul.mubr.f32.gmra.mrb[0].mxu0 %v179
    %v362 = vpop.f32.mrb[0].mxu0
    %v363 = vadd.f32 0.0, %v362
    %v364 = vpop.f32.mrb[0].mxu0
    %v365 = vadd.f32 0.0, %v364
    %366 = vmatprep.mubr.f32.mxu0 0.0
    %367 = vmatmul.mubr.f32.gmra.mrb[0].mxu0 %v182
    %v368 = vpop.f32.mrb[0].mxu0
    %v369 = vadd.f32 0.0, %v368
    %v370 = vpop.f32.mrb[0].mxu0
    %v371 = vadd.f32 0.0, %v370
    %372 = vmatprep.mubr.f32.mxu0 0.0
    %373 = vmatmul.mubr.f32.gmra.mrb[0].mxu0 %v185
    %v374 = vpop.f32.mrb[0].mxu0
    %v375 = vadd.f32 0.0, %v374
    %v376 = vpop.f32.mrb[0].mxu0
    %v377 = vadd.f32 0.0, %v376
    %378 = vmatprep.mubr.f32.mxu0 0.0
    %379 = vmatmul.mubr.f32.gmra.mrb[0].mxu0 %v188
    %v380 = vpop.f32.mrb[0].mxu0
    %v381 = vadd.f32 0.0, %v380
    %v382 = vpop.f32.mrb[0].mxu0
    %v383 = vadd.f32 0.0, %v382
    %384 = vmatprep.mubr.f32.mxu0 0.0
    %385 = vmatmul.mubr.f32.gmra.mrb[0].mxu0 %v191
    %v386 = vpop.f32.mrb[0].mxu0
    %v387 = vadd.f32 0.0, %v386
    %v388 = vpop.f32.mrb[0].mxu0
    %v389 = vadd.f32 0.0, %v388
    %390 = vmatprep.mubr.f32.mxu0 0.0
    %391 = vmatmul.mubr.f32.gmra.mrb[0].mxu0 %v194
    %v392 = vpop.f32.mrb[0].mxu0
    %v393 = vadd.f32 0.0, %v392
    %v394 = vpop.f32.mrb[0].mxu0
    %v395 = vadd.f32 0.0, %v394
    %396 = vmatprep.mubr.f32.mxu0 0.0
    %397 = vmatmul.mubr.f32.gmra.mrb[0].mxu0 %v197
    %v398 = vpop.f32.mrb[0].mxu0
    %v399 = vadd.f32 0.0, %v398
    %v400 = vpop.f32.mrb[0].mxu0
    %v401 = vadd.f32 0.0, %v400
    %402 = vmatprep.mubr.f32.mxu0 0.0
    %403 = vmatmul.mubr.f32.gmra.mrb[0].mxu0 %v200
    %v404 = vpop.f32.mrb[0].mxu0
    %v405 = vadd.f32 0.0, %v404
    %v406 = vpop.f32.mrb[0].mxu0
    %v407 = vadd.f32 0.0, %v406
    %408 = vmatprep.mubr.f32.mxu0 0.0
    %409 = vmatmul.mubr.f32.gmra.mrb[0].mxu0 %v203
    %v410 = vpop.f32.mrb[0].mxu0
    %v411 = vadd.f32 0.0, %v410
    %v412 = vpop.f32.mrb[0].mxu0
    %v413 = vadd.f32 0.0, %v412
    %414 = vmatprep.mubr.f32.mxu0 0.0
    %415 = vmatmul.mubr.f32.gmra.mrb[0].mxu0 %v206
    %v416 = vpop.f32.mrb[0].mxu0
    %v417 = vadd.f32 0.0, %v416
    %v418 = vpop.f32.mrb[0].mxu0
    %v419 = vadd.f32 0.0, %v418
    %420 = vmatprep.mubr.f32.mxu0 0.0
    %421 = vmatmul.mubr.f32.gmra.mrb[0].mxu0 %v209
    %v422 = vpop.f32.mrb[0].mxu0
    %v423 = vadd.f32 0.0, %v422
    %v424 = vpop.f32.mrb[0].mxu0
    %v425 = vadd.f32 0.0, %v424
    %426 = vdwg.mxu0
    %v428 = vsel %vm138, %v93, 0
    %v431 = vsel %vm211, %v127, 0
    %v434 = vsel %vm211, %v128, 0
    %436 = vmatprep.subr.mxu0 %v122
    %437 = vmatpush1.msra.mxu0 %v121
    %438 = vmatprep.subr.mxu0 %v124
    %439 = vmatpush1.msra.mxu0 %v123
    %440 = vmatprep.subr.mxu0 %v126
    %441 = vmatpush1.msra.mxu0 %v125
    %442 = vmatprep.subr.mxu0 %v434
    %443 = vmatpush1.msra.mxu0 %v431
    %444 = vmatprep.subr.mxu0 0.0
    %445 = vmatpush1.msra.mxu0 0.0
    %446 = vmatprep.subr.mxu0 0.0
    %447 = vmatpush1.msra.mxu0 0.0
    %448 = vmatprep.subr.mxu0 0.0
    %449 = vmatpush1.msra.mxu0 0.0
    %450 = vmatprep.subr.mxu0 0.0
    %451 = vmatpush1.msra.mxu0 0.0
    %452 = vmatprep.subr.mxu0 0.0
    %453 = vmatpush1.msra.mxu0 0.0
    %454 = vmatprep.subr.mxu0 0.0
    %455 = vmatpush1.msra.mxu0 0.0
    %456 = vmatprep.subr.mxu0 0.0
    %457 = vmatpush1.msra.mxu0 0.0
    %458 = vmatprep.subr.mxu0 0.0
    %459 = vmatpush1.msra.mxu0 0.0
    %460 = vmatprep.subr.mxu0 0.0
    %461 = vmatpush1.msra.mxu0 0.0
    %462 = vmatprep.subr.mxu0 0.0
    %463 = vmatpush1.msra.mxu0 0.0
    %464 = vmatprep.subr.mxu0 0.0
    %465 = vmatpush1.msra.mxu0 0.0
    %466 = vmatprep.subr.mxu0 0.0
    %467 = vmatpush1.msra.mxu0 0.0
    %468 = vmatprep.subr.mxu0 0.0
    %469 = vmatpush1.msra.mxu0 0.0
    %470 = vmatprep.subr.mxu0 0.0
    %471 = vmatpush1.msra.mxu0 0.0
    %472 = vmatprep.subr.mxu0 0.0
    %473 = vmatpush1.msra.mxu0 0.0
    %474 = vmatprep.subr.mxu0 0.0
    %475 = vmatpush1.msra.mxu0 0.0
    %476 = vmatprep.subr.mxu0 0.0
    %477 = vmatpush1.msra.mxu0 0.0
    %478 = vmatprep.subr.mxu0 0.0
    %479 = vmatpush1.msra.mxu0 0.0
    %480 = vmatprep.subr.mxu0 0.0
    %481 = vmatpush1.msra.mxu0 0.0
    %482 = vmatprep.subr.mxu0 0.0
    %483 = vmatpush1.msra.mxu0 0.0
    %484 = vmatprep.subr.mxu0 0.0
    %485 = vmatpush1.msra.mxu0 0.0
    %486 = vmatprep.subr.mxu0 0.0
    %487 = vmatpush1.msra.mxu0 0.0
    %488 = vmatprep.subr.mxu0 0.0
    %489 = vmatpush1.msra.mxu0 0.0
    %490 = vmatprep.subr.mxu0 0.0
    %491 = vmatpush1.msra.mxu0 0.0
    %492 = vmatprep.subr.mxu0 0.0
    %493 = vmatpush1.msra.mxu0 0.0
    %494 = vmatprep.subr.mxu0 0.0
    %495 = vmatpush1.msra.mxu0 0.0
    %496 = vmatprep.subr.mxu0 0.0
    %497 = vmatpush1.msra.mxu0 0.0
    %498 = vmatprep.subr.mxu0 0.0
    %499 = vmatpush1.msra.mxu0 0.0
    %500 = vmatprep.mubr.f32.mxu0 0.0
    %501 = vmatmul.mubr.f32.gmra.mrb[0].mxu0 %v428
    %v502 = vpop.f32.mrb[0].mxu0
    %v503 = vadd.f32 %v285, %v502
    %v504 = vpop.f32.mrb[0].mxu0
    %v505 = vadd.f32 %v287, %v504
    %506 = vmatprep.mubr.f32.mxu0 0.0
    %507 = vmatmul.mubr.f32.gmra.mrb[0].mxu0 %v140
    %v508 = vpop.f32.mrb[0].mxu0
    %v509 = vadd.f32 %v291, %v508
    %v510 = vpop.f32.mrb[0].mxu0
    %v511 = vadd.f32 %v293, %v510
    %512 = vmatprep.mubr.f32.mxu0 0.0
    %513 = vmatmul.mubr.f32.gmra.mrb[0].mxu0 %v143
    %v514 = vpop.f32.mrb[0].mxu0
    %v515 = vadd.f32 %v297, %v514
    %v516 = vpop.f32.mrb[0].mxu0
    %v517 = vadd.f32 %v299, %v516
    %518 = vmatprep.mubr.f32.mxu0 0.0
    %519 = vmatmul.mubr.f32.gmra.mrb[0].mxu0 %v146
    %v520 = vpop.f32.mrb[0].mxu0
    %v521 = vadd.f32 %v303, %v520
    %v522 = vpop.f32.mrb[0].mxu0
    %v523 = vadd.f32 %v305, %v522
    %524 = vmatprep.mubr.f32.mxu0 0.0
    %525 = vmatmul.mubr.f32.gmra.mrb[0].mxu0 %v149
    %v526 = vpop.f32.mrb[0].mxu0
    %v527 = vadd.f32 %v309, %v526
    %v528 = vpop.f32.mrb[0].mxu0
    %v529 = vadd.f32 %v311, %v528
    %530 = vmatprep.mubr.f32.mxu0 0.0
    %531 = vmatmul.mubr.f32.gmra.mrb[0].mxu0 %v152
    %v532 = vpop.f32.mrb[0].mxu0
    %v533 = vadd.f32 %v315, %v532
    %v534 = vpop.f32.mrb[0].mxu0
    %v535 = vadd.f32 %v317, %v534
    %536 = vmatprep.mubr.f32.mxu0 0.0
    %537 = vmatmul.mubr.f32.gmra.mrb[0].mxu0 %v155
    %v538 = vpop.f32.mrb[0].mxu0
    %v539 = vadd.f32 %v321, %v538
    %v540 = vpop.f32.mrb[0].mxu0
    %v541 = vadd.f32 %v323, %v540
    %542 = vmatprep.mubr.f32.mxu0 0.0
    %543 = vmatmul.mubr.f32.gmra.mrb[0].mxu0 %v158
    %v544 = vpop.f32.mrb[0].mxu0
    %v545 = vadd.f32 %v327, %v544
    %v546 = vpop.f32.mrb[0].mxu0
    %v547 = vadd.f32 %v329, %v546
    %548 = vmatprep.mubr.f32.mxu0 0.0
    %549 = vmatmul.mubr.f32.gmra.mrb[0].mxu0 %v161
    %v550 = vpop.f32.mrb[0].mxu0
    %v551 = vadd.f32 %v333, %v550
    %v552 = vpop.f32.mrb[0].mxu0
    %v553 = vadd.f32 %v335, %v552
    %554 = vmatprep.mubr.f32.mxu0 0.0
    %555 = vmatmul.mubr.f32.gmra.mrb[0].mxu0 %v164
    %v556 = vpop.f32.mrb[0].mxu0
    %v557 = vadd.f32 %v339, %v556
    %v558 = vpop.f32.mrb[0].mxu0
    %v559 = vadd.f32 %v341, %v558
    %560 = vmatprep.mubr.f32.mxu0 0.0
    %561 = vmatmul.mubr.f32.gmra.mrb[0].mxu0 %v167
    %v562 = vpop.f32.mrb[0].mxu0
    %v563 = vadd.f32 %v345, %v562
    %v564 = vpop.f32.mrb[0].mxu0
    %v565 = vadd.f32 %v347, %v564
    %566 = vmatprep.mubr.f32.mxu0 0.0
    %567 = vmatmul.mubr.f32.gmra.mrb[0].mxu0 %v170
    %v568 = vpop.f32.mrb[0].mxu0
    %v569 = vadd.f32 %v351, %v568
    %v570 = vpop.f32.mrb[0].mxu0
    %v571 = vadd.f32 %v353, %v570
    %572 = vmatprep.mubr.f32.mxu0 0.0
    %573 = vmatmul.mubr.f32.gmra.mrb[0].mxu0 %v173
    %v574 = vpop.f32.mrb[0].mxu0
    %v575 = vadd.f32 %v357, %v574
    %v576 = vpop.f32.mrb[0].mxu0
    %v577 = vadd.f32 %v359, %v576
    %578 = vmatprep.mubr.f32.mxu0 0.0
    %579 = vmatmul.mubr.f32.gmra.mrb[0].mxu0 %v176
    %v580 = vpop.f32.mrb[0].mxu0
    %v581 = vadd.f32 %v363, %v580
    %v582 = vpop.f32.mrb[0].mxu0
    %v583 = vadd.f32 %v365, %v582
    %584 = vmatprep.mubr.f32.mxu0 0.0
    %585 = vmatmul.mubr.f32.gmra.mrb[0].mxu0 %v179
    %v586 = vpop.f32.mrb[0].mxu0
    %v587 = vadd.f32 %v369, %v586
    %v588 = vpop.f32.mrb[0].mxu0
    %v589 = vadd.f32 %v371, %v588
    %590 = vmatprep.mubr.f32.mxu0 0.0
    %591 = vmatmul.mubr.f32.gmra.mrb[0].mxu0 %v182
    %v592 = vpop.f32.mrb[0].mxu0
    %v593 = vadd.f32 %v375, %v592
    %v594 = vpop.f32.mrb[0].mxu0
    %v595 = vadd.f32 %v377, %v594
    %596 = vmatprep.mubr.f32.mxu0 0.0
    %597 = vmatmul.mubr.f32.gmra.mrb[0].mxu0 %v185
    %v598 = vpop.f32.mrb[0].mxu0
    %v599 = vadd.f32 %v381, %v598
    %v600 = vpop.f32.mrb[0].mxu0
    %v601 = vadd.f32 %v383, %v600
    %602 = vmatprep.mubr.f32.mxu0 0.0
    %603 = vmatmul.mubr.f32.gmra.mrb[0].mxu0 %v188
    %v604 = vpop.f32.mrb[0].mxu0
    %v605 = vadd.f32 %v387, %v604
    %v606 = vpop.f32.mrb[0].mxu0
    %v607 = vadd.f32 %v389, %v606
    %608 = vmatprep.mubr.f32.mxu0 0.0
    %609 = vmatmul.mubr.f32.gmra.mrb[0].mxu0 %v191
    %v610 = vpop.f32.mrb[0].mxu0
    %v611 = vadd.f32 %v393, %v610
    %v612 = vpop.f32.mrb[0].mxu0
    %v613 = vadd.f32 %v395, %v612
    %614 = vmatprep.mubr.f32.mxu0 0.0
    %615 = vmatmul.mubr.f32.gmra.mrb[0].mxu0 %v194
    %v616 = vpop.f32.mrb[0].mxu0
    %v617 = vadd.f32 %v399, %v616
    %v618 = vpop.f32.mrb[0].mxu0
    %v619 = vadd.f32 %v401, %v618
    %620 = vmatprep.mubr.f32.mxu0 0.0
    %621 = vmatmul.mubr.f32.gmra.mrb[0].mxu0 %v197
    %v622 = vpop.f32.mrb[0].mxu0
    %v623 = vadd.f32 %v405, %v622
    %v624 = vpop.f32.mrb[0].mxu0
    %v625 = vadd.f32 %v407, %v624
    %626 = vmatprep.mubr.f32.mxu0 0.0
    %627 = vmatmul.mubr.f32.gmra.mrb[0].mxu0 %v200
    %v628 = vpop.f32.mrb[0].mxu0
    %v629 = vadd.f32 %v411, %v628
    %v630 = vpop.f32.mrb[0].mxu0
    %v631 = vadd.f32 %v413, %v630
    %632 = vmatprep.mubr.f32.mxu0 0.0
    %633 = vmatmul.mubr.f32.gmra.mrb[0].mxu0 %v203
    %v634 = vpop.f32.mrb[0].mxu0
    %v635 = vadd.f32 %v417, %v634
    %v636 = vpop.f32.mrb[0].mxu0
    %v637 = vadd.f32 %v419, %v636
    %638 = vmatprep.mubr.f32.mxu0 0.0
    %639 = vmatmul.mubr.f32.gmra.mrb[0].mxu0 %v206
    %v640 = vpop.f32.mrb[0].mxu0
    %v641 = vadd.f32 %v423, %v640
    %v642 = vpop.f32.mrb[0].mxu0
    %v643 = vadd.f32 %v425, %v642
    %644 = vdwg.mxu0
    %s645 = scalar_lea.vmem %s1, 128
    %v646 = vld [vmem:[%s645] sm:$0xff]
    %v647 = vld [vmem:[%s645 + $0x8] sm:$0xff]
    %v648 = vld [vmem:[%s645 + $0x10] sm:$0xff]
    %v649 = vld [vmem:[%s645 + $0x18] sm:$0xff]
    %v650 = vld [vmem:[%s645 + $0x20] sm:$0xff]
    %v651 = vld [vmem:[%s645 + $0x28] sm:$0xff]
    %v652 = vld [vmem:[%s645 + $0x30] sm:$0xf]
    %v653 = vld [vmem:[%s645 + $0x38] sm:$0xf]
    %v655 = vsel %vm138, %v118, 0
    %v658 = vsel %vm211, %v652, 0
    %v661 = vsel %vm211, %v653, 0
    %663 = vmatprep.subr.mxu0 %v647
    %664 = vmatpush1.msra.mxu0 %v646
    %665 = vmatprep.subr.mxu0 %v649
    %666 = vmatpush1.msra.mxu0 %v648
    %667 = vmatprep.subr.mxu0 %v651
    %668 = vmatpush1.msra.mxu0 %v650
    %669 = vmatprep.subr.mxu0 %v661
    %670 = vmatpush1.msra.mxu0 %v658
    %671 = vmatprep.subr.mxu0 0.0
    %672 = vmatpush1.msra.mxu0 0.0
    %673 = vmatprep.subr.mxu0 0.0
    %674 = vmatpush1.msra.mxu0 0.0
    %675 = vmatprep.subr.mxu0 0.0
    %676 = vmatpush1.msra.mxu0 0.0
    %677 = vmatprep.subr.mxu0 0.0
    %678 = vmatpush1.msra.mxu0 0.0
    %679 = vmatprep.subr.mxu0 0.0
    %680 = vmatpush1.msra.mxu0 0.0
    %681 = vmatprep.subr.mxu0 0.0
    %682 = vmatpush1.msra.mxu0 0.0
    %683 = vmatprep.subr.mxu0 0.0
    %684 = vmatpush1.msra.mxu0 0.0
    %685 = vmatprep.subr.mxu0 0.0
    %686 = vmatpush1.msra.mxu0 0.0
    %687 = vmatprep.subr.mxu0 0.0
    %688 = vmatpush1.msra.mxu0 0.0
    %689 = vmatprep.subr.mxu0 0.0
    %690 = vmatpush1.msra.mxu0 0.0
    %691 = vmatprep.subr.mxu0 0.0
    %692 = vmatpush1.msra.mxu0 0.0
    %693 = vmatprep.subr.mxu0 0.0
    %694 = vmatpush1.msra.mxu0 0.0
    %695 = vmatprep.subr.mxu0 0.0
    %696 = vmatpush1.msra.mxu0 0.0
    %697 = vmatprep.subr.mxu0 0.0
    %698 = vmatpush1.msra.mxu0 0.0
    %699 = vmatprep.subr.mxu0 0.0
    %700 = vmatpush1.msra.mxu0 0.0
    %701 = vmatprep.subr.mxu0 0.0
    %702 = vmatpush1.msra.mxu0 0.0
    %703 = vmatprep.subr.mxu0 0.0
    %704 = vmatpush1.msra.mxu0 0.0
    %705 = vmatprep.subr.mxu0 0.0
    %706 = vmatpush1.msra.mxu0 0.0
    %707 = vmatprep.subr.mxu0 0.0
    %708 = vmatpush1.msra.mxu0 0.0
    %709 = vmatprep.subr.mxu0 0.0
    %710 = vmatpush1.msra.mxu0 0.0
    %711 = vmatprep.subr.mxu0 0.0
    %712 = vmatpush1.msra.mxu0 0.0
    %713 = vmatprep.subr.mxu0 0.0
    %714 = vmatpush1.msra.mxu0 0.0
    %715 = vmatprep.subr.mxu0 0.0
    %716 = vmatpush1.msra.mxu0 0.0
    %717 = vmatprep.subr.mxu0 0.0
    %718 = vmatpush1.msra.mxu0 0.0
    %719 = vmatprep.subr.mxu0 0.0
    %720 = vmatpush1.msra.mxu0 0.0
    %721 = vmatprep.subr.mxu0 0.0
    %722 = vmatpush1.msra.mxu0 0.0
    %723 = vmatprep.subr.mxu0 0.0
    %724 = vmatpush1.msra.mxu0 0.0
    %725 = vmatprep.subr.mxu0 0.0
    %726 = vmatpush1.msra.mxu0 0.0
    %727 = vmatprep.mubr.f32.mxu0 0.0
    %728 = vmatmul.mubr.f32.gmra.mrb[0].mxu0 %v143
    %v729 = vpop.f32.mrb[0].mxu0
    %v730 = vadd.f32 0.0, %v729
    %v731 = vpop.f32.mrb[0].mxu0
    %v732 = vadd.f32 0.0, %v731
    %733 = vmatprep.mubr.f32.mxu0 0.0
    %734 = vmatmul.mubr.f32.gmra.mrb[0].mxu0 %v146
    %v735 = vpop.f32.mrb[0].mxu0
    %v736 = vadd.f32 0.0, %v735
    %v737 = vpop.f32.mrb[0].mxu0
    %v738 = vadd.f32 0.0, %v737
    %739 = vmatprep.mubr.f32.mxu0 0.0
    %740 = vmatmul.mubr.f32.gmra.mrb[0].mxu0 %v149
    %v741 = vpop.f32.mrb[0].mxu0
    %v742 = vadd.f32 0.0, %v741
    %v743 = vpop.f32.mrb[0].mxu0
    %v744 = vadd.f32 0.0, %v743
    %745 = vmatprep.mubr.f32.mxu0 0.0
    %746 = vmatmul.mubr.f32.gmra.mrb[0].mxu0 %v152
    %v747 = vpop.f32.mrb[0].mxu0
    %v748 = vadd.f32 0.0, %v747
    %v749 = vpop.f32.mrb[0].mxu0
    %v750 = vadd.f32 0.0, %v749
    %751 = vmatprep.mubr.f32.mxu0 0.0
    %752 = vmatmul.mubr.f32.gmra.mrb[0].mxu0 %v155
    %v753 = vpop.f32.mrb[0].mxu0
    %v754 = vadd.f32 0.0, %v753
    %v755 = vpop.f32.mrb[0].mxu0
    %v756 = vadd.f32 0.0, %v755
    %757 = vmatprep.mubr.f32.mxu0 0.0
    %758 = vmatmul.mubr.f32.gmra.mrb[0].mxu0 %v158
    %v759 = vpop.f32.mrb[0].mxu0
    %v760 = vadd.f32 0.0, %v759
    %v761 = vpop.f32.mrb[0].mxu0
    %v762 = vadd.f32 0.0, %v761
    %763 = vmatprep.mubr.f32.mxu0 0.0
    %764 = vmatmul.mubr.f32.gmra.mrb[0].mxu0 %v161
    %v765 = vpop.f32.mrb[0].mxu0
    %v766 = vadd.f32 0.0, %v765
    %v767 = vpop.f32.mrb[0].mxu0
    %v768 = vadd.f32 0.0, %v767
    %769 = vmatprep.mubr.f32.mxu0 0.0
    %770 = vmatmul.mubr.f32.gmra.mrb[0].mxu0 %v164
    %v771 = vpop.f32.mrb[0].mxu0
    %v772 = vadd.f32 0.0, %v771
    %v773 = vpop.f32.mrb[0].mxu0
    %v774 = vadd.f32 0.0, %v773
    %775 = vmatprep.mubr.f32.mxu0 0.0
    %776 = vmatmul.mubr.f32.gmra.mrb[0].mxu0 %v167
    %v777 = vpop.f32.mrb[0].mxu0
    %v778 = vadd.f32 0.0, %v777
    %v779 = vpop.f32.mrb[0].mxu0
    %v780 = vadd.f32 0.0, %v779
    %781 = vmatprep.mubr.f32.mxu0 0.0
    %782 = vmatmul.mubr.f32.gmra.mrb[0].mxu0 %v170
    %v783 = vpop.f32.mrb[0].mxu0
    %v784 = vadd.f32 0.0, %v783
    %v785 = vpop.f32.mrb[0].mxu0
    %v786 = vadd.f32 0.0, %v785
    %787 = vmatprep.mubr.f32.mxu0 0.0
    %788 = vmatmul.mubr.f32.gmra.mrb[0].mxu0 %v173
    %v789 = vpop.f32.mrb[0].mxu0
    %v790 = vadd.f32 0.0, %v789
    %v791 = vpop.f32.mrb[0].mxu0
    %v792 = vadd.f32 0.0, %v791
    %793 = vmatprep.mubr.f32.mxu0 0.0
    %794 = vmatmul.mubr.f32.gmra.mrb[0].mxu0 %v176
    %v795 = vpop.f32.mrb[0].mxu0
    %v796 = vadd.f32 0.0, %v795
    %v797 = vpop.f32.mrb[0].mxu0
    %v798 = vadd.f32 0.0, %v797
    %799 = vmatprep.mubr.f32.mxu0 0.0
    %800 = vmatmul.mubr.f32.gmra.mrb[0].mxu0 %v179
    %v801 = vpop.f32.mrb[0].mxu0
    %v802 = vadd.f32 0.0, %v801
    %v803 = vpop.f32.mrb[0].mxu0
    %v804 = vadd.f32 0.0, %v803
    %805 = vmatprep.mubr.f32.mxu0 0.0
    %806 = vmatmul.mubr.f32.gmra.mrb[0].mxu0 %v182
    %v807 = vpop.f32.mrb[0].mxu0
    %v808 = vadd.f32 0.0, %v807
    %v809 = vpop.f32.mrb[0].mxu0
    %v810 = vadd.f32 0.0, %v809
    %811 = vmatprep.mubr.f32.mxu0 0.0
    %812 = vmatmul.mubr.f32.gmra.mrb[0].mxu0 %v185
    %v813 = vpop.f32.mrb[0].mxu0
    %v814 = vadd.f32 0.0, %v813
    %v815 = vpop.f32.mrb[0].mxu0
    %v816 = vadd.f32 0.0, %v815
    %817 = vmatprep.mubr.f32.mxu0 0.0
    %818 = vmatmul.mubr.f32.gmra.mrb[0].mxu0 %v188
    %v819 = vpop.f32.mrb[0].mxu0
    %v820 = vadd.f32 0.0, %v819
    %v821 = vpop.f32.mrb[0].mxu0
    %v822 = vadd.f32 0.0, %v821
    %823 = vmatprep.mubr.f32.mxu0 0.0
    %824 = vmatmul.mubr.f32.gmra.mrb[0].mxu0 %v191
    %v825 = vpop.f32.mrb[0].mxu0
    %v826 = vadd.f32 0.0, %v825
    %v827 = vpop.f32.mrb[0].mxu0
    %v828 = vadd.f32 0.0, %v827
    %829 = vmatprep.mubr.f32.mxu0 0.0
    %830 = vmatmul.mubr.f32.gmra.mrb[0].mxu0 %v194
    %v831 = vpop.f32.mrb[0].mxu0
    %v832 = vadd.f32 0.0, %v831
    %v833 = vpop.f32.mrb[0].mxu0
    %v834 = vadd.f32 0.0, %v833
    %835 = vmatprep.mubr.f32.mxu0 0.0
    %836 = vmatmul.mubr.f32.gmra.mrb[0].mxu0 %v197
    %v837 = vpop.f32.mrb[0].mxu0
    %v838 = vadd.f32 0.0, %v837
    %v839 = vpop.f32.mrb[0].mxu0
    %v840 = vadd.f32 0.0, %v839
    %841 = vmatprep.mubr.f32.mxu0 0.0
    %842 = vmatmul.mubr.f32.gmra.mrb[0].mxu0 %v200
    %v843 = vpop.f32.mrb[0].mxu0
    %v844 = vadd.f32 0.0, %v843
    %v845 = vpop.f32.mrb[0].mxu0
    %v846 = vadd.f32 0.0, %v845
    %847 = vmatprep.mubr.f32.mxu0 0.0
    %848 = vmatmul.mubr.f32.gmra.mrb[0].mxu0 %v203
    %v849 = vpop.f32.mrb[0].mxu0
    %v850 = vadd.f32 0.0, %v849
    %v851 = vpop.f32.mrb[0].mxu0
    %v852 = vadd.f32 0.0, %v851
    %853 = vmatprep.mubr.f32.mxu0 0.0
    %854 = vmatmul.mubr.f32.gmra.mrb[0].mxu0 %v206
    %v855 = vpop.f32.mrb[0].mxu0
    %v856 = vadd.f32 0.0, %v855
    %v857 = vpop.f32.mrb[0].mxu0
    %v858 = vadd.f32 0.0, %v857
    %859 = vmatprep.mubr.f32.mxu0 0.0
    %860 = vmatmul.mubr.f32.gmra.mrb[0].mxu0 %v209
    %v861 = vpop.f32.mrb[0].mxu0
    %v862 = vadd.f32 0.0, %v861
    %v863 = vpop.f32.mrb[0].mxu0
    %v864 = vadd.f32 0.0, %v863
    %865 = vmatprep.mubr.f32.mxu0 0.0
    %866 = vmatmul.mubr.f32.gmra.mrb[0].mxu0 %v655
    %v867 = vpop.f32.mrb[0].mxu0
    %v868 = vadd.f32 0.0, %v867
    %v869 = vpop.f32.mrb[0].mxu0
    %v870 = vadd.f32 0.0, %v869
    %871 = vdwg.mxu0
    %v872 = vadd.f32 %v503, %v730
    %v873 = vadd.f32 %v505, %v732
    %v874 = vadd.f32 %v509, %v736
    %v875 = vadd.f32 %v511, %v738
    %v876 = vadd.f32 %v515, %v742
    %v877 = vadd.f32 %v517, %v744
    %v878 = vadd.f32 %v521, %v748
    %v879 = vadd.f32 %v523, %v750
    %v880 = vadd.f32 %v527, %v754
    %v881 = vadd.f32 %v529, %v756
    %v882 = vadd.f32 %v533, %v760
    %v883 = vadd.f32 %v535, %v762
    %v884 = vadd.f32 %v539, %v766
    %v885 = vadd.f32 %v541, %v768
    %v886 = vadd.f32 %v545, %v772
    %v887 = vadd.f32 %v547, %v774
    %v888 = vadd.f32 %v551, %v778
    %v889 = vadd.f32 %v553, %v780
    %v890 = vadd.f32 %v557, %v784
    %v891 = vadd.f32 %v559, %v786
    %v892 = vadd.f32 %v563, %v790
    %v893 = vadd.f32 %v565, %v792
    %v894 = vadd.f32 %v569, %v796
    %v895 = vadd.f32 %v571, %v798
    %v896 = vadd.f32 %v575, %v802
    %v897 = vadd.f32 %v577, %v804
    %v898 = vadd.f32 %v581, %v808
    %v899 = vadd.f32 %v583, %v810
    %v900 = vadd.f32 %v587, %v814
    %v901 = vadd.f32 %v589, %v816
    %v902 = vadd.f32 %v593, %v820
    %v903 = vadd.f32 %v595, %v822
    %v904 = vadd.f32 %v599, %v826
    %v905 = vadd.f32 %v601, %v828
    %v906 = vadd.f32 %v605, %v832
    %v907 = vadd.f32 %v607, %v834
    %v908 = vadd.f32 %v611, %v838
    %v909 = vadd.f32 %v613, %v840
    %v910 = vadd.f32 %v617, %v844
    %v911 = vadd.f32 %v619, %v846
    %v912 = vadd.f32 %v623, %v850
    %v913 = vadd.f32 %v625, %v852
    %v914 = vadd.f32 %v629, %v856
    %v915 = vadd.f32 %v631, %v858
    %v916 = vadd.f32 %v635, %v862
    %v917 = vadd.f32 %v637, %v864
    %v918 = vadd.f32 %v641, %v868
    %v919 = vadd.f32 %v643, %v870
    %s920 = scalar_lea.vmem %s1, 192
    %v921 = vld [vmem:[%s920] sm:$0xff]
    %v922 = vld [vmem:[%s920 + $0x8] sm:$0xff]
    %v923 = vld [vmem:[%s920 + $0x10] sm:$0xff]
    %v924 = vld [vmem:[%s920 + $0x18] sm:$0xff]
    %v925 = vld [vmem:[%s920 + $0x20] sm:$0xff]
    %v926 = vld [vmem:[%s920 + $0x28] sm:$0xff]
    %v927 = vld [vmem:[%s920 + $0x30] sm:$0xf]
    %v928 = vld [vmem:[%s920 + $0x38] sm:$0xf]
    %v930 = vsel %vm138, %v119, 0
    %v933 = vsel %vm211, %v927, 0
    %v936 = vsel %vm211, %v928, 0
    %938 = vmatprep.subr.mxu0 %v922
    %939 = vmatpush1.msra.mxu0 %v921
    %940 = vmatprep.subr.mxu0 %v924
    %941 = vmatpush1.msra.mxu0 %v923
    %942 = vmatprep.subr.mxu0 %v926
    %943 = vmatpush1.msra.mxu0 %v925
    %944 = vmatprep.subr.mxu0 %v936
    %945 = vmatpush1.msra.mxu0 %v933
    %946 = vmatprep.subr.mxu0 0.0
    %947 = vmatpush1.msra.mxu0 0.0
    %948 = vmatprep.subr.mxu0 0.0
    %949 = vmatpush1.msra.mxu0 0.0
    %950 = vmatprep.subr.mxu0 0.0
    %951 = vmatpush1.msra.mxu0 0.0
    %952 = vmatprep.subr.mxu0 0.0
    %953 = vmatpush1.msra.mxu0 0.0
    %954 = vmatprep.subr.mxu0 0.0
    %955 = vmatpush1.msra.mxu0 0.0
    %956 = vmatprep.subr.mxu0 0.0
    %957 = vmatpush1.msra.mxu0 0.0
    %958 = vmatprep.subr.mxu0 0.0
    %959 = vmatpush1.msra.mxu0 0.0
    %960 = vmatprep.subr.mxu0 0.0
    %961 = vmatpush1.msra.mxu0 0.0
    %962 = vmatprep.subr.mxu0 0.0
    %963 = vmatpush1.msra.mxu0 0.0
    %964 = vmatprep.subr.mxu0 0.0
    %965 = vmatpush1.msra.mxu0 0.0
    %966 = vmatprep.subr.mxu0 0.0
    %967 = vmatpush1.msra.mxu0 0.0
    %968 = vmatprep.subr.mxu0 0.0
    %969 = vmatpush1.msra.mxu0 0.0
    %970 = vmatprep.subr.mxu0 0.0
    %971 = vmatpush1.msra.mxu0 0.0
    %972 = vmatprep.subr.mxu0 0.0
    %973 = vmatpush1.msra.mxu0 0.0
    %974 = vmatprep.subr.mxu0 0.0
    %975 = vmatpush1.msra.mxu0 0.0
    %976 = vmatprep.subr.mxu0 0.0
    %977 = vmatpush1.msra.mxu0 0.0
    %978 = vmatprep.subr.mxu0 0.0
    %979 = vmatpush1.msra.mxu0 0.0
    %980 = vmatprep.subr.mxu0 0.0
    %981 = vmatpush1.msra.mxu0 0.0
    %982 = vmatprep.subr.mxu0 0.0
    %983 = vmatpush1.msra.mxu0 0.0
    %984 = vmatprep.subr.mxu0 0.0
    %985 = vmatpush1.msra.mxu0 0.0
    %986 = vmatprep.subr.mxu0 0.0
    %987 = vmatpush1.msra.mxu0 0.0
    %988 = vmatprep.subr.mxu0 0.0
    %989 = vmatpush1.msra.mxu0 0.0
    %990 = vmatprep.subr.mxu0 0.0
    %991 = vmatpush1.msra.mxu0 0.0
    %992 = vmatprep.subr.mxu0 0.0
    %993 = vmatpush1.msra.mxu0 0.0
    %994 = vmatprep.subr.mxu0 0.0
    %995 = vmatpush1.msra.mxu0 0.0
    %996 = vmatprep.subr.mxu0 0.0
    %997 = vmatpush1.msra.mxu0 0.0
    %998 = vmatprep.subr.mxu0 0.0
    %999 = vmatpush1.msra.mxu0 0.0
    %1000 = vmatprep.subr.mxu0 0.0
    %1001 = vmatpush1.msra.mxu0 0.0
    %1002 = vmatprep.mubr.f32.mxu0 0.0
    %1003 = vmatmul.mubr.f32.gmra.mrb[0].mxu0 %v146
    %v1004 = vpop.f32.mrb[0].mxu0
    %v1005 = vadd.f32 0.0, %v1004
    %v1006 = vpop.f32.mrb[0].mxu0
    %v1007 = vadd.f32 0.0, %v1006
    %1008 = vmatprep.mubr.f32.mxu0 0.0
    %1009 = vmatmul.mubr.f32.gmra.mrb[0].mxu0 %v149
    %v1010 = vpop.f32.mrb[0].mxu0
    %v1011 = vadd.f32 0.0, %v1010
    %v1012 = vpop.f32.mrb[0].mxu0
    %v1013 = vadd.f32 0.0, %v1012
    %1014 = vmatprep.mubr.f32.mxu0 0.0
    %1015 = vmatmul.mubr.f32.gmra.mrb[0].mxu0 %v152
    %v1016 = vpop.f32.mrb[0].mxu0
    %v1017 = vadd.f32 0.0, %v1016
    %v1018 = vpop.f32.mrb[0].mxu0
    %v1019 = vadd.f32 0.0, %v1018
    %1020 = vmatprep.mubr.f32.mxu0 0.0
    %1021 = vmatmul.mubr.f32.gmra.mrb[0].mxu0 %v155
    %v1022 = vpop.f32.mrb[0].mxu0
    %v1023 = vadd.f32 0.0, %v1022
    %v1024 = vpop.f32.mrb[0].mxu0
    %v1025 = vadd.f32 0.0, %v1024
    %1026 = vmatprep.mubr.f32.mxu0 0.0
    %1027 = vmatmul.mubr.f32.gmra.mrb[0].mxu0 %v158
    %v1028 = vpop.f32.mrb[0].mxu0
    %v1029 = vadd.f32 0.0, %v1028
    %v1030 = vpop.f32.mrb[0].mxu0
    %v1031 = vadd.f32 0.0, %v1030
    %1032 = vmatprep.mubr.f32.mxu0 0.0
    %1033 = vmatmul.mubr.f32.gmra.mrb[0].mxu0 %v161
    %v1034 = vpop.f32.mrb[0].mxu0
    %v1035 = vadd.f32 0.0, %v1034
    %v1036 = vpop.f32.mrb[0].mxu0
    %v1037 = vadd.f32 0.0, %v1036
    %1038 = vmatprep.mubr.f32.mxu0 0.0
    %1039 = vmatmul.mubr.f32.gmra.mrb[0].mxu0 %v164
    %v1040 = vpop.f32.mrb[0].mxu0
    %v1041 = vadd.f32 0.0, %v1040
    %v1042 = vpop.f32.mrb[0].mxu0
    %v1043 = vadd.f32 0.0, %v1042
    %1044 = vmatprep.mubr.f32.mxu0 0.0
    %1045 = vmatmul.mubr.f32.gmra.mrb[0].mxu0 %v167
    %v1046 = vpop.f32.mrb[0].mxu0
    %v1047 = vadd.f32 0.0, %v1046
    %v1048 = vpop.f32.mrb[0].mxu0
    %v1049 = vadd.f32 0.0, %v1048
    %1050 = vmatprep.mubr.f32.mxu0 0.0
    %1051 = vmatmul.mubr.f32.gmra.mrb[0].mxu0 %v170
    %v1052 = vpop.f32.mrb[0].mxu0
    %v1053 = vadd.f32 0.0, %v1052
    %v1054 = vpop.f32.mrb[0].mxu0
    %v1055 = vadd.f32 0.0, %v1054
    %1056 = vmatprep.mubr.f32.mxu0 0.0
    %1057 = vmatmul.mubr.f32.gmra.mrb[0].mxu0 %v173
    %v1058 = vpop.f32.mrb[0].mxu0
    %v1059 = vadd.f32 0.0, %v1058
    %v1060 = vpop.f32.mrb[0].mxu0
    %v1061 = vadd.f32 0.0, %v1060
    %1062 = vmatprep.mubr.f32.mxu0 0.0
    %1063 = vmatmul.mubr.f32.gmra.mrb[0].mxu0 %v176
    %v1064 = vpop.f32.mrb[0].mxu0
    %v1065 = vadd.f32 0.0, %v1064
    %v1066 = vpop.f32.mrb[0].mxu0
    %v1067 = vadd.f32 0.0, %v1066
    %1068 = vmatprep.mubr.f32.mxu0 0.0
    %1069 = vmatmul.mubr.f32.gmra.mrb[0].mxu0 %v179
    %v1070 = vpop.f32.mrb[0].mxu0
    %v1071 = vadd.f32 0.0, %v1070
    %v1072 = vpop.f32.mrb[0].mxu0
    %v1073 = vadd.f32 0.0, %v1072
    %1074 = vmatprep.mubr.f32.mxu0 0.0
    %1075 = vmatmul.mubr.f32.gmra.mrb[0].mxu0 %v182
    %v1076 = vpop.f32.mrb[0].mxu0
    %v1077 = vadd.f32 0.0, %v1076
    %v1078 = vpop.f32.mrb[0].mxu0
    %v1079 = vadd.f32 0.0, %v1078
    %1080 = vmatprep.mubr.f32.mxu0 0.0
    %1081 = vmatmul.mubr.f32.gmra.mrb[0].mxu0 %v185
    %v1082 = vpop.f32.mrb[0].mxu0
    %v1083 = vadd.f32 0.0, %v1082
    %v1084 = vpop.f32.mrb[0].mxu0
    %v1085 = vadd.f32 0.0, %v1084
    %1086 = vmatprep.mubr.f32.mxu0 0.0
    %1087 = vmatmul.mubr.f32.gmra.mrb[0].mxu0 %v188
    %v1088 = vpop.f32.mrb[0].mxu0
    %v1089 = vadd.f32 0.0, %v1088
    %v1090 = vpop.f32.mrb[0].mxu0
    %v1091 = vadd.f32 0.0, %v1090
    %1092 = vmatprep.mubr.f32.mxu0 0.0
    %1093 = vmatmul.mubr.f32.gmra.mrb[0].mxu0 %v191
    %v1094 = vpop.f32.mrb[0].mxu0
    %v1095 = vadd.f32 0.0, %v1094
    %v1096 = vpop.f32.mrb[0].mxu0
    %v1097 = vadd.f32 0.0, %v1096
    %1098 = vmatprep.mubr.f32.mxu0 0.0
    %1099 = vmatmul.mubr.f32.gmra.mrb[0].mxu0 %v194
    %v1100 = vpop.f32.mrb[0].mxu0
    %v1101 = vadd.f32 0.0, %v1100
    %v1102 = vpop.f32.mrb[0].mxu0
    %v1103 = vadd.f32 0.0, %v1102
    %1104 = vmatprep.mubr.f32.mxu0 0.0
    %1105 = vmatmul.mubr.f32.gmra.mrb[0].mxu0 %v197
    %v1106 = vpop.f32.mrb[0].mxu0
    %v1107 = vadd.f32 0.0, %v1106
    %v1108 = vpop.f32.mrb[0].mxu0
    %v1109 = vadd.f32 0.0, %v1108
    %1110 = vmatprep.mubr.f32.mxu0 0.0
    %1111 = vmatmul.mubr.f32.gmra.mrb[0].mxu0 %v200
    %v1112 = vpop.f32.mrb[0].mxu0
    %v1113 = vadd.f32 0.0, %v1112
    %v1114 = vpop.f32.mrb[0].mxu0
    %v1115 = vadd.f32 0.0, %v1114
    %1116 = vmatprep.mubr.f32.mxu0 0.0
    %1117 = vmatmul.mubr.f32.gmra.mrb[0].mxu0 %v203
    %v1118 = vpop.f32.mrb[0].mxu0
    %v1119 = vadd.f32 0.0, %v1118
    %v1120 = vpop.f32.mrb[0].mxu0
    %v1121 = vadd.f32 0.0, %v1120
    %1122 = vmatprep.mubr.f32.mxu0 0.0
    %1123 = vmatmul.mubr.f32.gmra.mrb[0].mxu0 %v206
    %v1124 = vpop.f32.mrb[0].mxu0
    %v1125 = vadd.f32 0.0, %v1124
    %v1126 = vpop.f32.mrb[0].mxu0
    %v1127 = vadd.f32 0.0, %v1126
    %1128 = vmatprep.mubr.f32.mxu0 0.0
    %1129 = vmatmul.mubr.f32.gmra.mrb[0].mxu0 %v209
    %v1130 = vpop.f32.mrb[0].mxu0
    %v1131 = vadd.f32 0.0, %v1130
    %v1132 = vpop.f32.mrb[0].mxu0
    %v1133 = vadd.f32 0.0, %v1132
    %1134 = vmatprep.mubr.f32.mxu0 0.0
    %1135 = vmatmul.mubr.f32.gmra.mrb[0].mxu0 %v655
    %v1136 = vpop.f32.mrb[0].mxu0
    %v1137 = vadd.f32 0.0, %v1136
    %v1138 = vpop.f32.mrb[0].mxu0
    %v1139 = vadd.f32 0.0, %v1138
    %1140 = vmatprep.mubr.f32.mxu0 0.0
    %1141 = vmatmul.mubr.f32.gmra.mrb[0].mxu0 %v930
    %v1142 = vpop.f32.mrb[0].mxu0
    %v1143 = vadd.f32 0.0, %v1142
    %v1144 = vpop.f32.mrb[0].mxu0
    %v1145 = vadd.f32 0.0, %v1144
    %1146 = vdwg.mxu0
    %v1147 = vadd.f32 %v872, %v1005
    %v1148 = vadd.f32 %v873, %v1007
    %v1149 = vadd.f32 %v874, %v1011
    %v1150 = vadd.f32 %v875, %v1013
    %v1151 = vadd.f32 %v876, %v1017
    %v1152 = vadd.f32 %v877, %v1019
    %v1153 = vadd.f32 %v878, %v1023
    %v1154 = vadd.f32 %v879, %v1025
    %v1155 = vadd.f32 %v880, %v1029
    %v1156 = vadd.f32 %v881, %v1031
    %v1157 = vadd.f32 %v882, %v1035
    %v1158 = vadd.f32 %v883, %v1037
    %v1159 = vadd.f32 %v884, %v1041
    %v1160 = vadd.f32 %v885, %v1043
    %v1161 = vadd.f32 %v886, %v1047
    %v1162 = vadd.f32 %v887, %v1049
    %v1163 = vadd.f32 %v888, %v1053
    %v1164 = vadd.f32 %v889, %v1055
    %v1165 = vadd.f32 %v890, %v1059
    %v1166 = vadd.f32 %v891, %v1061
    %v1167 = vadd.f32 %v892, %v1065
    %v1168 = vadd.f32 %v893, %v1067
    %v1169 = vadd.f32 %v894, %v1071
    %v1170 = vadd.f32 %v895, %v1073
    %v1171 = vadd.f32 %v896, %v1077
    %v1172 = vadd.f32 %v897, %v1079
    %v1173 = vadd.f32 %v898, %v1083
    %v1174 = vadd.f32 %v899, %v1085
    %v1175 = vadd.f32 %v900, %v1089
    %v1176 = vadd.f32 %v901, %v1091
    %v1177 = vadd.f32 %v902, %v1095
    %v1178 = vadd.f32 %v903, %v1097
    %v1179 = vadd.f32 %v904, %v1101
    %v1180 = vadd.f32 %v905, %v1103
    %v1181 = vadd.f32 %v906, %v1107
    %v1182 = vadd.f32 %v907, %v1109
    %v1183 = vadd.f32 %v908, %v1113
    %v1184 = vadd.f32 %v909, %v1115
    %v1185 = vadd.f32 %v910, %v1119
    %v1186 = vadd.f32 %v911, %v1121
    %v1187 = vadd.f32 %v912, %v1125
    %v1188 = vadd.f32 %v913, %v1127
    %v1189 = vadd.f32 %v914, %v1131
    %v1190 = vadd.f32 %v915, %v1133
    %v1191 = vadd.f32 %v916, %v1137
    %v1192 = vadd.f32 %v917, %v1139
    %v1193 = vadd.f32 %v918, %v1143
    %v1194 = vadd.f32 %v919, %v1145
    %s1195 = scalar_lea.vmem %s1, 256
    %v1196 = vld [vmem:[%s1195] sm:$0xff]
    %v1197 = vld [vmem:[%s1195 + $0x8] sm:$0xff]
    %v1198 = vld [vmem:[%s1195 + $0x10] sm:$0xff]
    %v1199 = vld [vmem:[%s1195 + $0x18] sm:$0xff]
    %v1200 = vld [vmem:[%s1195 + $0x20] sm:$0xff]
    %v1201 = vld [vmem:[%s1195 + $0x28] sm:$0xff]
    %v1202 = vld [vmem:[%s1195 + $0x30] sm:$0xf]
    %v1203 = vld [vmem:[%s1195 + $0x38] sm:$0xf]
    %v1205 = vsel %vm138, %v120, 0
    %v1208 = vsel %vm211, %v1202, 0
    %v1211 = vsel %vm211, %v1203, 0
    %1213 = vmatprep.subr.mxu0 %v1197
    %1214 = vmatpush1.msra.mxu0 %v1196
    %1215 = vmatprep.subr.mxu0 %v1199
    %1216 = vmatpush1.msra.mxu0 %v1198
    %1217 = vmatprep.subr.mxu0 %v1201
    %1218 = vmatpush1.msra.mxu0 %v1200
    %1219 = vmatprep.subr.mxu0 %v1211
    %1220 = vmatpush1.msra.mxu0 %v1208
    %1221 = vmatprep.subr.mxu0 0.0
    %1222 = vmatpush1.msra.mxu0 0.0
    %1223 = vmatprep.subr.mxu0 0.0
    %1224 = vmatpush1.msra.mxu0 0.0
    %1225 = vmatprep.subr.mxu0 0.0
    %1226 = vmatpush1.msra.mxu0 0.0
    %1227 = vmatprep.subr.mxu0 0.0
    %1228 = vmatpush1.msra.mxu0 0.0
    %1229 = vmatprep.subr.mxu0 0.0
    %1230 = vmatpush1.msra.mxu0 0.0
    %1231 = vmatprep.subr.mxu0 0.0
    %1232 = vmatpush1.msra.mxu0 0.0
    %1233 = vmatprep.subr.mxu0 0.0
    %1234 = vmatpush1.msra.mxu0 0.0
    %1235 = vmatprep.subr.mxu0 0.0
    %1236 = vmatpush1.msra.mxu0 0.0
    %1237 = vmatprep.subr.mxu0 0.0
    %1238 = vmatpush1.msra.mxu0 0.0
    %1239 = vmatprep.subr.mxu0 0.0
    %1240 = vmatpush1.msra.mxu0 0.0
    %1241 = vmatprep.subr.mxu0 0.0
    %1242 = vmatpush1.msra.mxu0 0.0
    %1243 = vmatprep.subr.mxu0 0.0
    %1244 = vmatpush1.msra.mxu0 0.0
    %1245 = vmatprep.subr.mxu0 0.0
    %1246 = vmatpush1.msra.mxu0 0.0
    %1247 = vmatprep.subr.mxu0 0.0
    %1248 = vmatpush1.msra.mxu0 0.0
    %1249 = vmatprep.subr.mxu0 0.0
    %1250 = vmatpush1.msra.mxu0 0.0
    %1251 = vmatprep.subr.mxu0 0.0
    %1252 = vmatpush1.msra.mxu0 0.0
    %1253 = vmatprep.subr.mxu0 0.0
    %1254 = vmatpush1.msra.mxu0 0.0
    %1255 = vmatprep.subr.mxu0 0.0
    %1256 = vmatpush1.msra.mxu0 0.0
    %1257 = vmatprep.subr.mxu0 0.0
    %1258 = vmatpush1.msra.mxu0 0.0
    %1259 = vmatprep.subr.mxu0 0.0
    %1260 = vmatpush1.msra.mxu0 0.0
    %1261 = vmatprep.subr.mxu0 0.0
    %1262 = vmatpush1.msra.mxu0 0.0
    %1263 = vmatprep.subr.mxu0 0.0
    %1264 = vmatpush1.msra.mxu0 0.0
    %1265 = vmatprep.subr.mxu0 0.0
    %1266 = vmatpush1.msra.mxu0 0.0
    %1267 = vmatprep.subr.mxu0 0.0
    %1268 = vmatpush1.msra.mxu0 0.0
    %1269 = vmatprep.subr.mxu0 0.0
    %1270 = vmatpush1.msra.mxu0 0.0
    %1271 = vmatprep.subr.mxu0 0.0
    %1272 = vmatpush1.msra.mxu0 0.0
    %1273 = vmatprep.subr.mxu0 0.0
    %1274 = vmatpush1.msra.mxu0 0.0
    %1275 = vmatprep.subr.mxu0 0.0
    %1276 = vmatpush1.msra.mxu0 0.0
    %1277 = vmatprep.mubr.f32.mxu0 0.0
    %1278 = vmatmul.mubr.f32.gmra.mrb[0].mxu0 %v149
    %v1279 = vpop.f32.mrb[0].mxu0
    %v1280 = vadd.f32 0.0, %v1279
    %v1281 = vpop.f32.mrb[0].mxu0
    %v1282 = vadd.f32 0.0, %v1281
    %1283 = vmatprep.mubr.f32.mxu0 0.0
    %1284 = vmatmul.mubr.f32.gmra.mrb[0].mxu0 %v152
    %v1285 = vpop.f32.mrb[0].mxu0
    %v1286 = vadd.f32 0.0, %v1285
    %v1287 = vpop.f32.mrb[0].mxu0
    %v1288 = vadd.f32 0.0, %v1287
    %1289 = vmatprep.mubr.f32.mxu0 0.0
    %1290 = vmatmul.mubr.f32.gmra.mrb[0].mxu0 %v155
    %v1291 = vpop.f32.mrb[0].mxu0
    %v1292 = vadd.f32 0.0, %v1291
    %v1293 = vpop.f32.mrb[0].mxu0
    %v1294 = vadd.f32 0.0, %v1293
    %1295 = vmatprep.mubr.f32.mxu0 0.0
    %1296 = vmatmul.mubr.f32.gmra.mrb[0].mxu0 %v158
    %v1297 = vpop.f32.mrb[0].mxu0
    %v1298 = vadd.f32 0.0, %v1297
    %v1299 = vpop.f32.mrb[0].mxu0
    %v1300 = vadd.f32 0.0, %v1299
    %1301 = vmatprep.mubr.f32.mxu0 0.0
    %1302 = vmatmul.mubr.f32.gmra.mrb[0].mxu0 %v161
    %v1303 = vpop.f32.mrb[0].mxu0
    %v1304 = vadd.f32 0.0, %v1303
    %v1305 = vpop.f32.mrb[0].mxu0
    %v1306 = vadd.f32 0.0, %v1305
    %1307 = vmatprep.mubr.f32.mxu0 0.0
    %1308 = vmatmul.mubr.f32.gmra.mrb[0].mxu0 %v164
    %v1309 = vpop.f32.mrb[0].mxu0
    %v1310 = vadd.f32 0.0, %v1309
    %v1311 = vpop.f32.mrb[0].mxu0
    %v1312 = vadd.f32 0.0, %v1311
    %1313 = vmatprep.mubr.f32.mxu0 0.0
    %1314 = vmatmul.mubr.f32.gmra.mrb[0].mxu0 %v167
    %v1315 = vpop.f32.mrb[0].mxu0
    %v1316 = vadd.f32 0.0, %v1315
    %v1317 = vpop.f32.mrb[0].mxu0
    %v1318 = vadd.f32 0.0, %v1317
    %1319 = vmatprep.mubr.f32.mxu0 0.0
    %1320 = vmatmul.mubr.f32.gmra.mrb[0].mxu0 %v170
    %v1321 = vpop.f32.mrb[0].mxu0
    %v1322 = vadd.f32 0.0, %v1321
    %v1323 = vpop.f32.mrb[0].mxu0
    %v1324 = vadd.f32 0.0, %v1323
    %1325 = vmatprep.mubr.f32.mxu0 0.0
    %1326 = vmatmul.mubr.f32.gmra.mrb[0].mxu0 %v173
    %v1327 = vpop.f32.mrb[0].mxu0
    %v1328 = vadd.f32 0.0, %v1327
    %v1329 = vpop.f32.mrb[0].mxu0
    %v1330 = vadd.f32 0.0, %v1329
    %1331 = vmatprep.mubr.f32.mxu0 0.0
    %1332 = vmatmul.mubr.f32.gmra.mrb[0].mxu0 %v176
    %v1333 = vpop.f32.mrb[0].mxu0
    %v1334 = vadd.f32 0.0, %v1333
    %v1335 = vpop.f32.mrb[0].mxu0
    %v1336 = vadd.f32 0.0, %v1335
    %1337 = vmatprep.mubr.f32.mxu0 0.0
    %1338 = vmatmul.mubr.f32.gmra.mrb[0].mxu0 %v179
    %v1339 = vpop.f32.mrb[0].mxu0
    %v1340 = vadd.f32 0.0, %v1339
    %v1341 = vpop.f32.mrb[0].mxu0
    %v1342 = vadd.f32 0.0, %v1341
    %1343 = vmatprep.mubr.f32.mxu0 0.0
    %1344 = vmatmul.mubr.f32.gmra.mrb[0].mxu0 %v182
    %v1345 = vpop.f32.mrb[0].mxu0
    %v1346 = vadd.f32 0.0, %v1345
    %v1347 = vpop.f32.mrb[0].mxu0
    %v1348 = vadd.f32 0.0, %v1347
    %1349 = vmatprep.mubr.f32.mxu0 0.0
    %1350 = vmatmul.mubr.f32.gmra.mrb[0].mxu0 %v185
    %v1351 = vpop.f32.mrb[0].mxu0
    %v1352 = vadd.f32 0.0, %v1351
    %v1353 = vpop.f32.mrb[0].mxu0
    %v1354 = vadd.f32 0.0, %v1353
    %1355 = vmatprep.mubr.f32.mxu0 0.0
    %1356 = vmatmul.mubr.f32.gmra.mrb[0].mxu0 %v188
    %v1357 = vpop.f32.mrb[0].mxu0
    %v1358 = vadd.f32 0.0, %v1357
    %v1359 = vpop.f32.mrb[0].mxu0
    %v1360 = vadd.f32 0.0, %v1359
    %1361 = vmatprep.mubr.f32.mxu0 0.0
    %1362 = vmatmul.mubr.f32.gmra.mrb[0].mxu0 %v191
    %v1363 = vpop.f32.mrb[0].mxu0
    %v1364 = vadd.f32 0.0, %v1363
    %v1365 = vpop.f32.mrb[0].mxu0
    %v1366 = vadd.f32 0.0, %v1365
    %1367 = vmatprep.mubr.f32.mxu0 0.0
    %1368 = vmatmul.mubr.f32.gmra.mrb[0].mxu0 %v194
    %v1369 = vpop.f32.mrb[0].mxu0
    %v1370 = vadd.f32 0.0, %v1369
    %v1371 = vpop.f32.mrb[0].mxu0
    %v1372 = vadd.f32 0.0, %v1371
    %1373 = vmatprep.mubr.f32.mxu0 0.0
    %1374 = vmatmul.mubr.f32.gmra.mrb[0].mxu0 %v197
    %v1375 = vpop.f32.mrb[0].mxu0
    %v1376 = vadd.f32 0.0, %v1375
    %v1377 = vpop.f32.mrb[0].mxu0
    %v1378 = vadd.f32 0.0, %v1377
    %1379 = vmatprep.mubr.f32.mxu0 0.0
    %1380 = vmatmul.mubr.f32.gmra.mrb[0].mxu0 %v200
    %v1381 = vpop.f32.mrb[0].mxu0
    %v1382 = vadd.f32 0.0, %v1381
    %v1383 = vpop.f32.mrb[0].mxu0
    %v1384 = vadd.f32 0.0, %v1383
    %1385 = vmatprep.mubr.f32.mxu0 0.0
    %1386 = vmatmul.mubr.f32.gmra.mrb[0].mxu0 %v203
    %v1387 = vpop.f32.mrb[0].mxu0
    %v1388 = vadd.f32 0.0, %v1387
    %v1389 = vpop.f32.mrb[0].mxu0
    %v1390 = vadd.f32 0.0, %v1389
    %1391 = vmatprep.mubr.f32.mxu0 0.0
    %1392 = vmatmul.mubr.f32.gmra.mrb[0].mxu0 %v206
    %v1393 = vpop.f32.mrb[0].mxu0
    %v1394 = vadd.f32 0.0, %v1393
    %v1395 = vpop.f32.mrb[0].mxu0
    %v1396 = vadd.f32 0.0, %v1395
    %1397 = vmatprep.mubr.f32.mxu0 0.0
    %1398 = vmatmul.mubr.f32.gmra.mrb[0].mxu0 %v209
    %v1399 = vpop.f32.mrb[0].mxu0
    %v1400 = vadd.f32 0.0, %v1399
    %v1401 = vpop.f32.mrb[0].mxu0
    %v1402 = vadd.f32 0.0, %v1401
    %1403 = vmatprep.mubr.f32.mxu0 0.0
    %1404 = vmatmul.mubr.f32.gmra.mrb[0].mxu0 %v655
    %v1405 = vpop.f32.mrb[0].mxu0
    %v1406 = vadd.f32 0.0, %v1405
    %v1407 = vpop.f32.mrb[0].mxu0
    %v1408 = vadd.f32 0.0, %v1407
    %1409 = vmatprep.mubr.f32.mxu0 0.0
    %1410 = vmatmul.mubr.f32.gmra.mrb[0].mxu0 %v930
    %v1411 = vpop.f32.mrb[0].mxu0
    %v1412 = vadd.f32 0.0, %v1411
    %v1413 = vpop.f32.mrb[0].mxu0
    %v1414 = vadd.f32 0.0, %v1413
    %1415 = vmatprep.mubr.f32.mxu0 0.0
    %1416 = vmatmul.mubr.f32.gmra.mrb[0].mxu0 %v1205
    %v1417 = vpop.f32.mrb[0].mxu0
    %v1418 = vadd.f32 0.0, %v1417
    %v1419 = vpop.f32.mrb[0].mxu0
    %v1420 = vadd.f32 0.0, %v1419
    %1421 = vdwg.mxu0
    %v1422 = vadd.f32 %v1147, %v1280
    %v1423 = vadd.f32 %v1148, %v1282
    %v1424 = vadd.f32 %v1149, %v1286
    %v1425 = vadd.f32 %v1150, %v1288
    %v1426 = vadd.f32 %v1151, %v1292
    %v1427 = vadd.f32 %v1152, %v1294
    %v1428 = vadd.f32 %v1153, %v1298
    %v1429 = vadd.f32 %v1154, %v1300
    %v1430 = vadd.f32 %v1155, %v1304
    %v1431 = vadd.f32 %v1156, %v1306
    %v1432 = vadd.f32 %v1157, %v1310
    %v1433 = vadd.f32 %v1158, %v1312
    %v1434 = vadd.f32 %v1159, %v1316
    %v1435 = vadd.f32 %v1160, %v1318
    %v1436 = vadd.f32 %v1161, %v1322
    %v1437 = vadd.f32 %v1162, %v1324
    %v1438 = vadd.f32 %v1163, %v1328
    %v1439 = vadd.f32 %v1164, %v1330
    %v1440 = vadd.f32 %v1165, %v1334
    %v1441 = vadd.f32 %v1166, %v1336
    %v1442 = vadd.f32 %v1167, %v1340
    %v1443 = vadd.f32 %v1168, %v1342
    %v1444 = vadd.f32 %v1169, %v1346
    %v1445 = vadd.f32 %v1170, %v1348
    %v1446 = vadd.f32 %v1171, %v1352
    %v1447 = vadd.f32 %v1172, %v1354
    %v1448 = vadd.f32 %v1173, %v1358
    %v1449 = vadd.f32 %v1174, %v1360
    %v1450 = vadd.f32 %v1175, %v1364
    %v1451 = vadd.f32 %v1176, %v1366
    %v1452 = vadd.f32 %v1177, %v1370
    %v1453 = vadd.f32 %v1178, %v1372
    %v1454 = vadd.f32 %v1179, %v1376
    %v1455 = vadd.f32 %v1180, %v1378
    %v1456 = vadd.f32 %v1181, %v1382
    %v1457 = vadd.f32 %v1182, %v1384
    %v1458 = vadd.f32 %v1183, %v1388
    %v1459 = vadd.f32 %v1184, %v1390
    %v1460 = vadd.f32 %v1185, %v1394
    %v1461 = vadd.f32 %v1186, %v1396
    %v1462 = vadd.f32 %v1187, %v1400
    %v1463 = vadd.f32 %v1188, %v1402
    %v1464 = vadd.f32 %v1189, %v1406
    %v1465 = vadd.f32 %v1190, %v1408
    %v1466 = vadd.f32 %v1191, %v1412
    %v1467 = vadd.f32 %v1192, %v1414
    %v1468 = vadd.f32 %v1193, %v1418
    %v1469 = vadd.f32 %v1194, %v1420
    %v1470 = vmax.f32 %v1422, %v1423
    %v1471 = vmax.f32 %v1424, %v1425
    %v1472 = vmax.f32 %v1426, %v1427
    %v1473 = vmax.f32 %v1428, %v1429
    %v1474 = vmax.f32 %v1430, %v1431
    %v1475 = vmax.f32 %v1432, %v1433
    %v1476 = vmax.f32 %v1434, %v1435
    %v1477 = vmax.f32 %v1436, %v1437
    %v1478 = vmax.f32 %v1438, %v1439
    %v1479 = vmax.f32 %v1440, %v1441
    %v1480 = vmax.f32 %v1442, %v1443
    %v1481 = vmax.f32 %v1444, %v1445
    %v1482 = vmax.f32 %v1446, %v1447
    %v1483 = vmax.f32 %v1448, %v1449
    %v1484 = vmax.f32 %v1450, %v1451
    %v1485 = vmax.f32 %v1452, %v1453
    %v1486 = vmax.f32 %v1454, %v1455
    %v1487 = vmax.f32 %v1456, %v1457
    %v1488 = vmax.f32 %v1458, %v1459
    %v1489 = vmax.f32 %v1460, %v1461
    %v1490 = vmax.f32 %v1462, %v1463
    %v1491 = vmax.f32 %v1464, %v1465
    %v1492 = vmax.f32 %v1466, %v1467
    %v1493 = vmax.f32 %v1468, %v1469
    %v1494 = vld [vmem:[%s2] sm:$0x1]
    %v1496 = vlaneseq
    %v1497 = vshrl.u32 %v1496, 7
    %v1498 = vsub.s32 0, %v1497
    %v1499 = vrot.slane %v1494, %v1498
    %v1501 = vadd.f32 %v1470, %v1499
    %v1502 = vadd.f32 %v1471, %v1499
    %v1503 = vadd.f32 %v1472, %v1499
    %v1504 = vadd.f32 %v1473, %v1499
    %v1505 = vadd.f32 %v1474, %v1499
    %v1506 = vadd.f32 %v1475, %v1499
    %v1507 = vadd.f32 %v1476, %v1499
    %v1508 = vadd.f32 %v1477, %v1499
    %v1509 = vadd.f32 %v1478, %v1499
    %v1510 = vadd.f32 %v1479, %v1499
    %v1511 = vadd.f32 %v1480, %v1499
    %v1512 = vadd.f32 %v1481, %v1499
    %v1513 = vadd.f32 %v1482, %v1499
    %v1514 = vadd.f32 %v1483, %v1499
    %v1515 = vadd.f32 %v1484, %v1499
    %v1516 = vadd.f32 %v1485, %v1499
    %v1517 = vadd.f32 %v1486, %v1499
    %v1518 = vadd.f32 %v1487, %v1499
    %v1519 = vadd.f32 %v1488, %v1499
    %v1520 = vadd.f32 %v1489, %v1499
    %v1521 = vadd.f32 %v1490, %v1499
    %v1522 = vadd.f32 %v1491, %v1499
    %v1523 = vadd.f32 %v1492, %v1499
    %v1524 = vadd.f32 %v1493, %v1499
    %v1525 = vmax.f32 %v1501, 0.0
    %v1526 = vmax.f32 %v1502, 0.0
    %v1527 = vmax.f32 %v1503, 0.0
    %v1528 = vmax.f32 %v1504, 0.0
    %v1529 = vmax.f32 %v1505, 0.0
    %v1530 = vmax.f32 %v1506, 0.0
    %v1531 = vmax.f32 %v1507, 0.0
    %v1532 = vmax.f32 %v1508, 0.0
    %v1533 = vmax.f32 %v1509, 0.0
    %v1534 = vmax.f32 %v1510, 0.0
    %v1535 = vmax.f32 %v1511, 0.0
    %v1536 = vmax.f32 %v1512, 0.0
    %v1537 = vmax.f32 %v1513, 0.0
    %v1538 = vmax.f32 %v1514, 0.0
    %v1539 = vmax.f32 %v1515, 0.0
    %v1540 = vmax.f32 %v1516, 0.0
    %v1541 = vmax.f32 %v1517, 0.0
    %v1542 = vmax.f32 %v1518, 0.0
    %v1543 = vmax.f32 %v1519, 0.0
    %v1544 = vmax.f32 %v1520, 0.0
    %v1545 = vmax.f32 %v1521, 0.0
    %v1546 = vmax.f32 %v1522, 0.0
    %v1547 = vmax.f32 %v1523, 0.0
    %v1548 = vmax.f32 %v1524, 0.0
    %v1549 = vmax.f32 %v1525, %v1526
    %v1550 = vmax.f32 %v1527, %v1528
    %v1551 = vmax.f32 %v1529, %v1530
    %v1552 = vmax.f32 %v1531, %v1532
    %v1553 = vmax.f32 %v1533, %v1534
    %v1554 = vmax.f32 %v1535, %v1536
    %v1555 = vmax.f32 %v1537, %v1538
    %v1556 = vmax.f32 %v1539, %v1540
    %v1557 = vmax.f32 %v1541, %v1542
    %v1558 = vmax.f32 %v1543, %v1544
    %v1559 = vmax.f32 %v1545, %v1546
    %v1560 = vmax.f32 %v1547, %v1548
    %v1561 = vld [vmem:[#allocation2] sm:$0xff]
    %v1562 = vld [vmem:[#allocation2 + $0x8] sm:$0xff]
    %v1563 = vld [vmem:[#allocation2 + $0x10] sm:$0xff]
    %v1564 = vld [vmem:[#allocation2 + $0x18] sm:$0xff]
    %v1565 = vld [vmem:[#allocation2 + $0x20] sm:$0xff]
    %v1566 = vld [vmem:[#allocation2 + $0x28] sm:$0xff]
    %v1567 = vld [vmem:[#allocation2 + $0x30] sm:$0xff]
    %v1568 = vld [vmem:[#allocation2 + $0x38] sm:$0xff]
    %v1569 = vld [vmem:[#allocation2 + $0x40] sm:$0xff]
    %v1570 = vld [vmem:[#allocation2 + $0x48] sm:$0xff]
    %v1571 = vld [vmem:[#allocation2 + $0x50] sm:$0xff]
    %v1572 = vld [vmem:[#allocation2 + $0x58] sm:$0xff]
    %v1573 = vld [vmem:[#allocation2 + $0x60] sm:$0xff]
    %v1574 = vld [vmem:[#allocation2 + $0x68] sm:$0xff]
    %v1575 = vld [vmem:[#allocation2 + $0x70] sm:$0xff]
    %v1576 = vld [vmem:[#allocation2 + $0x78] sm:$0xff]
    %v1577 = vld [vmem:[#allocation2 + $0x80] sm:$0xff]
    %v1578 = vld [vmem:[#allocation2 + $0x88] sm:$0xff]
    %s1579 = scalar_lea.vmem [#allocation2], 144
    %v1580 = vld [vmem:[%s1579] sm:$0xff]
    %v1581 = vld [vmem:[%s1579 + $0x8] sm:$0xff]
    %v1582 = vld [vmem:[%s1579 + $0x10] sm:$0xff]
    %v1583 = vld [vmem:[%s1579 + $0x18] sm:$0xff]
    %v1584 = vld [vmem:[%s1579 + $0x20] sm:$0xff]
    %v1585 = vld [vmem:[%s1579 + $0x28] sm:$0xff]
    %v1586 = vld [vmem:[%s1579 + $0x30] sm:$0xff]
    %v1587 = vld [vmem:[%s1579 + $0x38] sm:$0xff]
    %v1588 = vld [vmem:[%s1579 + $0x40] sm:$0xff]
    %v1589 = vld [vmem:[%s1579 + $0x48] sm:$0xff]
    %v1590 = vld [vmem:[%s1579 + $0x50] sm:$0xff]
    %v1591 = vld [vmem:[%s1579 + $0x58] sm:$0xff]
    %v1592 = vld [vmem:[%s1579 + $0x60] sm:$0xff]
    %v1593 = vld [vmem:[%s1579 + $0x68] sm:$0xff]
    %v1594 = vld [vmem:[%s1579 + $0x70] sm:$0xff]
    %v1595 = vld [vmem:[%s1579 + $0x78] sm:$0xff]
    %v1596 = vld [vmem:[%s1579 + $0x80] sm:$0xff]
    %v1597 = vld [vmem:[%s1579 + $0x88] sm:$0xff]
    %vm1598 = vcmask 588800
    %v1600 = vsel %vm1598, %v1550, 0
    %v1603 = vsel %vm1598, %v1551, 0
    %v1606 = vsel %vm1598, %v1552, 0
    %v1609 = vsel %vm1598, %v1553, 0
    %v1612 = vsel %vm1598, %v1554, 0
    %v1615 = vsel %vm1598, %v1555, 0
    %v1618 = vsel %vm1598, %v1556, 0
    %v1621 = vsel %vm1598, %v1557, 0
    %1623 = vmatprep.subr.mxu0 %v1581
    %1624 = vmatpush1.msra.mxu0 %v1580
    %1625 = vmatprep.subr.mxu0 %v1583
    %1626 = vmatpush1.msra.mxu0 %v1582
    %1627 = vmatprep.subr.mxu0 %v1585
    %1628 = vmatpush1.msra.mxu0 %v1584
    %1629 = vmatprep.subr.mxu0 %v1587
    %1630 = vmatpush1.msra.mxu0 %v1586
    %1631 = vmatprep.subr.mxu0 %v1589
    %1632 = vmatpush1.msra.mxu0 %v1588
    %1633 = vmatprep.subr.mxu0 %v1591
    %1634 = vmatpush1.msra.mxu0 %v1590
    %1635 = vmatprep.subr.mxu0 %v1593
    %1636 = vmatpush1.msra.mxu0 %v1592
    %1637 = vmatprep.subr.mxu0 %v1595
    %1638 = vmatpush1.msra.mxu0 %v1594
    %1639 = vmatprep.subr.mxu0 %v1597
    %1640 = vmatpush1.msra.mxu0 %v1596
    %1641 = vmatprep.subr.mxu0 0.0
    %1642 = vmatpush1.msra.mxu0 0.0
    %1643 = vmatprep.subr.mxu0 0.0
    %1644 = vmatpush1.msra.mxu0 0.0
    %1645 = vmatprep.subr.mxu0 0.0
    %1646 = vmatpush1.msra.mxu0 0.0
    %1647 = vmatprep.subr.mxu0 0.0
    %1648 = vmatpush1.msra.mxu0 0.0
    %1649 = vmatprep.subr.mxu0 0.0
    %1650 = vmatpush1.msra.mxu0 0.0
    %1651 = vmatprep.subr.mxu0 0.0
    %1652 = vmatpush1.msra.mxu0 0.0
    %1653 = vmatprep.subr.mxu0 0.0
    %1654 = vmatpush1.msra.mxu0 0.0
    %1655 = vmatprep.subr.mxu0 0.0
    %1656 = vmatpush1.msra.mxu0 0.0
    %1657 = vmatprep.subr.mxu0 0.0
    %1658 = vmatpush1.msra.mxu0 0.0
    %1659 = vmatprep.subr.mxu0 0.0
    %1660 = vmatpush1.msra.mxu0 0.0
    %1661 = vmatprep.subr.mxu0 0.0
    %1662 = vmatpush1.msra.mxu0 0.0
    %1663 = vmatprep.subr.mxu0 0.0
    %1664 = vmatpush1.msra.mxu0 0.0
    %1665 = vmatprep.subr.mxu0 0.0
    %1666 = vmatpush1.msra.mxu0 0.0
    %1667 = vmatprep.subr.mxu0 0.0
    %1668 = vmatpush1.msra.mxu0 0.0
    %1669 = vmatprep.subr.mxu0 0.0
    %1670 = vmatpush1.msra.mxu0 0.0
    %1671 = vmatprep.subr.mxu0 0.0
    %1672 = vmatpush1.msra.mxu0 0.0
    %1673 = vmatprep.subr.mxu0 0.0
    %1674 = vmatpush1.msra.mxu0 0.0
    %1675 = vmatprep.subr.mxu0 0.0
    %1676 = vmatpush1.msra.mxu0 0.0
    %1677 = vmatprep.subr.mxu0 0.0
    %1678 = vmatpush1.msra.mxu0 0.0
    %1679 = vmatprep.subr.mxu0 0.0
    %1680 = vmatpush1.msra.mxu0 0.0
    %1681 = vmatprep.subr.mxu0 0.0
    %1682 = vmatpush1.msra.mxu0 0.0
    %1683 = vmatprep.subr.mxu0 0.0
    %1684 = vmatpush1.msra.mxu0 0.0
    %1685 = vmatprep.subr.mxu0 0.0
    %1686 = vmatpush1.msra.mxu0 0.0
    %1687 = vmatprep.mubr.f32.mxu0 0.0
    %1688 = vmatmul.mubr.f32.gmra.mrb[0].mxu0 %v1600
    %v1689 = vpop.f32.mrb[0].mxu0
    %v1690 = vadd.f32 0.0, %v1689
    %v1691 = vpop.f32.mrb[0].mxu0
    %v1692 = vadd.f32 0.0, %v1691
    %1693 = vmatprep.mubr.f32.mxu0 0.0
    %1694 = vmatmul.mubr.f32.gmra.mrb[0].mxu0 %v1603
    %v1695 = vpop.f32.mrb[0].mxu0
    %v1696 = vadd.f32 0.0, %v1695
    %v1697 = vpop.f32.mrb[0].mxu0
    %v1698 = vadd.f32 0.0, %v1697
    %1699 = vmatprep.mubr.f32.mxu0 0.0
    %1700 = vmatmul.mubr.f32.gmra.mrb[0].mxu0 %v1606
    %v1701 = vpop.f32.mrb[0].mxu0
    %v1702 = vadd.f32 0.0, %v1701
    %v1703 = vpop.f32.mrb[0].mxu0
    %v1704 = vadd.f32 0.0, %v1703
    %1705 = vmatprep.mubr.f32.mxu0 0.0
    %1706 = vmatmul.mubr.f32.gmra.mrb[0].mxu0 %v1609
    %v1707 = vpop.f32.mrb[0].mxu0
    %v1708 = vadd.f32 0.0, %v1707
    %v1709 = vpop.f32.mrb[0].mxu0
    %v1710 = vadd.f32 0.0, %v1709
    %1711 = vmatprep.mubr.f32.mxu0 0.0
    %1712 = vmatmul.mubr.f32.gmra.mrb[0].mxu0 %v1612
    %v1713 = vpop.f32.mrb[0].mxu0
    %v1714 = vadd.f32 0.0, %v1713
    %v1715 = vpop.f32.mrb[0].mxu0
    %v1716 = vadd.f32 0.0, %v1715
    %1717 = vmatprep.mubr.f32.mxu0 0.0
    %1718 = vmatmul.mubr.f32.gmra.mrb[0].mxu0 %v1615
    %v1719 = vpop.f32.mrb[0].mxu0
    %v1720 = vadd.f32 0.0, %v1719
    %v1721 = vpop.f32.mrb[0].mxu0
    %v1722 = vadd.f32 0.0, %v1721
    %1723 = vmatprep.mubr.f32.mxu0 0.0
    %1724 = vmatmul.mubr.f32.gmra.mrb[0].mxu0 %v1618
    %v1725 = vpop.f32.mrb[0].mxu0
    %v1726 = vadd.f32 0.0, %v1725
    %v1727 = vpop.f32.mrb[0].mxu0
    %v1728 = vadd.f32 0.0, %v1727
    %1729 = vmatprep.mubr.f32.mxu0 0.0
    %1730 = vmatmul.mubr.f32.gmra.mrb[0].mxu0 %v1621
    %v1731 = vpop.f32.mrb[0].mxu0
    %v1732 = vadd.f32 0.0, %v1731
    %v1733 = vpop.f32.mrb[0].mxu0
    %v1734 = vadd.f32 0.0, %v1733
    %1735 = vdwg.mxu0
    %v1737 = vsel %vm1598, %v1549, 0
    %1739 = vmatprep.subr.mxu0 %v1562
    %1740 = vmatpush1.msra.mxu0 %v1561
    %1741 = vmatprep.subr.mxu0 %v1564
    %1742 = vmatpush1.msra.mxu0 %v1563
    %1743 = vmatprep.subr.mxu0 %v1566
    %1744 = vmatpush1.msra.mxu0 %v1565
    %1745 = vmatprep.subr.mxu0 %v1568
    %1746 = vmatpush1.msra.mxu0 %v1567
    %1747 = vmatprep.subr.mxu0 %v1570
    %1748 = vmatpush1.msra.mxu0 %v1569
    %1749 = vmatprep.subr.mxu0 %v1572
    %1750 = vmatpush1.msra.mxu0 %v1571
    %1751 = vmatprep.subr.mxu0 %v1574
    %1752 = vmatpush1.msra.mxu0 %v1573
    %1753 = vmatprep.subr.mxu0 %v1576
    %1754 = vmatpush1.msra.mxu0 %v1575
    %1755 = vmatprep.subr.mxu0 %v1578
    %1756 = vmatpush1.msra.mxu0 %v1577
    %1757 = vmatprep.subr.mxu0 0.0
    %1758 = vmatpush1.msra.mxu0 0.0
    %1759 = vmatprep.subr.mxu0 0.0
    %1760 = vmatpush1.msra.mxu0 0.0
    %1761 = vmatprep.subr.mxu0 0.0
    %1762 = vmatpush1.msra.mxu0 0.0
    %1763 = vmatprep.subr.mxu0 0.0
    %1764 = vmatpush1.msra.mxu0 0.0
    %1765 = vmatprep.subr.mxu0 0.0
    %1766 = vmatpush1.msra.mxu0 0.0
    %1767 = vmatprep.subr.mxu0 0.0
    %1768 = vmatpush1.msra.mxu0 0.0
    %1769 = vmatprep.subr.mxu0 0.0
    %1770 = vmatpush1.msra.mxu0 0.0
    %1771 = vmatprep.subr.mxu0 0.0
    %1772 = vmatpush1.msra.mxu0 0.0
    %1773 = vmatprep.subr.mxu0 0.0
    %1774 = vmatpush1.msra.mxu0 0.0
    %1775 = vmatprep.subr.mxu0 0.0
    %1776 = vmatpush1.msra.mxu0 0.0
    %1777 = vmatprep.subr.mxu0 0.0
    %1778 = vmatpush1.msra.mxu0 0.0
    %1779 = vmatprep.subr.mxu0 0.0
    %1780 = vmatpush1.msra.mxu0 0.0
    %1781 = vmatprep.subr.mxu0 0.0
    %1782 = vmatpush1.msra.mxu0 0.0
    %1783 = vmatprep.subr.mxu0 0.0
    %1784 = vmatpush1.msra.mxu0 0.0
    %1785 = vmatprep.subr.mxu0 0.0
    %1786 = vmatpush1.msra.mxu0 0.0
    %1787 = vmatprep.subr.mxu0 0.0
    %1788 = vmatpush1.msra.mxu0 0.0
    %1789 = vmatprep.subr.mxu0 0.0
    %1790 = vmatpush1.msra.mxu0 0.0
    %1791 = vmatprep.subr.mxu0 0.0
    %1792 = vmatpush1.msra.mxu0 0.0
    %1793 = vmatprep.subr.mxu0 0.0
    %1794 = vmatpush1.msra.mxu0 0.0
    %1795 = vmatprep.subr.mxu0 0.0
    %1796 = vmatpush1.msra.mxu0 0.0
    %1797 = vmatprep.subr.mxu0 0.0
    %1798 = vmatpush1.msra.mxu0 0.0
    %1799 = vmatprep.subr.mxu0 0.0
    %1800 = vmatpush1.msra.mxu0 0.0
    %1801 = vmatprep.subr.mxu0 0.0
    %1802 = vmatpush1.msra.mxu0 0.0
    %1803 = vmatprep.mubr.f32.mxu0 0.0
    %1804 = vmatmul.mubr.f32.gmra.mrb[0].mxu0 %v1737
    %v1805 = vpop.f32.mrb[0].mxu0
    %v1806 = vadd.f32 %v1690, %v1805
    %v1807 = vpop.f32.mrb[0].mxu0
    %v1808 = vadd.f32 %v1692, %v1807
    %1809 = vmatprep.mubr.f32.mxu0 0.0
    %1810 = vmatmul.mubr.f32.gmra.mrb[0].mxu0 %v1600
    %v1811 = vpop.f32.mrb[0].mxu0
    %v1812 = vadd.f32 %v1696, %v1811
    %v1813 = vpop.f32.mrb[0].mxu0
    %v1814 = vadd.f32 %v1698, %v1813
    %1815 = vmatprep.mubr.f32.mxu0 0.0
    %1816 = vmatmul.mubr.f32.gmra.mrb[0].mxu0 %v1603
    %v1817 = vpop.f32.mrb[0].mxu0
    %v1818 = vadd.f32 %v1702, %v1817
    %v1819 = vpop.f32.mrb[0].mxu0
    %v1820 = vadd.f32 %v1704, %v1819
    %1821 = vmatprep.mubr.f32.mxu0 0.0
    %1822 = vmatmul.mubr.f32.gmra.mrb[0].mxu0 %v1606
    %v1823 = vpop.f32.mrb[0].mxu0
    %v1824 = vadd.f32 %v1708, %v1823
    %v1825 = vpop.f32.mrb[0].mxu0
    %v1826 = vadd.f32 %v1710, %v1825
    %1827 = vmatprep.mubr.f32.mxu0 0.0
    %1828 = vmatmul.mubr.f32.gmra.mrb[0].mxu0 %v1609
    %v1829 = vpop.f32.mrb[0].mxu0
    %v1830 = vadd.f32 %v1714, %v1829
    %v1831 = vpop.f32.mrb[0].mxu0
    %v1832 = vadd.f32 %v1716, %v1831
    %1833 = vmatprep.mubr.f32.mxu0 0.0
    %1834 = vmatmul.mubr.f32.gmra.mrb[0].mxu0 %v1612
    %v1835 = vpop.f32.mrb[0].mxu0
    %v1836 = vadd.f32 %v1720, %v1835
    %v1837 = vpop.f32.mrb[0].mxu0
    %v1838 = vadd.f32 %v1722, %v1837
    %1839 = vmatprep.mubr.f32.mxu0 0.0
    %1840 = vmatmul.mubr.f32.gmra.mrb[0].mxu0 %v1615
    %v1841 = vpop.f32.mrb[0].mxu0
    %v1842 = vadd.f32 %v1726, %v1841
    %v1843 = vpop.f32.mrb[0].mxu0
    %v1844 = vadd.f32 %v1728, %v1843
    %1845 = vmatprep.mubr.f32.mxu0 0.0
    %1846 = vmatmul.mubr.f32.gmra.mrb[0].mxu0 %v1618
    %v1847 = vpop.f32.mrb[0].mxu0
    %v1848 = vadd.f32 %v1732, %v1847
    %v1849 = vpop.f32.mrb[0].mxu0
    %v1850 = vadd.f32 %v1734, %v1849
    %1851 = vdwg.mxu0
    %s1852 = scalar_lea.vmem [#allocation2], 288
    %v1853 = vld [vmem:[%s1852] sm:$0xff]
    %v1854 = vld [vmem:[%s1852 + $0x8] sm:$0xff]
    %v1855 = vld [vmem:[%s1852 + $0x10] sm:$0xff]
    %v1856 = vld [vmem:[%s1852 + $0x18] sm:$0xff]
    %v1857 = vld [vmem:[%s1852 + $0x20] sm:$0xff]
    %v1858 = vld [vmem:[%s1852 + $0x28] sm:$0xff]
    %v1859 = vld [vmem:[%s1852 + $0x30] sm:$0xff]
    %v1860 = vld [vmem:[%s1852 + $0x38] sm:$0xff]
    %v1861 = vld [vmem:[%s1852 + $0x40] sm:$0xff]
    %v1862 = vld [vmem:[%s1852 + $0x48] sm:$0xff]
    %v1863 = vld [vmem:[%s1852 + $0x50] sm:$0xff]
    %v1864 = vld [vmem:[%s1852 + $0x58] sm:$0xff]
    %v1865 = vld [vmem:[%s1852 + $0x60] sm:$0xff]
    %v1866 = vld [vmem:[%s1852 + $0x68] sm:$0xff]
    %v1867 = vld [vmem:[%s1852 + $0x70] sm:$0xff]
    %v1868 = vld [vmem:[%s1852 + $0x78] sm:$0xff]
    %v1869 = vld [vmem:[%s1852 + $0x80] sm:$0xff]
    %v1870 = vld [vmem:[%s1852 + $0x88] sm:$0xff]
    %v1872 = vsel %vm1598, %v1558, 0
    %1874 = vmatprep.subr.mxu0 %v1854
    %1875 = vmatpush1.msra.mxu0 %v1853
    %1876 = vmatprep.subr.mxu0 %v1856
    %1877 = vmatpush1.msra.mxu0 %v1855
    %1878 = vmatprep.subr.mxu0 %v1858
    %1879 = vmatpush1.msra.mxu0 %v1857
    %1880 = vmatprep.subr.mxu0 %v1860
    %1881 = vmatpush1.msra.mxu0 %v1859
    %1882 = vmatprep.subr.mxu0 %v1862
    %1883 = vmatpush1.msra.mxu0 %v1861
    %1884 = vmatprep.subr.mxu0 %v1864
    %1885 = vmatpush1.msra.mxu0 %v1863
    %1886 = vmatprep.subr.mxu0 %v1866
    %1887 = vmatpush1.msra.mxu0 %v1865
    %1888 = vmatprep.subr.mxu0 %v1868
    %1889 = vmatpush1.msra.mxu0 %v1867
    %1890 = vmatprep.subr.mxu0 %v1870
    %1891 = vmatpush1.msra.mxu0 %v1869
    %1892 = vmatprep.subr.mxu0 0.0
    %1893 = vmatpush1.msra.mxu0 0.0
    %1894 = vmatprep.subr.mxu0 0.0
    %1895 = vmatpush1.msra.mxu0 0.0
    %1896 = vmatprep.subr.mxu0 0.0
    %1897 = vmatpush1.msra.mxu0 0.0
    %1898 = vmatprep.subr.mxu0 0.0
    %1899 = vmatpush1.msra.mxu0 0.0
    %1900 = vmatprep.subr.mxu0 0.0
    %1901 = vmatpush1.msra.mxu0 0.0
    %1902 = vmatprep.subr.mxu0 0.0
    %1903 = vmatpush1.msra.mxu0 0.0
    %1904 = vmatprep.subr.mxu0 0.0
    %1905 = vmatpush1.msra.mxu0 0.0
    %1906 = vmatprep.subr.mxu0 0.0
    %1907 = vmatpush1.msra.mxu0 0.0
    %1908 = vmatprep.subr.mxu0 0.0
    %1909 = vmatpush1.msra.mxu0 0.0
    %1910 = vmatprep.subr.mxu0 0.0
    %1911 = vmatpush1.msra.mxu0 0.0
    %1912 = vmatprep.subr.mxu0 0.0
    %1913 = vmatpush1.msra.mxu0 0.0
    %1914 = vmatprep.subr.mxu0 0.0
    %1915 = vmatpush1.msra.mxu0 0.0
    %1916 = vmatprep.subr.mxu0 0.0
    %1917 = vmatpush1.msra.mxu0 0.0
    %1918 = vmatprep.subr.mxu0 0.0
    %1919 = vmatpush1.msra.mxu0 0.0
    %1920 = vmatprep.subr.mxu0 0.0
    %1921 = vmatpush1.msra.mxu0 0.0
    %1922 = vmatprep.subr.mxu0 0.0
    %1923 = vmatpush1.msra.mxu0 0.0
    %1924 = vmatprep.subr.mxu0 0.0
    %1925 = vmatpush1.msra.mxu0 0.0
    %1926 = vmatprep.subr.mxu0 0.0
    %1927 = vmatpush1.msra.mxu0 0.0
    %1928 = vmatprep.subr.mxu0 0.0
    %1929 = vmatpush1.msra.mxu0 0.0
    %1930 = vmatprep.subr.mxu0 0.0
    %1931 = vmatpush1.msra.mxu0 0.0
    %1932 = vmatprep.subr.mxu0 0.0
    %1933 = vmatpush1.msra.mxu0 0.0
    %1934 = vmatprep.subr.mxu0 0.0
    %1935 = vmatpush1.msra.mxu0 0.0
    %1936 = vmatprep.subr.mxu0 0.0
    %1937 = vmatpush1.msra.mxu0 0.0
    %1938 = vmatprep.mubr.f32.mxu0 0.0
    %1939 = vmatmul.mubr.f32.gmra.mrb[0].mxu0 %v1603
    %v1940 = vpop.f32.mrb[0].mxu0
    %v1941 = vadd.f32 0.0, %v1940
    %v1942 = vpop.f32.mrb[0].mxu0
    %v1943 = vadd.f32 0.0, %v1942
    %1944 = vmatprep.mubr.f32.mxu0 0.0
    %1945 = vmatmul.mubr.f32.gmra.mrb[0].mxu0 %v1606
    %v1946 = vpop.f32.mrb[0].mxu0
    %v1947 = vadd.f32 0.0, %v1946
    %v1948 = vpop.f32.mrb[0].mxu0
    %v1949 = vadd.f32 0.0, %v1948
    %1950 = vmatprep.mubr.f32.mxu0 0.0
    %1951 = vmatmul.mubr.f32.gmra.mrb[0].mxu0 %v1609
    %v1952 = vpop.f32.mrb[0].mxu0
    %v1953 = vadd.f32 0.0, %v1952
    %v1954 = vpop.f32.mrb[0].mxu0
    %v1955 = vadd.f32 0.0, %v1954
    %1956 = vmatprep.mubr.f32.mxu0 0.0
    %1957 = vmatmul.mubr.f32.gmra.mrb[0].mxu0 %v1612
    %v1958 = vpop.f32.mrb[0].mxu0
    %v1959 = vadd.f32 0.0, %v1958
    %v1960 = vpop.f32.mrb[0].mxu0
    %v1961 = vadd.f32 0.0, %v1960
    %1962 = vmatprep.mubr.f32.mxu0 0.0
    %1963 = vmatmul.mubr.f32.gmra.mrb[0].mxu0 %v1615
    %v1964 = vpop.f32.mrb[0].mxu0
    %v1965 = vadd.f32 0.0, %v1964
    %v1966 = vpop.f32.mrb[0].mxu0
    %v1967 = vadd.f32 0.0, %v1966
    %1968 = vmatprep.mubr.f32.mxu0 0.0
    %1969 = vmatmul.mubr.f32.gmra.mrb[0].mxu0 %v1618
    %v1970 = vpop.f32.mrb[0].mxu0
    %v1971 = vadd.f32 0.0, %v1970
    %v1972 = vpop.f32.mrb[0].mxu0
    %v1973 = vadd.f32 0.0, %v1972
    %1974 = vmatprep.mubr.f32.mxu0 0.0
    %1975 = vmatmul.mubr.f32.gmra.mrb[0].mxu0 %v1621
    %v1976 = vpop.f32.mrb[0].mxu0
    %v1977 = vadd.f32 0.0, %v1976
    %v1978 = vpop.f32.mrb[0].mxu0
    %v1979 = vadd.f32 0.0, %v1978
    %1980 = vmatprep.mubr.f32.mxu0 0.0
    %1981 = vmatmul.mubr.f32.gmra.mrb[0].mxu0 %v1872
    %v1982 = vpop.f32.mrb[0].mxu0
    %v1983 = vadd.f32 0.0, %v1982
    %v1984 = vpop.f32.mrb[0].mxu0
    %v1985 = vadd.f32 0.0, %v1984
    %1986 = vdwg.mxu0
    %v1987 = vadd.f32 %v1806, %v1941
    %v1988 = vadd.f32 %v1808, %v1943
    %v1989 = vadd.f32 %v1812, %v1947
    %v1990 = vadd.f32 %v1814, %v1949
    %v1991 = vadd.f32 %v1818, %v1953
    %v1992 = vadd.f32 %v1820, %v1955
    %v1993 = vadd.f32 %v1824, %v1959
    %v1994 = vadd.f32 %v1826, %v1961
    %v1995 = vadd.f32 %v1830, %v1965
    %v1996 = vadd.f32 %v1832, %v1967
    %v1997 = vadd.f32 %v1836, %v1971
    %v1998 = vadd.f32 %v1838, %v1973
    %v1999 = vadd.f32 %v1842, %v1977
    %v2000 = vadd.f32 %v1844, %v1979
    %v2001 = vadd.f32 %v1848, %v1983
    %v2002 = vadd.f32 %v1850, %v1985
    %s2003 = scalar_lea.vmem [#allocation2], 432
    %v2004 = vld [vmem:[%s2003] sm:$0xff]
    %v2005 = vld [vmem:[%s2003 + $0x8] sm:$0xff]
    %v2006 = vld [vmem:[%s2003 + $0x10] sm:$0xff]
    %v2007 = vld [vmem:[%s2003 + $0x18] sm:$0xff]
    %v2008 = vld [vmem:[%s2003 + $0x20] sm:$0xff]
    %v2009 = vld [vmem:[%s2003 + $0x28] sm:$0xff]
    %v2010 = vld [vmem:[%s2003 + $0x30] sm:$0xff]
    %v2011 = vld [vmem:[%s2003 + $0x38] sm:$0xff]
    %v2012 = vld [vmem:[%s2003 + $0x40] sm:$0xff]
    %v2013 = vld [vmem:[%s2003 + $0x48] sm:$0xff]
    %v2014 = vld [vmem:[%s2003 + $0x50] sm:$0xff]
    %v2015 = vld [vmem:[%s2003 + $0x58] sm:$0xff]
    %v2016 = vld [vmem:[%s2003 + $0x60] sm:$0xff]
    %v2017 = vld [vmem:[%s2003 + $0x68] sm:$0xff]
    %v2018 = vld [vmem:[%s2003 + $0x70] sm:$0xff]
    %v2019 = vld [vmem:[%s2003 + $0x78] sm:$0xff]
    %v2020 = vld [vmem:[%s2003 + $0x80] sm:$0xff]
    %v2021 = vld [vmem:[%s2003 + $0x88] sm:$0xff]
    %v2023 = vsel %vm1598, %v1559, 0
    %2025 = vmatprep.subr.mxu0 %v2005
    %2026 = vmatpush1.msra.mxu0 %v2004
    %2027 = vmatprep.subr.mxu0 %v2007
    %2028 = vmatpush1.msra.mxu0 %v2006
    %2029 = vmatprep.subr.mxu0 %v2009
    %2030 = vmatpush1.msra.mxu0 %v2008
    %2031 = vmatprep.subr.mxu0 %v2011
    %2032 = vmatpush1.msra.mxu0 %v2010
    %2033 = vmatprep.subr.mxu0 %v2013
    %2034 = vmatpush1.msra.mxu0 %v2012
    %2035 = vmatprep.subr.mxu0 %v2015
    %2036 = vmatpush1.msra.mxu0 %v2014
    %2037 = vmatprep.subr.mxu0 %v2017
    %2038 = vmatpush1.msra.mxu0 %v2016
    %2039 = vmatprep.subr.mxu0 %v2019
    %2040 = vmatpush1.msra.mxu0 %v2018
    %2041 = vmatprep.subr.mxu0 %v2021
    %2042 = vmatpush1.msra.mxu0 %v2020
    %2043 = vmatprep.subr.mxu0 0.0
    %2044 = vmatpush1.msra.mxu0 0.0
    %2045 = vmatprep.subr.mxu0 0.0
    %2046 = vmatpush1.msra.mxu0 0.0
    %2047 = vmatprep.subr.mxu0 0.0
    %2048 = vmatpush1.msra.mxu0 0.0
    %2049 = vmatprep.subr.mxu0 0.0
    %2050 = vmatpush1.msra.mxu0 0.0
    %2051 = vmatprep.subr.mxu0 0.0
    %2052 = vmatpush1.msra.mxu0 0.0
    %2053 = vmatprep.subr.mxu0 0.0
    %2054 = vmatpush1.msra.mxu0 0.0
    %2055 = vmatprep.subr.mxu0 0.0
    %2056 = vmatpush1.msra.mxu0 0.0
    %2057 = vmatprep.subr.mxu0 0.0
    %2058 = vmatpush1.msra.mxu0 0.0
    %2059 = vmatprep.subr.mxu0 0.0
    %2060 = vmatpush1.msra.mxu0 0.0
    %2061 = vmatprep.subr.mxu0 0.0
    %2062 = vmatpush1.msra.mxu0 0.0
    %2063 = vmatprep.subr.mxu0 0.0
    %2064 = vmatpush1.msra.mxu0 0.0
    %2065 = vmatprep.subr.mxu0 0.0
    %2066 = vmatpush1.msra.mxu0 0.0
    %2067 = vmatprep.subr.mxu0 0.0
    %2068 = vmatpush1.msra.mxu0 0.0
    %2069 = vmatprep.subr.mxu0 0.0
    %2070 = vmatpush1.msra.mxu0 0.0
    %2071 = vmatprep.subr.mxu0 0.0
    %2072 = vmatpush1.msra.mxu0 0.0
    %2073 = vmatprep.subr.mxu0 0.0
    %2074 = vmatpush1.msra.mxu0 0.0
    %2075 = vmatprep.subr.mxu0 0.0
    %2076 = vmatpush1.msra.mxu0 0.0
    %2077 = vmatprep.subr.mxu0 0.0
    %2078 = vmatpush1.msra.mxu0 0.0
    %2079 = vmatprep.subr.mxu0 0.0
    %2080 = vmatpush1.msra.mxu0 0.0
    %2081 = vmatprep.subr.mxu0 0.0
    %2082 = vmatpush1.msra.mxu0 0.0
    %2083 = vmatprep.subr.mxu0 0.0
    %2084 = vmatpush1.msra.mxu0 0.0
    %2085 = vmatprep.subr.mxu0 0.0
    %2086 = vmatpush1.msra.mxu0 0.0
    %2087 = vmatprep.subr.mxu0 0.0
    %2088 = vmatpush1.msra.mxu0 0.0
    %2089 = vmatprep.mubr.f32.mxu0 0.0
    %2090 = vmatmul.mubr.f32.gmra.mrb[0].mxu0 %v1606
    %v2091 = vpop.f32.mrb[0].mxu0
    %v2092 = vadd.f32 0.0, %v2091
    %v2093 = vpop.f32.mrb[0].mxu0
    %v2094 = vadd.f32 0.0, %v2093
    %2095 = vmatprep.mubr.f32.mxu0 0.0
    %2096 = vmatmul.mubr.f32.gmra.mrb[0].mxu0 %v1609
    %v2097 = vpop.f32.mrb[0].mxu0
    %v2098 = vadd.f32 0.0, %v2097
    %v2099 = vpop.f32.mrb[0].mxu0
    %v2100 = vadd.f32 0.0, %v2099
    %2101 = vmatprep.mubr.f32.mxu0 0.0
    %2102 = vmatmul.mubr.f32.gmra.mrb[0].mxu0 %v1612
    %v2103 = vpop.f32.mrb[0].mxu0
    %v2104 = vadd.f32 0.0, %v2103
    %v2105 = vpop.f32.mrb[0].mxu0
    %v2106 = vadd.f32 0.0, %v2105
    %2107 = vmatprep.mubr.f32.mxu0 0.0
    %2108 = vmatmul.mubr.f32.gmra.mrb[0].mxu0 %v1615
    %v2109 = vpop.f32.mrb[0].mxu0
    %v2110 = vadd.f32 0.0, %v2109
    %v2111 = vpop.f32.mrb[0].mxu0
    %v2112 = vadd.f32 0.0, %v2111
    %2113 = vmatprep.mubr.f32.mxu0 0.0
    %2114 = vmatmul.mubr.f32.gmra.mrb[0].mxu0 %v1618
    %v2115 = vpop.f32.mrb[0].mxu0
    %v2116 = vadd.f32 0.0, %v2115
    %v2117 = vpop.f32.mrb[0].mxu0
    %v2118 = vadd.f32 0.0, %v2117
    %2119 = vmatprep.mubr.f32.mxu0 0.0
    %2120 = vmatmul.mubr.f32.gmra.mrb[0].mxu0 %v1621
    %v2121 = vpop.f32.mrb[0].mxu0
    %v2122 = vadd.f32 0.0, %v2121
    %v2123 = vpop.f32.mrb[0].mxu0
    %v2124 = vadd.f32 0.0, %v2123
    %2125 = vmatprep.mubr.f32.mxu0 0.0
    %2126 = vmatmul.mubr.f32.gmra.mrb[0].mxu0 %v1872
    %v2127 = vpop.f32.mrb[0].mxu0
    %v2128 = vadd.f32 0.0, %v2127
    %v2129 = vpop.f32.mrb[0].mxu0
    %v2130 = vadd.f32 0.0, %v2129
    %2131 = vmatprep.mubr.f32.mxu0 0.0
    %2132 = vmatmul.mubr.f32.gmra.mrb[0].mxu0 %v2023
    %v2133 = vpop.f32.mrb[0].mxu0
    %v2134 = vadd.f32 0.0, %v2133
    %v2135 = vpop.f32.mrb[0].mxu0
    %v2136 = vadd.f32 0.0, %v2135
    %2137 = vdwg.mxu0
    %v2138 = vadd.f32 %v1987, %v2092
    %v2139 = vadd.f32 %v1988, %v2094
    %v2140 = vadd.f32 %v1989, %v2098
    %v2141 = vadd.f32 %v1990, %v2100
    %v2142 = vadd.f32 %v1991, %v2104
    %v2143 = vadd.f32 %v1992, %v2106
    %v2144 = vadd.f32 %v1993, %v2110
    %v2145 = vadd.f32 %v1994, %v2112
    %v2146 = vadd.f32 %v1995, %v2116
    %v2147 = vadd.f32 %v1996, %v2118
    %v2148 = vadd.f32 %v1997, %v2122
    %v2149 = vadd.f32 %v1998, %v2124
    %v2150 = vadd.f32 %v1999, %v2128
    %v2151 = vadd.f32 %v2000, %v2130
    %v2152 = vadd.f32 %v2001, %v2134
    %v2153 = vadd.f32 %v2002, %v2136
    %s2154 = scalar_lea.vmem [#allocation2], 576
    %v2155 = vld [vmem:[%s2154] sm:$0xff]
    %v2156 = vld [vmem:[%s2154 + $0x8] sm:$0xff]
    %v2157 = vld [vmem:[%s2154 + $0x10] sm:$0xff]
    %v2158 = vld [vmem:[%s2154 + $0x18] sm:$0xff]
    %v2159 = vld [vmem:[%s2154 + $0x20] sm:$0xff]
    %v2160 = vld [vmem:[%s2154 + $0x28] sm:$0xff]
    %v2161 = vld [vmem:[%s2154 + $0x30] sm:$0xff]
    %v2162 = vld [vmem:[%s2154 + $0x38] sm:$0xff]
    %v2163 = vld [vmem:[%s2154 + $0x40] sm:$0xff]
    %v2164 = vld [vmem:[%s2154 + $0x48] sm:$0xff]
    %v2165 = vld [vmem:[%s2154 + $0x50] sm:$0xff]
    %v2166 = vld [vmem:[%s2154 + $0x58] sm:$0xff]
    %v2167 = vld [vmem:[%s2154 + $0x60] sm:$0xff]
    %v2168 = vld [vmem:[%s2154 + $0x68] sm:$0xff]
    %v2169 = vld [vmem:[%s2154 + $0x70] sm:$0xff]
    %v2170 = vld [vmem:[%s2154 + $0x78] sm:$0xff]
    %v2171 = vld [vmem:[%s2154 + $0x80] sm:$0xff]
    %v2172 = vld [vmem:[%s2154 + $0x88] sm:$0xff]
    %v2174 = vsel %vm1598, %v1560, 0
    %2176 = vmatprep.subr.mxu0 %v2156
    %2177 = vmatpush1.msra.mxu0 %v2155
    %2178 = vmatprep.subr.mxu0 %v2158
    %2179 = vmatpush1.msra.mxu0 %v2157
    %2180 = vmatprep.subr.mxu0 %v2160
    %2181 = vmatpush1.msra.mxu0 %v2159
    %2182 = vmatprep.subr.mxu0 %v2162
    %2183 = vmatpush1.msra.mxu0 %v2161
    %2184 = vmatprep.subr.mxu0 %v2164
    %2185 = vmatpush1.msra.mxu0 %v2163
    %2186 = vmatprep.subr.mxu0 %v2166
    %2187 = vmatpush1.msra.mxu0 %v2165
    %2188 = vmatprep.subr.mxu0 %v2168
    %2189 = vmatpush1.msra.mxu0 %v2167
    %2190 = vmatprep.subr.mxu0 %v2170
    %2191 = vmatpush1.msra.mxu0 %v2169
    %2192 = vmatprep.subr.mxu0 %v2172
    %2193 = vmatpush1.msra.mxu0 %v2171
    %2194 = vmatprep.subr.mxu0 0.0
    %2195 = vmatpush1.msra.mxu0 0.0
    %2196 = vmatprep.subr.mxu0 0.0
    %2197 = vmatpush1.msra.mxu0 0.0
    %2198 = vmatprep.subr.mxu0 0.0
    %2199 = vmatpush1.msra.mxu0 0.0
    %2200 = vmatprep.subr.mxu0 0.0
    %2201 = vmatpush1.msra.mxu0 0.0
    %2202 = vmatprep.subr.mxu0 0.0
    %2203 = vmatpush1.msra.mxu0 0.0
    %2204 = vmatprep.subr.mxu0 0.0
    %2205 = vmatpush1.msra.mxu0 0.0
    %2206 = vmatprep.subr.mxu0 0.0
    %2207 = vmatpush1.msra.mxu0 0.0
    %2208 = vmatprep.subr.mxu0 0.0
    %2209 = vmatpush1.msra.mxu0 0.0
    %2210 = vmatprep.subr.mxu0 0.0
    %2211 = vmatpush1.msra.mxu0 0.0
    %2212 = vmatprep.subr.mxu0 0.0
    %2213 = vmatpush1.msra.mxu0 0.0
    %2214 = vmatprep.subr.mxu0 0.0
    %2215 = vmatpush1.msra.mxu0 0.0
    %2216 = vmatprep.subr.mxu0 0.0
    %2217 = vmatpush1.msra.mxu0 0.0
    %2218 = vmatprep.subr.mxu0 0.0
    %2219 = vmatpush1.msra.mxu0 0.0
    %2220 = vmatprep.subr.mxu0 0.0
    %2221 = vmatpush1.msra.mxu0 0.0
    %2222 = vmatprep.subr.mxu0 0.0
    %2223 = vmatpush1.msra.mxu0 0.0
    %2224 = vmatprep.subr.mxu0 0.0
    %2225 = vmatpush1.msra.mxu0 0.0
    %2226 = vmatprep.subr.mxu0 0.0
    %2227 = vmatpush1.msra.mxu0 0.0
    %2228 = vmatprep.subr.mxu0 0.0
    %2229 = vmatpush1.msra.mxu0 0.0
    %2230 = vmatprep.subr.mxu0 0.0
    %2231 = vmatpush1.msra.mxu0 0.0
    %2232 = vmatprep.subr.mxu0 0.0
    %2233 = vmatpush1.msra.mxu0 0.0
    %2234 = vmatprep.subr.mxu0 0.0
    %2235 = vmatpush1.msra.mxu0 0.0
    %2236 = vmatprep.subr.mxu0 0.0
    %2237 = vmatpush1.msra.mxu0 0.0
    %2238 = vmatprep.subr.mxu0 0.0
    %2239 = vmatpush1.msra.mxu0 0.0
    %2240 = vmatprep.mubr.f32.mxu0 0.0
    %2241 = vmatmul.mubr.f32.gmra.mrb[0].mxu0 %v1609
    %v2242 = vpop.f32.mrb[0].mxu0
    %v2243 = vadd.f32 0.0, %v2242
    %v2244 = vpop.f32.mrb[0].mxu0
    %v2245 = vadd.f32 0.0, %v2244
    %2246 = vmatprep.mubr.f32.mxu0 0.0
    %2247 = vmatmul.mubr.f32.gmra.mrb[0].mxu0 %v1612
    %v2248 = vpop.f32.mrb[0].mxu0
    %v2249 = vadd.f32 0.0, %v2248
    %v2250 = vpop.f32.mrb[0].mxu0
    %v2251 = vadd.f32 0.0, %v2250
    %2252 = vmatprep.mubr.f32.mxu0 0.0
    %2253 = vmatmul.mubr.f32.gmra.mrb[0].mxu0 %v1615
    %v2254 = vpop.f32.mrb[0].mxu0
    %v2255 = vadd.f32 0.0, %v2254
    %v2256 = vpop.f32.mrb[0].mxu0
    %v2257 = vadd.f32 0.0, %v2256
    %2258 = vmatprep.mubr.f32.mxu0 0.0
    %2259 = vmatmul.mubr.f32.gmra.mrb[0].mxu0 %v1618
    %v2260 = vpop.f32.mrb[0].mxu0
    %v2261 = vadd.f32 0.0, %v2260
    %v2262 = vpop.f32.mrb[0].mxu0
    %v2263 = vadd.f32 0.0, %v2262
    %2264 = vmatprep.mubr.f32.mxu0 0.0
    %2265 = vmatmul.mubr.f32.gmra.mrb[0].mxu0 %v1621
    %v2266 = vpop.f32.mrb[0].mxu0
    %v2267 = vadd.f32 0.0, %v2266
    %v2268 = vpop.f32.mrb[0].mxu0
    %v2269 = vadd.f32 0.0, %v2268
    %2270 = vmatprep.mubr.f32.mxu0 0.0
    %2271 = vmatmul.mubr.f32.gmra.mrb[0].mxu0 %v1872
    %v2272 = vpop.f32.mrb[0].mxu0
    %v2273 = vadd.f32 0.0, %v2272
    %v2274 = vpop.f32.mrb[0].mxu0
    %v2275 = vadd.f32 0.0, %v2274
    %2276 = vmatprep.mubr.f32.mxu0 0.0
    %2277 = vmatmul.mubr.f32.gmra.mrb[0].mxu0 %v2023
    %v2278 = vpop.f32.mrb[0].mxu0
    %v2279 = vadd.f32 0.0, %v2278
    %v2280 = vpop.f32.mrb[0].mxu0
    %v2281 = vadd.f32 0.0, %v2280
    %2282 = vmatprep.mubr.f32.mxu0 0.0
    %2283 = vmatmul.mubr.f32.gmra.mrb[0].mxu0 %v2174
    %v2284 = vpop.f32.mrb[0].mxu0
    %v2285 = vadd.f32 0.0, %v2284
    %v2286 = vpop.f32.mrb[0].mxu0
    %v2287 = vadd.f32 0.0, %v2286
    %2288 = vdwg.mxu0
    %v2289 = vadd.f32 %v2138, %v2243
    %v2290 = vadd.f32 %v2139, %v2245
    %v2291 = vadd.f32 %v2140, %v2249
    %v2292 = vadd.f32 %v2141, %v2251
    %v2293 = vadd.f32 %v2142, %v2255
    %v2294 = vadd.f32 %v2143, %v2257
    %v2295 = vadd.f32 %v2144, %v2261
    %v2296 = vadd.f32 %v2145, %v2263
    %v2297 = vadd.f32 %v2146, %v2267
    %v2298 = vadd.f32 %v2147, %v2269
    %v2299 = vadd.f32 %v2148, %v2273
    %v2300 = vadd.f32 %v2149, %v2275
    %v2301 = vadd.f32 %v2150, %v2279
    %v2302 = vadd.f32 %v2151, %v2281
    %v2303 = vadd.f32 %v2152, %v2285
    %v2304 = vadd.f32 %v2153, %v2287
    %v2305 = vmax.f32 %v2289, %v2290
    %v2306 = vmax.f32 %v2291, %v2292
    %v2307 = vmax.f32 %v2293, %v2294
    %v2308 = vmax.f32 %v2295, %v2296
    %v2309 = vmax.f32 %v2297, %v2298
    %v2310 = vmax.f32 %v2299, %v2300
    %v2311 = vmax.f32 %v2301, %v2302
    %v2312 = vmax.f32 %v2303, %v2304
    %v2313 = vld [vmem:[%s4] sm:$0x1]
    %v2315 = vlaneseq
    %v2316 = vshrl.u32 %v2315, 7
    %v2317 = vsub.s32 0, %v2316
    %v2318 = vrot.slane %v2313, %v2317
    %v2320 = vadd.f32 %v2305, %v2318
    %v2321 = vadd.f32 %v2306, %v2318
    %v2322 = vadd.f32 %v2307, %v2318
    %v2323 = vadd.f32 %v2308, %v2318
    %v2324 = vadd.f32 %v2309, %v2318
    %v2325 = vadd.f32 %v2310, %v2318
    %v2326 = vadd.f32 %v2311, %v2318
    %v2327 = vadd.f32 %v2312, %v2318
    %v2328 = vmax.f32 %v2320, 0.0
    %v2329 = vmax.f32 %v2321, 0.0
    %v2330 = vmax.f32 %v2322, 0.0
    %v2331 = vmax.f32 %v2323, 0.0
    %v2332 = vmax.f32 %v2324, 0.0
    %v2333 = vmax.f32 %v2325, 0.0
    %v2334 = vmax.f32 %v2326, 0.0
    %v2335 = vmax.f32 %v2327, 0.0
    %v2336 = vmax.f32 %v2328, %v2329
    %v2337 = vmax.f32 %v2330, %v2331
    %v2338 = vmax.f32 %v2332, %v2333
    %v2339 = vmax.f32 %v2334, %v2335
    %v2340 = vld [vmem:[%s6] sm:$0x1]
    %v2341 = vld [vmem:[#allocation4] sm:$0xff]
    %v2342 = vld [vmem:[#allocation4 + $0x8] sm:$0xff]
    %v2343 = vld [vmem:[#allocation4 + $0x10] sm:$0xff]
    %v2344 = vld [vmem:[#allocation4 + $0x18] sm:$0xff]
    %v2345 = vld [vmem:[#allocation4 + $0x20] sm:$0xff]
    %v2346 = vld [vmem:[#allocation4 + $0x28] sm:$0xff]
    %v2347 = vld [vmem:[#allocation4 + $0x30] sm:$0xff]
    %v2348 = vld [vmem:[#allocation4 + $0x38] sm:$0xff]
    %vm2349 = vcmask 523264
    %v2351 = vsel %vm2349, %v2336, 0
    %2353 = vmatprep.subr.mxu0 0.0
    %2354 = vmatpush1.msra.mxu0 %v2341
    %2355 = vmatprep.subr.mxu0 0.0
    %2356 = vmatpush1.msra.mxu0 %v2342
    %2357 = vmatprep.subr.mxu0 0.0
    %2358 = vmatpush1.msra.mxu0 %v2343
    %2359 = vmatprep.subr.mxu0 0.0
    %2360 = vmatpush1.msra.mxu0 %v2344
    %2361 = vmatprep.subr.mxu0 0.0
    %2362 = vmatpush1.msra.mxu0 %v2345
    %2363 = vmatprep.subr.mxu0 0.0
    %2364 = vmatpush1.msra.mxu0 %v2346
    %2365 = vmatprep.subr.mxu0 0.0
    %2366 = vmatpush1.msra.mxu0 %v2347
    %2367 = vmatprep.subr.mxu0 0.0
    %2368 = vmatpush1.msra.mxu0 %v2348
    %2369 = vmatprep.subr.mxu0 0.0
    %2370 = vmatpush1.msra.mxu0 0.0
    %2371 = vmatprep.subr.mxu0 0.0
    %2372 = vmatpush1.msra.mxu0 0.0
    %2373 = vmatprep.subr.mxu0 0.0
    %2374 = vmatpush1.msra.mxu0 0.0
    %2375 = vmatprep.subr.mxu0 0.0
    %2376 = vmatpush1.msra.mxu0 0.0
    %2377 = vmatprep.subr.mxu0 0.0
    %2378 = vmatpush1.msra.mxu0 0.0
    %2379 = vmatprep.subr.mxu0 0.0
    %2380 = vmatpush1.msra.mxu0 0.0
    %2381 = vmatprep.subr.mxu0 0.0
    %2382 = vmatpush1.msra.mxu0 0.0
    %2383 = vmatprep.subr.mxu0 0.0
    %2384 = vmatpush1.msra.mxu0 0.0
    %2385 = vmatprep.subr.mxu0 0.0
    %2386 = vmatpush1.msra.mxu0 0.0
    %2387 = vmatprep.subr.mxu0 0.0
    %2388 = vmatpush1.msra.mxu0 0.0
    %2389 = vmatprep.subr.mxu0 0.0
    %2390 = vmatpush1.msra.mxu0 0.0
    %2391 = vmatprep.subr.mxu0 0.0
    %2392 = vmatpush1.msra.mxu0 0.0
    %2393 = vmatprep.subr.mxu0 0.0
    %2394 = vmatpush1.msra.mxu0 0.0
    %2395 = vmatprep.subr.mxu0 0.0
    %2396 = vmatpush1.msra.mxu0 0.0
    %2397 = vmatprep.subr.mxu0 0.0
    %2398 = vmatpush1.msra.mxu0 0.0
    %2399 = vmatprep.subr.mxu0 0.0
    %2400 = vmatpush1.msra.mxu0 0.0
    %2401 = vmatprep.subr.mxu0 0.0
    %2402 = vmatpush1.msra.mxu0 0.0
    %2403 = vmatprep.subr.mxu0 0.0
    %2404 = vmatpush1.msra.mxu0 0.0
    %2405 = vmatprep.subr.mxu0 0.0
    %2406 = vmatpush1.msra.mxu0 0.0
    %2407 = vmatprep.subr.mxu0 0.0
    %2408 = vmatpush1.msra.mxu0 0.0
    %2409 = vmatprep.subr.mxu0 0.0
    %2410 = vmatpush1.msra.mxu0 0.0
    %2411 = vmatprep.subr.mxu0 0.0
    %2412 = vmatpush1.msra.mxu0 0.0
    %2413 = vmatprep.subr.mxu0 0.0
    %2414 = vmatpush1.msra.mxu0 0.0
    %2415 = vmatprep.subr.mxu0 0.0
    %2416 = vmatpush1.msra.mxu0 0.0
    %2417 = vmatprep.mubr.f32.mxu0 0.0
    %2418 = vmatmul.mubr.f32.gmra.mrb[0].mxu0 %v2351
    %v2419 = vpop.f32.mrb[0].mxu0
    %v2420 = vadd.f32 0.0, %v2419
    %v2421 = vpop.f32.mrb[0].mxu0
    %2422 = vdwg.mxu0
    %v2424 = vlaneseq
    %v2425 = vshrl.u32 %v2424, 7
    %v2426 = vsub.s32 0, %v2425
    %v2427 = vrot.slane %v2340, %v2426
    %v2429 = vadd.f32 %v2427, %v2420
    %s2430 = scalar_lea.vmem [#allocation4], 64
    %v2431 = vld [vmem:[%s2430] sm:$0xff]
    %v2432 = vld [vmem:[%s2430 + $0x8] sm:$0xff]
    %v2433 = vld [vmem:[%s2430 + $0x10] sm:$0xff]
    %v2434 = vld [vmem:[%s2430 + $0x18] sm:$0xff]
    %v2435 = vld [vmem:[%s2430 + $0x20] sm:$0xff]
    %v2436 = vld [vmem:[%s2430 + $0x28] sm:$0xff]
    %v2437 = vld [vmem:[%s2430 + $0x30] sm:$0xff]
    %v2438 = vld [vmem:[%s2430 + $0x38] sm:$0xff]
    %v2440 = vsel %vm2349, %v2337, 0
    %2442 = vmatprep.subr.mxu0 0.0
    %2443 = vmatpush1.msra.mxu0 %v2431
    %2444 = vmatprep.subr.mxu0 0.0
    %2445 = vmatpush1.msra.mxu0 %v2432
    %2446 = vmatprep.subr.mxu0 0.0
    %2447 = vmatpush1.msra.mxu0 %v2433
    %2448 = vmatprep.subr.mxu0 0.0
    %2449 = vmatpush1.msra.mxu0 %v2434
    %2450 = vmatprep.subr.mxu0 0.0
    %2451 = vmatpush1.msra.mxu0 %v2435
    %2452 = vmatprep.subr.mxu0 0.0
    %2453 = vmatpush1.msra.mxu0 %v2436
    %2454 = vmatprep.subr.mxu0 0.0
    %2455 = vmatpush1.msra.mxu0 %v2437
    %2456 = vmatprep.subr.mxu0 0.0
    %2457 = vmatpush1.msra.mxu0 %v2438
    %2458 = vmatprep.subr.mxu0 0.0
    %2459 = vmatpush1.msra.mxu0 0.0
    %2460 = vmatprep.subr.mxu0 0.0
    %2461 = vmatpush1.msra.mxu0 0.0
    %2462 = vmatprep.subr.mxu0 0.0
    %2463 = vmatpush1.msra.mxu0 0.0
    %2464 = vmatprep.subr.mxu0 0.0
    %2465 = vmatpush1.msra.mxu0 0.0
    %2466 = vmatprep.subr.mxu0 0.0
    %2467 = vmatpush1.msra.mxu0 0.0
    %2468 = vmatprep.subr.mxu0 0.0
    %2469 = vmatpush1.msra.mxu0 0.0
    %2470 = vmatprep.subr.mxu0 0.0
    %2471 = vmatpush1.msra.mxu0 0.0
    %2472 = vmatprep.subr.mxu0 0.0
    %2473 = vmatpush1.msra.mxu0 0.0
    %2474 = vmatprep.subr.mxu0 0.0
    %2475 = vmatpush1.msra.mxu0 0.0
    %2476 = vmatprep.subr.mxu0 0.0
    %2477 = vmatpush1.msra.mxu0 0.0
    %2478 = vmatprep.subr.mxu0 0.0
    %2479 = vmatpush1.msra.mxu0 0.0
    %2480 = vmatprep.subr.mxu0 0.0
    %2481 = vmatpush1.msra.mxu0 0.0
    %2482 = vmatprep.subr.mxu0 0.0
    %2483 = vmatpush1.msra.mxu0 0.0
    %2484 = vmatprep.subr.mxu0 0.0
    %2485 = vmatpush1.msra.mxu0 0.0
    %2486 = vmatprep.subr.mxu0 0.0
    %2487 = vmatpush1.msra.mxu0 0.0
    %2488 = vmatprep.subr.mxu0 0.0
    %2489 = vmatpush1.msra.mxu0 0.0
    %2490 = vmatprep.subr.mxu0 0.0
    %2491 = vmatpush1.msra.mxu0 0.0
    %2492 = vmatprep.subr.mxu0 0.0
    %2493 = vmatpush1.msra.mxu0 0.0
    %2494 = vmatprep.subr.mxu0 0.0
    %2495 = vmatpush1.msra.mxu0 0.0
    %2496 = vmatprep.subr.mxu0 0.0
    %2497 = vmatpush1.msra.mxu0 0.0
    %2498 = vmatprep.subr.mxu0 0.0
    %2499 = vmatpush1.msra.mxu0 0.0
    %2500 = vmatprep.subr.mxu0 0.0
    %2501 = vmatpush1.msra.mxu0 0.0
    %2502 = vmatprep.subr.mxu0 0.0
    %2503 = vmatpush1.msra.mxu0 0.0
    %2504 = vmatprep.subr.mxu0 0.0
    %2505 = vmatpush1.msra.mxu0 0.0
    %2506 = vmatprep.mubr.f32.mxu0 0.0
    %2507 = vmatmul.mubr.f32.gmra.mrb[0].mxu0 %v2440
    %v2508 = vpop.f32.mrb[0].mxu0
    %v2509 = vadd.f32 0.0, %v2508
    %v2510 = vpop.f32.mrb[0].mxu0
    %2511 = vdwg.mxu0
    %v2512 = vadd.f32 %v2429, %v2509
    %s2513 = scalar_lea.vmem [#allocation4], 128
    %v2514 = vld [vmem:[%s2513] sm:$0xff]
    %v2515 = vld [vmem:[%s2513 + $0x8] sm:$0xff]
    %v2516 = vld [vmem:[%s2513 + $0x10] sm:$0xff]
    %v2517 = vld [vmem:[%s2513 + $0x18] sm:$0xff]
    %v2518 = vld [vmem:[%s2513 + $0x20] sm:$0xff]
    %v2519 = vld [vmem:[%s2513 + $0x28] sm:$0xff]
    %v2520 = vld [vmem:[%s2513 + $0x30] sm:$0xff]
    %v2521 = vld [vmem:[%s2513 + $0x38] sm:$0xff]
    %v2523 = vsel %vm2349, %v2338, 0
    %2525 = vmatprep.subr.mxu0 0.0
    %2526 = vmatpush1.msra.mxu0 %v2514
    %2527 = vmatprep.subr.mxu0 0.0
    %2528 = vmatpush1.msra.mxu0 %v2515
    %2529 = vmatprep.subr.mxu0 0.0
    %2530 = vmatpush1.msra.mxu0 %v2516
    %2531 = vmatprep.subr.mxu0 0.0
    %2532 = vmatpush1.msra.mxu0 %v2517
    %2533 = vmatprep.subr.mxu0 0.0
    %2534 = vmatpush1.msra.mxu0 %v2518
    %2535 = vmatprep.subr.mxu0 0.0
    %2536 = vmatpush1.msra.mxu0 %v2519
    %2537 = vmatprep.subr.mxu0 0.0
    %2538 = vmatpush1.msra.mxu0 %v2520
    %2539 = vmatprep.subr.mxu0 0.0
    %2540 = vmatpush1.msra.mxu0 %v2521
    %2541 = vmatprep.subr.mxu0 0.0
    %2542 = vmatpush1.msra.mxu0 0.0
    %2543 = vmatprep.subr.mxu0 0.0
    %2544 = vmatpush1.msra.mxu0 0.0
    %2545 = vmatprep.subr.mxu0 0.0
    %2546 = vmatpush1.msra.mxu0 0.0
    %2547 = vmatprep.subr.mxu0 0.0
    %2548 = vmatpush1.msra.mxu0 0.0
    %2549 = vmatprep.subr.mxu0 0.0
    %2550 = vmatpush1.msra.mxu0 0.0
    %2551 = vmatprep.subr.mxu0 0.0
    %2552 = vmatpush1.msra.mxu0 0.0
    %2553 = vmatprep.subr.mxu0 0.0
    %2554 = vmatpush1.msra.mxu0 0.0
    %2555 = vmatprep.subr.mxu0 0.0
    %2556 = vmatpush1.msra.mxu0 0.0
    %2557 = vmatprep.subr.mxu0 0.0
    %2558 = vmatpush1.msra.mxu0 0.0
    %2559 = vmatprep.subr.mxu0 0.0
    %2560 = vmatpush1.msra.mxu0 0.0
    %2561 = vmatprep.subr.mxu0 0.0
    %2562 = vmatpush1.msra.mxu0 0.0
    %2563 = vmatprep.subr.mxu0 0.0
    %2564 = vmatpush1.msra.mxu0 0.0
    %2565 = vmatprep.subr.mxu0 0.0
    %2566 = vmatpush1.msra.mxu0 0.0
    %2567 = vmatprep.subr.mxu0 0.0
    %2568 = vmatpush1.msra.mxu0 0.0
    %2569 = vmatprep.subr.mxu0 0.0
    %2570 = vmatpush1.msra.mxu0 0.0
    %2571 = vmatprep.subr.mxu0 0.0
    %2572 = vmatpush1.msra.mxu0 0.0
    %2573 = vmatprep.subr.mxu0 0.0
    %2574 = vmatpush1.msra.mxu0 0.0
    %2575 = vmatprep.subr.mxu0 0.0
    %2576 = vmatpush1.msra.mxu0 0.0
    %2577 = vmatprep.subr.mxu0 0.0
    %2578 = vmatpush1.msra.mxu0 0.0
    %2579 = vmatprep.subr.mxu0 0.0
    %2580 = vmatpush1.msra.mxu0 0.0
    %2581 = vmatprep.subr.mxu0 0.0
    %2582 = vmatpush1.msra.mxu0 0.0
    %2583 = vmatprep.subr.mxu0 0.0
    %2584 = vmatpush1.msra.mxu0 0.0
    %2585 = vmatprep.subr.mxu0 0.0
    %2586 = vmatpush1.msra.mxu0 0.0
    %2587 = vmatprep.subr.mxu0 0.0
    %2588 = vmatpush1.msra.mxu0 0.0
    %2589 = vmatprep.mubr.f32.mxu0 0.0
    %2590 = vmatmul.mubr.f32.gmra.mrb[0].mxu0 %v2523
    %v2591 = vpop.f32.mrb[0].mxu0
    %v2592 = vadd.f32 0.0, %v2591
    %v2593 = vpop.f32.mrb[0].mxu0
    %2594 = vdwg.mxu0
    %v2595 = vadd.f32 %v2512, %v2592
    %s2596 = scalar_lea.vmem [#allocation4], 192
    %v2597 = vld [vmem:[%s2596] sm:$0xff]
    %v2598 = vld [vmem:[%s2596 + $0x8] sm:$0xff]
    %v2599 = vld [vmem:[%s2596 + $0x10] sm:$0xff]
    %v2600 = vld [vmem:[%s2596 + $0x18] sm:$0xff]
    %v2601 = vld [vmem:[%s2596 + $0x20] sm:$0xff]
    %v2602 = vld [vmem:[%s2596 + $0x28] sm:$0xff]
    %v2603 = vld [vmem:[%s2596 + $0x30] sm:$0xff]
    %v2604 = vld [vmem:[%s2596 + $0x38] sm:$0xff]
    %v2606 = vsel %vm2349, %v2339, 0
    %2608 = vmatprep.subr.mxu0 0.0
    %2609 = vmatpush1.msra.mxu0 %v2597
    %2610 = vmatprep.subr.mxu0 0.0
    %2611 = vmatpush1.msra.mxu0 %v2598
    %2612 = vmatprep.subr.mxu0 0.0
    %2613 = vmatpush1.msra.mxu0 %v2599
    %2614 = vmatprep.subr.mxu0 0.0
    %2615 = vmatpush1.msra.mxu0 %v2600
    %2616 = vmatprep.subr.mxu0 0.0
    %2617 = vmatpush1.msra.mxu0 %v2601
    %2618 = vmatprep.subr.mxu0 0.0
    %2619 = vmatpush1.msra.mxu0 %v2602
    %2620 = vmatprep.subr.mxu0 0.0
    %2621 = vmatpush1.msra.mxu0 %v2603
    %2622 = vmatprep.subr.mxu0 0.0
    %2623 = vmatpush1.msra.mxu0 %v2604
    %2624 = vmatprep.subr.mxu0 0.0
    %2625 = vmatpush1.msra.mxu0 0.0
    %2626 = vmatprep.subr.mxu0 0.0
    %2627 = vmatpush1.msra.mxu0 0.0
    %2628 = vmatprep.subr.mxu0 0.0
    %2629 = vmatpush1.msra.mxu0 0.0
    %2630 = vmatprep.subr.mxu0 0.0
    %2631 = vmatpush1.msra.mxu0 0.0
    %2632 = vmatprep.subr.mxu0 0.0
    %2633 = vmatpush1.msra.mxu0 0.0
    %2634 = vmatprep.subr.mxu0 0.0
    %2635 = vmatpush1.msra.mxu0 0.0
    %2636 = vmatprep.subr.mxu0 0.0
    %2637 = vmatpush1.msra.mxu0 0.0
    %2638 = vmatprep.subr.mxu0 0.0
    %2639 = vmatpush1.msra.mxu0 0.0
    %2640 = vmatprep.subr.mxu0 0.0
    %2641 = vmatpush1.msra.mxu0 0.0
    %2642 = vmatprep.subr.mxu0 0.0
    %2643 = vmatpush1.msra.mxu0 0.0
    %2644 = vmatprep.subr.mxu0 0.0
    %2645 = vmatpush1.msra.mxu0 0.0
    %2646 = vmatprep.subr.mxu0 0.0
    %2647 = vmatpush1.msra.mxu0 0.0
    %2648 = vmatprep.subr.mxu0 0.0
    %2649 = vmatpush1.msra.mxu0 0.0
    %2650 = vmatprep.subr.mxu0 0.0
    %2651 = vmatpush1.msra.mxu0 0.0
    %2652 = vmatprep.subr.mxu0 0.0
    %2653 = vmatpush1.msra.mxu0 0.0
    %2654 = vmatprep.subr.mxu0 0.0
    %2655 = vmatpush1.msra.mxu0 0.0
    %2656 = vmatprep.subr.mxu0 0.0
    %2657 = vmatpush1.msra.mxu0 0.0
    %2658 = vmatprep.subr.mxu0 0.0
    %2659 = vmatpush1.msra.mxu0 0.0
    %2660 = vmatprep.subr.mxu0 0.0
    %2661 = vmatpush1.msra.mxu0 0.0
    %2662 = vmatprep.subr.mxu0 0.0
    %2663 = vmatpush1.msra.mxu0 0.0
    %2664 = vmatprep.subr.mxu0 0.0
    %2665 = vmatpush1.msra.mxu0 0.0
    %2666 = vmatprep.subr.mxu0 0.0
    %2667 = vmatpush1.msra.mxu0 0.0
    %2668 = vmatprep.subr.mxu0 0.0
    %2669 = vmatpush1.msra.mxu0 0.0
    %2670 = vmatprep.subr.mxu0 0.0
    %2671 = vmatpush1.msra.mxu0 0.0
    %2672 = vmatprep.mubr.f32.mxu0 0.0
    %2673 = vmatmul.mubr.f32.gmra.mrb[0].mxu0 %v2606
    %v2674 = vpop.f32.mrb[0].mxu0
    %v2675 = vadd.f32 0.0, %v2674
    %v2676 = vpop.f32.mrb[0].mxu0
    %2677 = vdwg.mxu0
    %v2678 = vadd.f32 %v2595, %v2675
    %v2679 = vmax.f32 %v2678, 0.0
    %v2680 = vld [vmem:[#allocation6] sm:$0xff]
    %v2681 = vld [vmem:[#allocation6 + $0x8] sm:$0xff]
    %v2682 = vld [vmem:[#allocation6 + $0x10] sm:$0xff]
    %v2683 = vld [vmem:[#allocation6 + $0x18] sm:$0xff]
    %v2684 = vld [vmem:[#allocation6 + $0x20] sm:$0xff]
    %v2685 = vld [vmem:[#allocation6 + $0x28] sm:$0xff]
    %v2686 = vld [vmem:[#allocation6 + $0x30] sm:$0xff]
    %v2687 = vld [vmem:[#allocation6 + $0x38] sm:$0xff]
    %v2688 = vld [vmem:[#allocation6 + $0x40] sm:$0xff]
    %v2689 = vld [vmem:[#allocation6 + $0x48] sm:$0xff]
    %v2690 = vld [vmem:[#allocation6 + $0x50] sm:$0xff]
    %v2691 = vld [vmem:[#allocation6 + $0x58] sm:$0xff]
    %v2692 = vld [vmem:[#allocation6 + $0x60] sm:$0xff]
    %v2693 = vld [vmem:[#allocation6 + $0x68] sm:$0xff]
    %v2694 = vld [vmem:[#allocation6 + $0x70] sm:$0xff]
    %v2695 = vld [vmem:[#allocation6 + $0x78] sm:$0xff]
    %v2696 = vld [vmem:[%s8] sm:$0x1]
    %v2698 = vlaneseq
    %v2699 = vshrl.u32 %v2698, 7
    %v2700 = vsub.s32 0, %v2699
    %v2701 = vrot.slane %v2696, %v2700
    %2703 = vmatprep.subr.mxu0 0.0
    %2704 = vmatpush1.msra.mxu0 %v2680
    %2705 = vmatprep.subr.mxu0 0.0
    %2706 = vmatpush1.msra.mxu0 %v2681
    %2707 = vmatprep.subr.mxu0 0.0
    %2708 = vmatpush1.msra.mxu0 %v2682
    %2709 = vmatprep.subr.mxu0 0.0
    %2710 = vmatpush1.msra.mxu0 %v2683
    %2711 = vmatprep.subr.mxu0 0.0
    %2712 = vmatpush1.msra.mxu0 %v2684
    %2713 = vmatprep.subr.mxu0 0.0
    %2714 = vmatpush1.msra.mxu0 %v2685
    %2715 = vmatprep.subr.mxu0 0.0
    %2716 = vmatpush1.msra.mxu0 %v2686
    %2717 = vmatprep.subr.mxu0 0.0
    %2718 = vmatpush1.msra.mxu0 %v2687
    %2719 = vmatprep.subr.mxu0 0.0
    %2720 = vmatpush1.msra.mxu0 %v2688
    %2721 = vmatprep.subr.mxu0 0.0
    %2722 = vmatpush1.msra.mxu0 %v2689
    %2723 = vmatprep.subr.mxu0 0.0
    %2724 = vmatpush1.msra.mxu0 %v2690
    %2725 = vmatprep.subr.mxu0 0.0
    %2726 = vmatpush1.msra.mxu0 %v2691
    %2727 = vmatprep.subr.mxu0 0.0
    %2728 = vmatpush1.msra.mxu0 %v2692
    %2729 = vmatprep.subr.mxu0 0.0
    %2730 = vmatpush1.msra.mxu0 %v2693
    %2731 = vmatprep.subr.mxu0 0.0
    %2732 = vmatpush1.msra.mxu0 %v2694
    %2733 = vmatprep.subr.mxu0 0.0
    %2734 = vmatpush1.msra.mxu0 %v2695
    %2735 = vmatprep.subr.mxu0 0.0
    %2736 = vmatpush1.msra.mxu0 0.0
    %2737 = vmatprep.subr.mxu0 0.0
    %2738 = vmatpush1.msra.mxu0 0.0
    %2739 = vmatprep.subr.mxu0 0.0
    %2740 = vmatpush1.msra.mxu0 0.0
    %2741 = vmatprep.subr.mxu0 0.0
    %2742 = vmatpush1.msra.mxu0 0.0
    %2743 = vmatprep.subr.mxu0 0.0
    %2744 = vmatpush1.msra.mxu0 0.0
    %2745 = vmatprep.subr.mxu0 0.0
    %2746 = vmatpush1.msra.mxu0 0.0
    %2747 = vmatprep.subr.mxu0 0.0
    %2748 = vmatpush1.msra.mxu0 0.0
    %2749 = vmatprep.subr.mxu0 0.0
    %2750 = vmatpush1.msra.mxu0 0.0
    %2751 = vmatprep.subr.mxu0 0.0
    %2752 = vmatpush1.msra.mxu0 0.0
    %2753 = vmatprep.subr.mxu0 0.0
    %2754 = vmatpush1.msra.mxu0 0.0
    %2755 = vmatprep.subr.mxu0 0.0
    %2756 = vmatpush1.msra.mxu0 0.0
    %2757 = vmatprep.subr.mxu0 0.0
    %2758 = vmatpush1.msra.mxu0 0.0
    %2759 = vmatprep.subr.mxu0 0.0
    %2760 = vmatpush1.msra.mxu0 0.0
    %2761 = vmatprep.subr.mxu0 0.0
    %2762 = vmatpush1.msra.mxu0 0.0
    %2763 = vmatprep.subr.mxu0 0.0
    %2764 = vmatpush1.msra.mxu0 0.0
    %2765 = vmatprep.subr.mxu0 0.0
    %2766 = vmatpush1.msra.mxu0 0.0
    %2767 = vmatprep.mubr.f32.mxu0 0.0
    %2768 = vmatmul.mubr.f32.gmra.mrb[0].mxu0 %v2679
    %v2769 = vpop.f32.mrb[0].mxu0
    %v2770 = vadd.f32 %v2701, %v2769
    %v2771 = vpop.f32.mrb[0].mxu0
    %2772 = vdwg.mxu0
    %v2773 = vmax.f32 %v2770, 0.0
    %v2774 = vld [vmem:[#allocation7] sm:$0xff]
    %v2775 = vld [vmem:[#allocation7 + $0x8] sm:$0xff]
    %v2776 = vld [vmem:[#allocation7 + $0x10] sm:$0xff]
    %v2777 = vld [vmem:[#allocation7 + $0x18] sm:$0xff]
    %v2778 = vld [vmem:[#allocation7 + $0x20] sm:$0xff]
    %v2779 = vld [vmem:[#allocation7 + $0x28] sm:$0xff]
    %v2780 = vld [vmem:[#allocation7 + $0x30] sm:$0xff]
    %v2781 = vld [vmem:[#allocation7 + $0x38] sm:$0xff]
    %v2782 = vld [vmem:[#allocation7 + $0x40] sm:$0xff]
    %v2783 = vld [vmem:[#allocation7 + $0x48] sm:$0xff]
    %v2784 = vld [vmem:[#allocation7 + $0x50] sm:$0xff]
    %v2785 = vld [vmem:[#allocation7 + $0x58] sm:$0xff]
    %v2786 = vld [vmem:[#allocation7 + $0x60] sm:$0xff]
    %v2787 = vld [vmem:[#allocation7 + $0x68] sm:$0xff]
    %v2788 = vld [vmem:[#allocation7 + $0x70] sm:$0xff]
    %v2789 = vld [vmem:[#allocation7 + $0x78] sm:$0xff]
    %v2790 = vld [vmem:[%s10] sm:$0x1]
    %v2792 = vlaneseq
    %v2793 = vshrl.u32 %v2792, 7
    %v2794 = vsub.s32 0, %v2793
    %v2795 = vrot.slane %v2790, %v2794
    %2797 = vmatprep.subr.mxu0 0.0
    %2798 = vmatpush1.msra.mxu0 %v2774
    %2799 = vmatprep.subr.mxu0 0.0
    %2800 = vmatpush1.msra.mxu0 %v2775
    %2801 = vmatprep.subr.mxu0 0.0
    %2802 = vmatpush1.msra.mxu0 %v2776
    %2803 = vmatprep.subr.mxu0 0.0
    %2804 = vmatpush1.msra.mxu0 %v2777
    %2805 = vmatprep.subr.mxu0 0.0
    %2806 = vmatpush1.msra.mxu0 %v2778
    %2807 = vmatprep.subr.mxu0 0.0
    %2808 = vmatpush1.msra.mxu0 %v2779
    %2809 = vmatprep.subr.mxu0 0.0
    %2810 = vmatpush1.msra.mxu0 %v2780
    %2811 = vmatprep.subr.mxu0 0.0
    %2812 = vmatpush1.msra.mxu0 %v2781
    %2813 = vmatprep.subr.mxu0 0.0
    %2814 = vmatpush1.msra.mxu0 %v2782
    %2815 = vmatprep.subr.mxu0 0.0
    %2816 = vmatpush1.msra.mxu0 %v2783
    %2817 = vmatprep.subr.mxu0 0.0
    %2818 = vmatpush1.msra.mxu0 %v2784
    %2819 = vmatprep.subr.mxu0 0.0
    %2820 = vmatpush1.msra.mxu0 %v2785
    %2821 = vmatprep.subr.mxu0 0.0
    %2822 = vmatpush1.msra.mxu0 %v2786
    %2823 = vmatprep.subr.mxu0 0.0
    %2824 = vmatpush1.msra.mxu0 %v2787
    %2825 = vmatprep.subr.mxu0 0.0
    %2826 = vmatpush1.msra.mxu0 %v2788
    %2827 = vmatprep.subr.mxu0 0.0
    %2828 = vmatpush1.msra.mxu0 %v2789
    %2829 = vmatprep.subr.mxu0 0.0
    %2830 = vmatpush1.msra.mxu0 0.0
    %2831 = vmatprep.subr.mxu0 0.0
    %2832 = vmatpush1.msra.mxu0 0.0
    %2833 = vmatprep.subr.mxu0 0.0
    %2834 = vmatpush1.msra.mxu0 0.0
    %2835 = vmatprep.subr.mxu0 0.0
    %2836 = vmatpush1.msra.mxu0 0.0
    %2837 = vmatprep.subr.mxu0 0.0
    %2838 = vmatpush1.msra.mxu0 0.0
    %2839 = vmatprep.subr.mxu0 0.0
    %2840 = vmatpush1.msra.mxu0 0.0
    %2841 = vmatprep.subr.mxu0 0.0
    %2842 = vmatpush1.msra.mxu0 0.0
    %2843 = vmatprep.subr.mxu0 0.0
    %2844 = vmatpush1.msra.mxu0 0.0
    %2845 = vmatprep.subr.mxu0 0.0
    %2846 = vmatpush1.msra.mxu0 0.0
    %2847 = vmatprep.subr.mxu0 0.0
    %2848 = vmatpush1.msra.mxu0 0.0
    %2849 = vmatprep.subr.mxu0 0.0
    %2850 = vmatpush1.msra.mxu0 0.0
    %2851 = vmatprep.subr.mxu0 0.0
    %2852 = vmatpush1.msra.mxu0 0.0
    %2853 = vmatprep.subr.mxu0 0.0
    %2854 = vmatpush1.msra.mxu0 0.0
    %2855 = vmatprep.subr.mxu0 0.0
    %2856 = vmatpush1.msra.mxu0 0.0
    %2857 = vmatprep.subr.mxu0 0.0
    %2858 = vmatpush1.msra.mxu0 0.0
    %2859 = vmatprep.subr.mxu0 0.0
    %2860 = vmatpush1.msra.mxu0 0.0
    %2861 = vmatprep.mubr.f32.mxu0 0.0
    %2862 = vmatmul.mubr.f32.gmra.mrb[0].mxu0 %v2773
    %v2863 = vpop.f32.mrb[0].mxu0
    %v2864 = vadd.f32 %v2795, %v2863
    %v2865 = vpop.f32.mrb[0].mxu0
    %2866 = vdwg.mxu0
    %2867 = vst [vmem:[%s11] sm:$0xff] %v2864
    // Predicated region
    $region62: #{lenet_forward.1} parent=1 // pred_check
      _
    $region63: #{lenet_forward.1} parent=1 // pred_check_branch
      %2869 = sbr.rel (0) target = $region65
    $region64: #{lenet_forward.1} parent=1 // pred_region
      _
    $region65: #{lenet_forward.1} parent=1 // pred_fallthru
      _
    // Predicated region
    $region66: #{lenet_forward.1} parent=1 // pred_check
      _
    $region67: #{lenet_forward.1} parent=1 // pred_check_branch
      %2871 = sbr.rel (0) target = $region69
    $region68: #{lenet_forward.1} parent=1 // pred_region
      _
    $region69: #{lenet_forward.1} parent=1 // pred_fallthru
      _
    %2872 = vsyncpa [#allocation3], 1
    %2873 = vsyncpa [#allocation5], 1
    %2874 = vsyncpa [#allocation8], 1

</llo_original>
